<compile_context>
chip_gen: v7x
topology: tpu7x:2x2x1
jax: 0.10.0
libtpu: 0.0.40
codegen_flags: <defaults>
</compile_context>

<pallas_src>
import functools
import math

import jax
import jax.numpy as jnp
from jax.experimental import pallas as pl
from jax.experimental.pallas import tpu as pltpu

HIDDEN = 32
NUM_LAYERS = 2


def _gru_model_kernel(x_ref,
                      wih0_ref, b0_ref, whh0_ref, bhn0_ref,
                      wih1_ref, b1_ref, whh1_ref, bhn1_ref,
                      wout_ref, bout_ref,
                      pred_ref,
                      *, num_steps):
    """Wavefront-fused 2-layer GRU recurrence + Linear head for one batch tile.

    x_ref:      (1, T*TB, I) f32, time-major rows (row t*TB + j = sample j, step t).
    wih*_ref:   (I_or_H, 3H) transposed input-projection weights.
    b*_ref:     (1, 3H) fused input-side bias = b_ih + [b_hr, b_hz, 0].
    whh*_ref:   (H, 3H) transposed recurrent weights (no bias folded in here).
    bhn*_ref:   (1, H)  b_hn, which must stay inside r * (W_hn h + b_hn).
    wout_ref:   (H, O), bout_ref: (1, O), pred_ref: (TB, O).
    """
    T = num_steps
    TB = x_ref.shape[1] // T
    H = HIDDEN

    wih1 = wih1_ref[...]
    b1 = b1_ref[...]
    whh0 = whh0_ref[...]
    whh1 = whh1_ref[...]
    bhn0 = bhn0_ref[...]
    bhn1 = bhn1_ref[...]

    def gru_gates(gi, gh, h_prev, bhn):
        # One merged r|z sigmoid (single EUP push) + one tanh per step/layer.
        # TODO(synk): if the bundle dump shows lane relayouts from these 32-lane
        # gate slices (offsets 0/32/64 inside a 96-lane group), pad each gate to
        # its own 128-lane group in the wrapper so every slice is tile-aligned.
        s = jax.nn.sigmoid(gi[:, :2 * H] + gh[:, :2 * H])
        r = s[:, :H]
        z = s[:, H:]
        n = jnp.tanh(gi[:, 2 * H:] + r * (gh[:, 2 * H:] + bhn))
        return (1.0 - z) * n + z * h_prev

    # Hoisted layer-0 input projection: one (T*TB, I) x (I, 3H) MXU matmul for
    # all time steps at once, already in time-major row order.
    x2d = x_ref[0]
    gi0 = jnp.dot(x2d, wih0_ref[...], preferred_element_type=jnp.float32) + b0_ref[...]

    # init_hidden / hidden_cell=None -> zeros(num_layers, B, H)
    h0 = jnp.zeros((TB, H), jnp.float32)
    h1 = jnp.zeros((TB, H), jnp.float32)

    # Wavefront schedule over the fully-unrolled time loop (T small & static):
    # iteration k computes layer-0 step k and layer-1 step k-1.  Both updates
    # read only the values entering the iteration (h0[k-1], h1[k-2]), so they
    # are independent and their matmul/sigmoid/tanh latencies overlap.
    # TODO(synk): for large T*B switch to lax.fori_loop(..., unroll=k) and chunk
    # the hoisted projection over T (x in HBM via pl.ANY + double-buffered DMA)
    # to stay inside v7x's VMEM budget.
    for k in range(T + 1):
        h0_in = h0          # h0[k-1]
        h1_in = h1          # h1[k-2]
        if k < T:           # layer-0 step k
            gh0 = jnp.dot(h0_in, whh0, preferred_element_type=jnp.float32)
            h0 = gru_gates(gi0[k * TB:(k + 1) * TB, :], gh0, h0_in, bhn0)
        if k > 0:           # layer-1 step k-1 (consumes h0[k-1], no scratch round-trip)
            gi1 = jnp.dot(h0_in, wih1, preferred_element_type=jnp.float32) + b1
            gh1 = jnp.dot(h1_in, whh1, preferred_element_type=jnp.float32)
            h1 = gru_gates(gi1, gh1, h1_in, bhn1)

    # Head: Linear on output[:, -1, :] (== final hidden of the top layer).
    pred_ref[...] = (jnp.dot(h1, wout_ref[...], preferred_element_type=jnp.float32)
                     + bout_ref[...])


def init_params(key, input_size, output_size):
    """Deterministic synthetic parameters matching nn.GRU / nn.Linear shapes."""
    H = HIDDEN
    scale = 1.0 / math.sqrt(H)
    ks = jax.random.split(key, 11)

    def u(k, shape):
        return jax.random.uniform(k, shape, jnp.float32, -scale, scale)

    return {
        # layer 0 (input_size -> H)
        "w_ih_l0": u(ks[0], (3 * H, input_size)),
        "w_hh_l0": u(ks[1], (3 * H, H)),
        "b_ih_l0": u(ks[2], (3 * H,)),
        "b_hh_l0": u(ks[3], (3 * H,)),
        # layer 1 (H -> H)
        "w_ih_l1": u(ks[4], (3 * H, H)),
        "w_hh_l1": u(ks[5], (3 * H, H)),
        "b_ih_l1": u(ks[6], (3 * H,)),
        "b_hh_l1": u(ks[7], (3 * H,)),
        # head
        "w_out": u(ks[8], (output_size, H)),
        "b_out": u(ks[9], (output_size,)),
    }


def gru_price_model_forward(x_bti, params, y=None, batch_tile=None):
    """Mirrors GRUPriceModel.forward: returns (pred, loss)."""
    H = HIDDEN
    x = x_bti.astype(jnp.float32)                      # (B, T, I)
    B, T, I = x.shape
    O = params["w_out"].shape[0]

    # Batch-tile size: use >=8 rows per tile when the batch allows it so the
    # recurrent matmuls get real sublanes; small batches run as a single tile.
    if batch_tile is None:
        batch_tile = 8 if (B > 8 and B % 8 == 0) else B
    TB = batch_tile
    assert B % TB == 0, "batch_tile must divide the batch size"
    G = B // TB

    # Time-major, batch-tiled layout: x_tiles[g, t*TB + j, :] = x[g*TB + j, t, :].
    # One trivial XLA transpose outside the recurrence (cheaper than per-step
    # [:, t, :] sublane gathers inside the kernel).
    x_tiles = jnp.transpose(x.reshape(G, TB, T, I), (0, 2, 1, 3)).reshape(G, T * TB, I)

    def fuse(bih, bhh):
        # Fold b_hr/b_hz into the input-projection bias; keep b_hn separate.
        fused = bih + jnp.concatenate([bhh[:2 * H], jnp.zeros((H,), jnp.float32)])
        return fused[None, :], bhh[2 * H:][None, :]

    b0, bhn0 = fuse(params["b_ih_l0"], params["b_hh_l0"])
    b1, bhn1 = fuse(params["b_ih_l1"], params["b_hh_l1"])

    # TODO(synk): on v6e/v7x, optionally cast the weights (and gi) to bf16 for
    # the MXU dots while keeping gate math / state in f32.
    weights = (
        params["w_ih_l0"].T, b0, params["w_hh_l0"].T, bhn0,
        params["w_ih_l1"].T, b1, params["w_hh_l1"].T, bhn1,
        params["w_out"].T, params["b_out"][None, :],
    )

    def resident(arr):
        # Full-array block with a constant index map: the weights/biases stay
        # resident in VMEM and are shared by every batch tile.
        return pl.BlockSpec(arr.shape, lambda g: (0,) * arr.ndim)

    pred = pl.pallas_call(
        functools.partial(_gru_model_kernel, num_steps=T),
        out_shape=jax.ShapeDtypeStruct((B, O), jnp.float32),
        grid=(G,),
        in_specs=[pl.BlockSpec((1, T * TB, I), lambda g: (g, 0, 0))]
                 + [resident(w) for w in weights],
        out_specs=pl.BlockSpec((TB, O), lambda g: (g, 0)),
        compiler_params=pltpu.CompilerParams(
            dimension_semantics=("parallel",)),   # batch tiles -> both TCs on v7x
    )(x_tiles, *weights)

    # Loss glue (nn.MSELoss) kept in plain JAX, like the optional branch in forward().
    loss = jnp.mean((pred - y) ** 2) if y is not None else None
    # NOTE: self.dropout is defined in __init__ but never applied in forward(), so it is omitted.
    return pred, loss


def _reference_forward(x_bti, params):
    """Pure-JAX reference of the same math (for correctness check)."""
    H = HIDDEN
    x = jnp.transpose(x_bti, (1, 0, 2)).astype(jnp.float32)
    T, B, _ = x.shape

    def cell(x_t, h, wih, whh, bih, bhh):
        gi = x_t @ wih.T + bih
        gh = h @ whh.T + bhh
        r = jax.nn.sigmoid(gi[:, 0:H] + gh[:, 0:H])
        z = jax.nn.sigmoid(gi[:, H:2 * H] + gh[:, H:2 * H])
        n = jnp.tanh(gi[:, 2 * H:] + r * gh[:, 2 * H:])
        return (1.0 - z) * n + z * h

    h0 = jnp.zeros((B, H), jnp.float32)
    h1 = jnp.zeros((B, H), jnp.float32)
    for t in range(T):
        h0 = cell(x[t], h0, params["w_ih_l0"], params["w_hh_l0"],
                  params["b_ih_l0"], params["b_hh_l0"])
        h1 = cell(h0, h1, params["w_ih_l1"], params["w_hh_l1"],
                  params["b_ih_l1"], params["b_hh_l1"])
    return h1 @ params["w_out"].T + params["b_out"]


if __name__ == "__main__":
    batch, seq, input_size, output_size = 2, 8, 4, 1

    key = jax.random.PRNGKey(0)
    k_x, k_y, k_p = jax.random.split(key, 3)

    x = jax.random.normal(k_x, (batch, seq, input_size), jnp.float32)
    y = jax.random.normal(k_y, (batch, output_size), jnp.float32)
    params = init_params(k_p, input_size, output_size)

    pred, loss = gru_price_model_forward(x, params, y)
    pred = jax.block_until_ready(pred)
    loss = jax.block_until_ready(loss)

    ref = _reference_forward(x, params)
    assert pred.shape == (batch, output_size)
    assert jnp.allclose(pred, ref, rtol=1e-3, atol=1e-3), (pred, ref)

    print("KERNEL_OK")
</pallas_src>

<mosaic_0001>
module attributes {stable_mosaic.version = 11 : i64} {
  func.func @_gru_model_kernel(%arg0: i32, %arg1: memref<1x16x4xf32, #tpu.memory_space<vmem>>, %arg2: memref<4x96xf32, #tpu.memory_space<vmem>>, %arg3: memref<1x96xf32, #tpu.memory_space<vmem>>, %arg4: memref<32x96xf32, #tpu.memory_space<vmem>>, %arg5: memref<1x32xf32, #tpu.memory_space<vmem>>, %arg6: memref<32x96xf32, #tpu.memory_space<vmem>>, %arg7: memref<1x96xf32, #tpu.memory_space<vmem>>, %arg8: memref<32x96xf32, #tpu.memory_space<vmem>>, %arg9: memref<1x32xf32, #tpu.memory_space<vmem>>, %arg10: memref<32x1xf32, #tpu.memory_space<vmem>>, %arg11: memref<1x1xf32, #tpu.memory_space<vmem>>, %arg12: memref<2x1xf32, #tpu.memory_space<vmem>>) attributes {dimension_semantics = [#tpu.dimension_semantics<parallel>], iteration_bounds = array<i64: 1>, scalar_prefetch = 0 : i64, scratch_operands = 0 : i64, tpu.core_type = #tpu.core_type<tc>, window_params = [{transform_indices = @transform_0, window_bounds = array<i64: 1, 16, 4>}, {pipeline_mode = #tpu.pipeline_mode<synchronous>, transform_indices = @transform_1, window_bounds = array<i64: 4, 96>}, {pipeline_mode = #tpu.pipeline_mode<synchronous>, transform_indices = @transform_2, window_bounds = array<i64: 1, 96>}, {pipeline_mode = #tpu.pipeline_mode<synchronous>, transform_indices = @transform_3, window_bounds = array<i64: 32, 96>}, {pipeline_mode = #tpu.pipeline_mode<synchronous>, transform_indices = @transform_4, window_bounds = array<i64: 1, 32>}, {pipeline_mode = #tpu.pipeline_mode<synchronous>, transform_indices = @transform_5, window_bounds = array<i64: 32, 96>}, {pipeline_mode = #tpu.pipeline_mode<synchronous>, transform_indices = @transform_6, window_bounds = array<i64: 1, 96>}, {pipeline_mode = #tpu.pipeline_mode<synchronous>, transform_indices = @transform_7, window_bounds = array<i64: 32, 96>}, {pipeline_mode = #tpu.pipeline_mode<synchronous>, transform_indices = @transform_8, window_bounds = array<i64: 1, 32>}, {pipeline_mode = #tpu.pipeline_mode<synchronous>, transform_indices = @transform_9, window_bounds = array<i64: 32, 1>}, {pipeline_mode = #tpu.pipeline_mode<synchronous>, transform_indices = @transform_10, window_bounds = array<i64: 1, 1>}, {transform_indices = @transform_11, window_bounds = array<i64: 2, 1>}]} {
    %c0 = arith.constant 0 : index
    %c0_0 = arith.constant 0 : index
    %0 = vector.load %arg6[%c0, %c0_0] : memref<32x96xf32, #tpu.memory_space<vmem>>, vector<32x96xf32>
    %c0_1 = arith.constant 0 : index
    %c0_2 = arith.constant 0 : index
    %1 = vector.load %arg7[%c0_1, %c0_2] : memref<1x96xf32, #tpu.memory_space<vmem>>, vector<1x96xf32>
    %c0_3 = arith.constant 0 : index
    %c0_4 = arith.constant 0 : index
    %2 = vector.load %arg4[%c0_3, %c0_4] : memref<32x96xf32, #tpu.memory_space<vmem>>, vector<32x96xf32>
    %c0_5 = arith.constant 0 : index
    %c0_6 = arith.constant 0 : index
    %3 = vector.load %arg8[%c0_5, %c0_6] : memref<32x96xf32, #tpu.memory_space<vmem>>, vector<32x96xf32>
    %c0_7 = arith.constant 0 : index
    %c0_8 = arith.constant 0 : index
    %4 = vector.load %arg5[%c0_7, %c0_8] : memref<1x32xf32, #tpu.memory_space<vmem>>, vector<1x32xf32>
    %c0_9 = arith.constant 0 : index
    %c0_10 = arith.constant 0 : index
    %5 = vector.load %arg9[%c0_9, %c0_10] : memref<1x32xf32, #tpu.memory_space<vmem>>, vector<1x32xf32>
    %c0_11 = arith.constant 0 : index
    %c0_12 = arith.constant 0 : index
    %c0_13 = arith.constant 0 : index
    %6 = vector.load %arg1[%c0_11, %c0_12, %c0_13] : memref<1x16x4xf32, #tpu.memory_space<vmem>>, vector<1x16x4xf32>
    %7 = vector.shape_cast %6 : vector<1x16x4xf32> to vector<16x4xf32>
    %c0_14 = arith.constant 0 : index
    %c0_15 = arith.constant 0 : index
    %8 = vector.load %arg2[%c0_14, %c0_15] : memref<4x96xf32, #tpu.memory_space<vmem>>, vector<4x96xf32>
    %cst = arith.constant dense<0.000000e+00> : vector<16x96xf32>
    %9 = tpu.matmul %7, %8, %cst {dimension_numbers = #tpu.dot_dimension_numbers<[1], [0], [0], [1], [0, 0, 1, 1], [], []>} : vector<16x4xf32>, vector<4x96xf32>, vector<16x96xf32> -> vector<16x96xf32>
    %c0_16 = arith.constant 0 : index
    %c0_17 = arith.constant 0 : index
    %10 = vector.load %arg3[%c0_16, %c0_17] : memref<1x96xf32, #tpu.memory_space<vmem>>, vector<1x96xf32>
    %11 = vector.broadcast %10 : vector<1x96xf32> to vector<16x96xf32>
    %12 = arith.addf %9, %11 : vector<16x96xf32>
    %cst_18 = arith.constant 0.000000e+00 : f32
    %13 = vector.broadcast %cst_18 : f32 to vector<2x32xf32>
    %cst_19 = arith.constant 0.000000e+00 : f32
    %14 = vector.broadcast %cst_19 : f32 to vector<2x32xf32>
    %cst_20 = arith.constant dense<0.000000e+00> : vector<2x96xf32>
    %15 = tpu.matmul %13, %2, %cst_20 {dimension_numbers = #tpu.dot_dimension_numbers<[1], [0], [0], [1], [0, 0, 1, 1], [], []>} : vector<2x32xf32>, vector<32x96xf32>, vector<2x96xf32> -> vector<2x96xf32>
    %16 = vector.extract_strided_slice %12 {offsets = [0, 0], sizes = [2, 96], strides = [1, 1]} : vector<16x96xf32> to vector<2x96xf32>
    %17 = vector.extract_strided_slice %16 {offsets = [0, 0], sizes = [2, 64], strides = [1, 1]} : vector<2x96xf32> to vector<2x64xf32>
    %18 = vector.extract_strided_slice %15 {offsets = [0, 0], sizes = [2, 64], strides = [1, 1]} : vector<2x96xf32> to vector<2x64xf32>
    %19 = arith.addf %17, %18 : vector<2x64xf32>
    %20 = arith.negf %19 : vector<2x64xf32>
    %21 = math.exp %20 : vector<2x64xf32>
    %cst_21 = arith.constant 1.000000e+00 : f32
    %22 = vector.broadcast %cst_21 : f32 to vector<2x64xf32>
    %23 = arith.addf %22, %21 : vector<2x64xf32>
    %24 = arith.divf %22, %23 : vector<2x64xf32>
    %25 = vector.extract_strided_slice %24 {offsets = [0, 0], sizes = [2, 32], strides = [1, 1]} : vector<2x64xf32> to vector<2x32xf32>
    %26 = vector.extract_strided_slice %24 {offsets = [0, 32], sizes = [2, 32], strides = [1, 1]} : vector<2x64xf32> to vector<2x32xf32>
    %27 = vector.extract_strided_slice %16 {offsets = [0, 64], sizes = [2, 32], strides = [1, 1]} : vector<2x96xf32> to vector<2x32xf32>
    %28 = vector.extract_strided_slice %15 {offsets = [0, 64], sizes = [2, 32], strides = [1, 1]} : vector<2x96xf32> to vector<2x32xf32>
    %29 = vector.broadcast %4 : vector<1x32xf32> to vector<2x32xf32>
    %30 = arith.addf %28, %29 : vector<2x32xf32>
    %31 = arith.mulf %25, %30 : vector<2x32xf32>
    %32 = arith.addf %27, %31 : vector<2x32xf32>
    %33 = math.tanh %32 : vector<2x32xf32>
    %cst_22 = arith.constant 1.000000e+00 : f32
    %34 = vector.broadcast %cst_22 : f32 to vector<2x32xf32>
    %35 = arith.subf %34, %26 : vector<2x32xf32>
    %36 = arith.mulf %35, %33 : vector<2x32xf32>
    %37 = arith.mulf %26, %13 : vector<2x32xf32>
    %38 = arith.addf %36, %37 : vector<2x32xf32>
    %cst_23 = arith.constant dense<0.000000e+00> : vector<2x96xf32>
    %39 = tpu.matmul %38, %2, %cst_23 {dimension_numbers = #tpu.dot_dimension_numbers<[1], [0], [0], [1], [0, 0, 1, 1], [], []>} : vector<2x32xf32>, vector<32x96xf32>, vector<2x96xf32> -> vector<2x96xf32>
    %40 = vector.extract_strided_slice %12 {offsets = [2, 0], sizes = [2, 96], strides = [1, 1]} : vector<16x96xf32> to vector<2x96xf32>
    %41 = vector.extract_strided_slice %40 {offsets = [0, 0], sizes = [2, 64], strides = [1, 1]} : vector<2x96xf32> to vector<2x64xf32>
    %42 = vector.extract_strided_slice %39 {offsets = [0, 0], sizes = [2, 64], strides = [1, 1]} : vector<2x96xf32> to vector<2x64xf32>
    %43 = arith.addf %41, %42 : vector<2x64xf32>
    %44 = arith.negf %43 : vector<2x64xf32>
    %45 = math.exp %44 : vector<2x64xf32>
    %cst_24 = arith.constant 1.000000e+00 : f32
    %46 = vector.broadcast %cst_24 : f32 to vector<2x64xf32>
    %47 = arith.addf %46, %45 : vector<2x64xf32>
    %48 = arith.divf %46, %47 : vector<2x64xf32>
    %49 = vector.extract_strided_slice %48 {offsets = [0, 0], sizes = [2, 32], strides = [1, 1]} : vector<2x64xf32> to vector<2x32xf32>
    %50 = vector.extract_strided_slice %48 {offsets = [0, 32], sizes = [2, 32], strides = [1, 1]} : vector<2x64xf32> to vector<2x32xf32>
    %51 = vector.extract_strided_slice %40 {offsets = [0, 64], sizes = [2, 32], strides = [1, 1]} : vector<2x96xf32> to vector<2x32xf32>
    %52 = vector.extract_strided_slice %39 {offsets = [0, 64], sizes = [2, 32], strides = [1, 1]} : vector<2x96xf32> to vector<2x32xf32>
    %53 = vector.broadcast %4 : vector<1x32xf32> to vector<2x32xf32>
    %54 = arith.addf %52, %53 : vector<2x32xf32>
    %55 = arith.mulf %49, %54 : vector<2x32xf32>
    %56 = arith.addf %51, %55 : vector<2x32xf32>
    %57 = math.tanh %56 : vector<2x32xf32>
    %cst_25 = arith.constant 1.000000e+00 : f32
    %58 = vector.broadcast %cst_25 : f32 to vector<2x32xf32>
    %59 = arith.subf %58, %50 : vector<2x32xf32>
    %60 = arith.mulf %59, %57 : vector<2x32xf32>
    %61 = arith.mulf %50, %38 : vector<2x32xf32>
    %62 = arith.addf %60, %61 : vector<2x32xf32>
    %cst_26 = arith.constant dense<0.000000e+00> : vector<2x96xf32>
    %63 = tpu.matmul %38, %0, %cst_26 {dimension_numbers = #tpu.dot_dimension_numbers<[1], [0], [0], [1], [0, 0, 1, 1], [], []>} : vector<2x32xf32>, vector<32x96xf32>, vector<2x96xf32> -> vector<2x96xf32>
    %64 = vector.broadcast %1 : vector<1x96xf32> to vector<2x96xf32>
    %65 = arith.addf %63, %64 : vector<2x96xf32>
    %cst_27 = arith.constant dense<0.000000e+00> : vector<2x96xf32>
    %66 = tpu.matmul %14, %3, %cst_27 {dimension_numbers = #tpu.dot_dimension_numbers<[1], [0], [0], [1], [0, 0, 1, 1], [], []>} : vector<2x32xf32>, vector<32x96xf32>, vector<2x96xf32> -> vector<2x96xf32>
    %67 = vector.extract_strided_slice %65 {offsets = [0, 0], sizes = [2, 64], strides = [1, 1]} : vector<2x96xf32> to vector<2x64xf32>
    %68 = vector.extract_strided_slice %66 {offsets = [0, 0], sizes = [2, 64], strides = [1, 1]} : vector<2x96xf32> to vector<2x64xf32>
    %69 = arith.addf %67, %68 : vector<2x64xf32>
    %70 = arith.negf %69 : vector<2x64xf32>
    %71 = math.exp %70 : vector<2x64xf32>
    %cst_28 = arith.constant 1.000000e+00 : f32
    %72 = vector.broadcast %cst_28 : f32 to vector<2x64xf32>
    %73 = arith.addf %72, %71 : vector<2x64xf32>
    %74 = arith.divf %72, %73 : vector<2x64xf32>
    %75 = vector.extract_strided_slice %74 {offsets = [0, 0], sizes = [2, 32], strides = [1, 1]} : vector<2x64xf32> to vector<2x32xf32>
    %76 = vector.extract_strided_slice %74 {offsets = [0, 32], sizes = [2, 32], strides = [1, 1]} : vector<2x64xf32> to vector<2x32xf32>
    %77 = vector.extract_strided_slice %65 {offsets = [0, 64], sizes = [2, 32], strides = [1, 1]} : vector<2x96xf32> to vector<2x32xf32>
    %78 = vector.extract_strided_slice %66 {offsets = [0, 64], sizes = [2, 32], strides = [1, 1]} : vector<2x96xf32> to vector<2x32xf32>
    %79 = vector.broadcast %5 : vector<1x32xf32> to vector<2x32xf32>
    %80 = arith.addf %78, %79 : vector<2x32xf32>
    %81 = arith.mulf %75, %80 : vector<2x32xf32>
    %82 = arith.addf %77, %81 : vector<2x32xf32>
    %83 = math.tanh %82 : vector<2x32xf32>
    %cst_29 = arith.constant 1.000000e+00 : f32
    %84 = vector.broadcast %cst_29 : f32 to vector<2x32xf32>
    %85 = arith.subf %84, %76 : vector<2x32xf32>
    %86 = arith.mulf %85, %83 : vector<2x32xf32>
    %87 = arith.mulf %76, %14 : vector<2x32xf32>
    %88 = arith.addf %86, %87 : vector<2x32xf32>
    %cst_30 = arith.constant dense<0.000000e+00> : vector<2x96xf32>
    %89 = tpu.matmul %62, %2, %cst_30 {dimension_numbers = #tpu.dot_dimension_numbers<[1], [0], [0], [1], [0, 0, 1, 1], [], []>} : vector<2x32xf32>, vector<32x96xf32>, vector<2x96xf32> -> vector<2x96xf32>
    %90 = vector.extract_strided_slice %12 {offsets = [4, 0], sizes = [2, 96], strides = [1, 1]} : vector<16x96xf32> to vector<2x96xf32>
    %91 = vector.extract_strided_slice %90 {offsets = [0, 0], sizes = [2, 64], strides = [1, 1]} : vector<2x96xf32> to vector<2x64xf32>
    %92 = vector.extract_strided_slice %89 {offsets = [0, 0], sizes = [2, 64], strides = [1, 1]} : vector<2x96xf32> to vector<2x64xf32>
    %93 = arith.addf %91, %92 : vector<2x64xf32>
    %94 = arith.negf %93 : vector<2x64xf32>
    %95 = math.exp %94 : vector<2x64xf32>
    %cst_31 = arith.constant 1.000000e+00 : f32
    %96 = vector.broadcast %cst_31 : f32 to vector<2x64xf32>
    %97 = arith.addf %96, %95 : vector<2x64xf32>
    %98 = arith.divf %96, %97 : vector<2x64xf32>
    %99 = vector.extract_strided_slice %98 {offsets = [0, 0], sizes = [2, 32], strides = [1, 1]} : vector<2x64xf32> to vector<2x32xf32>
    %100 = vector.extract_strided_slice %98 {offsets = [0, 32], sizes = [2, 32], strides = [1, 1]} : vector<2x64xf32> to vector<2x32xf32>
    %101 = vector.extract_strided_slice %90 {offsets = [0, 64], sizes = [2, 32], strides = [1, 1]} : vector<2x96xf32> to vector<2x32xf32>
    %102 = vector.extract_strided_slice %89 {offsets = [0, 64], sizes = [2, 32], strides = [1, 1]} : vector<2x96xf32> to vector<2x32xf32>
    %103 = vector.broadcast %4 : vector<1x32xf32> to vector<2x32xf32>
    %104 = arith.addf %102, %103 : vector<2x32xf32>
    %105 = arith.mulf %99, %104 : vector<2x32xf32>
    %106 = arith.addf %101, %105 : vector<2x32xf32>
    %107 = math.tanh %106 : vector<2x32xf32>
    %cst_32 = arith.constant 1.000000e+00 : f32
    %108 = vector.broadcast %cst_32 : f32 to vector<2x32xf32>
    %109 = arith.subf %108, %100 : vector<2x32xf32>
    %110 = arith.mulf %109, %107 : vector<2x32xf32>
    %111 = arith.mulf %100, %62 : vector<2x32xf32>
    %112 = arith.addf %110, %111 : vector<2x32xf32>
    %cst_33 = arith.constant dense<0.000000e+00> : vector<2x96xf32>
    %113 = tpu.matmul %62, %0, %cst_33 {dimension_numbers = #tpu.dot_dimension_numbers<[1], [0], [0], [1], [0, 0, 1, 1], [], []>} : vector<2x32xf32>, vector<32x96xf32>, vector<2x96xf32> -> vector<2x96xf32>
    %114 = vector.broadcast %1 : vector<1x96xf32> to vector<2x96xf32>
    %115 = arith.addf %113, %114 : vector<2x96xf32>
    %cst_34 = arith.constant dense<0.000000e+00> : vector<2x96xf32>
    %116 = tpu.matmul %88, %3, %cst_34 {dimension_numbers = #tpu.dot_dimension_numbers<[1], [0], [0], [1], [0, 0, 1, 1], [], []>} : vector<2x32xf32>, vector<32x96xf32>, vector<2x96xf32> -> vector<2x96xf32>
    %117 = vector.extract_strided_slice %115 {offsets = [0, 0], sizes = [2, 64], strides = [1, 1]} : vector<2x96xf32> to vector<2x64xf32>
    %118 = vector.extract_strided_slice %116 {offsets = [0, 0], sizes = [2, 64], strides = [1, 1]} : vector<2x96xf32> to vector<2x64xf32>
    %119 = arith.addf %117, %118 : vector<2x64xf32>
    %120 = arith.negf %119 : vector<2x64xf32>
    %121 = math.exp %120 : vector<2x64xf32>
    %cst_35 = arith.constant 1.000000e+00 : f32
    %122 = vector.broadcast %cst_35 : f32 to vector<2x64xf32>
    %123 = arith.addf %122, %121 : vector<2x64xf32>
    %124 = arith.divf %122, %123 : vector<2x64xf32>
    %125 = vector.extract_strided_slice %124 {offsets = [0, 0], sizes = [2, 32], strides = [1, 1]} : vector<2x64xf32> to vector<2x32xf32>
    %126 = vector.extract_strided_slice %124 {offsets = [0, 32], sizes = [2, 32], strides = [1, 1]} : vector<2x64xf32> to vector<2x32xf32>
    %127 = vector.extract_strided_slice %115 {offsets = [0, 64], sizes = [2, 32], strides = [1, 1]} : vector<2x96xf32> to vector<2x32xf32>
    %128 = vector.extract_strided_slice %116 {offsets = [0, 64], sizes = [2, 32], strides = [1, 1]} : vector<2x96xf32> to vector<2x32xf32>
    %129 = vector.broadcast %5 : vector<1x32xf32> to vector<2x32xf32>
    %130 = arith.addf %128, %129 : vector<2x32xf32>
    %131 = arith.mulf %125, %130 : vector<2x32xf32>
    %132 = arith.addf %127, %131 : vector<2x32xf32>
    %133 = math.tanh %132 : vector<2x32xf32>
    %cst_36 = arith.constant 1.000000e+00 : f32
    %134 = vector.broadcast %cst_36 : f32 to vector<2x32xf32>
    %135 = arith.subf %134, %126 : vector<2x32xf32>
    %136 = arith.mulf %135, %133 : vector<2x32xf32>
    %137 = arith.mulf %126, %88 : vector<2x32xf32>
    %138 = arith.addf %136, %137 : vector<2x32xf32>
    %cst_37 = arith.constant dense<0.000000e+00> : vector<2x96xf32>
    %139 = tpu.matmul %112, %2, %cst_37 {dimension_numbers = #tpu.dot_dimension_numbers<[1], [0], [0], [1], [0, 0, 1, 1], [], []>} : vector<2x32xf32>, vector<32x96xf32>, vector<2x96xf32> -> vector<2x96xf32>
    %140 = vector.extract_strided_slice %12 {offsets = [6, 0], sizes = [2, 96], strides = [1, 1]} : vector<16x96xf32> to vector<2x96xf32>
    %141 = vector.extract_strided_slice %140 {offsets = [0, 0], sizes = [2, 64], strides = [1, 1]} : vector<2x96xf32> to vector<2x64xf32>
    %142 = vector.extract_strided_slice %139 {offsets = [0, 0], sizes = [2, 64], strides = [1, 1]} : vector<2x96xf32> to vector<2x64xf32>
    %143 = arith.addf %141, %142 : vector<2x64xf32>
    %144 = arith.negf %143 : vector<2x64xf32>
    %145 = math.exp %144 : vector<2x64xf32>
    %cst_38 = arith.constant 1.000000e+00 : f32
    %146 = vector.broadcast %cst_38 : f32 to vector<2x64xf32>
    %147 = arith.addf %146, %145 : vector<2x64xf32>
    %148 = arith.divf %146, %147 : vector<2x64xf32>
    %149 = vector.extract_strided_slice %148 {offsets = [0, 0], sizes = [2, 32], strides = [1, 1]} : vector<2x64xf32> to vector<2x32xf32>
    %150 = vector.extract_strided_slice %148 {offsets = [0, 32], sizes = [2, 32], strides = [1, 1]} : vector<2x64xf32> to vector<2x32xf32>
    %151 = vector.extract_strided_slice %140 {offsets = [0, 64], sizes = [2, 32], strides = [1, 1]} : vector<2x96xf32> to vector<2x32xf32>
    %152 = vector.extract_strided_slice %139 {offsets = [0, 64], sizes = [2, 32], strides = [1, 1]} : vector<2x96xf32> to vector<2x32xf32>
    %153 = vector.broadcast %4 : vector<1x32xf32> to vector<2x32xf32>
    %154 = arith.addf %152, %153 : vector<2x32xf32>
    %155 = arith.mulf %149, %154 : vector<2x32xf32>
    %156 = arith.addf %151, %155 : vector<2x32xf32>
    %157 = math.tanh %156 : vector<2x32xf32>
    %cst_39 = arith.constant 1.000000e+00 : f32
    %158 = vector.broadcast %cst_39 : f32 to vector<2x32xf32>
    %159 = arith.subf %158, %150 : vector<2x32xf32>
    %160 = arith.mulf %159, %157 : vector<2x32xf32>
    %161 = arith.mulf %150, %112 : vector<2x32xf32>
    %162 = arith.addf %160, %161 : vector<2x32xf32>
    %cst_40 = arith.constant dense<0.000000e+00> : vector<2x96xf32>
    %163 = tpu.matmul %112, %0, %cst_40 {dimension_numbers = #tpu.dot_dimension_numbers<[1], [0], [0], [1], [0, 0, 1, 1], [], []>} : vector<2x32xf32>, vector<32x96xf32>, vector<2x96xf32> -> vector<2x96xf32>
    %164 = vector.broadcast %1 : vector<1x96xf32> to vector<2x96xf32>
    %165 = arith.addf %163, %164 : vector<2x96xf32>
    %cst_41 = arith.constant dense<0.000000e+00> : vector<2x96xf32>
    %166 = tpu.matmul %138, %3, %cst_41 {dimension_numbers = #tpu.dot_dimension_numbers<[1], [0], [0], [1], [0, 0, 1, 1], [], []>} : vector<2x32xf32>, vector<32x96xf32>, vector<2x96xf32> -> vector<2x96xf32>
    %167 = vector.extract_strided_slice %165 {offsets = [0, 0], sizes = [2, 64], strides = [1, 1]} : vector<2x96xf32> to vector<2x64xf32>
    %168 = vector.extract_strided_slice %166 {offsets = [0, 0], sizes = [2, 64], strides = [1, 1]} : vector<2x96xf32> to vector<2x64xf32>
    %169 = arith.addf %167, %168 : vector<2x64xf32>
    %170 = arith.negf %169 : vector<2x64xf32>
    %171 = math.exp %170 : vector<2x64xf32>
    %cst_42 = arith.constant 1.000000e+00 : f32
    %172 = vector.broadcast %cst_42 : f32 to vector<2x64xf32>
    %173 = arith.addf %172, %171 : vector<2x64xf32>
    %174 = arith.divf %172, %173 : vector<2x64xf32>
    %175 = vector.extract_strided_slice %174 {offsets = [0, 0], sizes = [2, 32], strides = [1, 1]} : vector<2x64xf32> to vector<2x32xf32>
    %176 = vector.extract_strided_slice %174 {offsets = [0, 32], sizes = [2, 32], strides = [1, 1]} : vector<2x64xf32> to vector<2x32xf32>
    %177 = vector.extract_strided_slice %165 {offsets = [0, 64], sizes = [2, 32], strides = [1, 1]} : vector<2x96xf32> to vector<2x32xf32>
    %178 = vector.extract_strided_slice %166 {offsets = [0, 64], sizes = [2, 32], strides = [1, 1]} : vector<2x96xf32> to vector<2x32xf32>
    %179 = vector.broadcast %5 : vector<1x32xf32> to vector<2x32xf32>
    %180 = arith.addf %178, %179 : vector<2x32xf32>
    %181 = arith.mulf %175, %180 : vector<2x32xf32>
    %182 = arith.addf %177, %181 : vector<2x32xf32>
    %183 = math.tanh %182 : vector<2x32xf32>
    %cst_43 = arith.constant 1.000000e+00 : f32
    %184 = vector.broadcast %cst_43 : f32 to vector<2x32xf32>
    %185 = arith.subf %184, %176 : vector<2x32xf32>
    %186 = arith.mulf %185, %183 : vector<2x32xf32>
    %187 = arith.mulf %176, %138 : vector<2x32xf32>
    %188 = arith.addf %186, %187 : vector<2x32xf32>
    %cst_44 = arith.constant dense<0.000000e+00> : vector<2x96xf32>
    %189 = tpu.matmul %162, %2, %cst_44 {dimension_numbers = #tpu.dot_dimension_numbers<[1], [0], [0], [1], [0, 0, 1, 1], [], []>} : vector<2x32xf32>, vector<32x96xf32>, vector<2x96xf32> -> vector<2x96xf32>
    %190 = vector.extract_strided_slice %12 {offsets = [8, 0], sizes = [2, 96], strides = [1, 1]} : vector<16x96xf32> to vector<2x96xf32>
    %191 = vector.extract_strided_slice %190 {offsets = [0, 0], sizes = [2, 64], strides = [1, 1]} : vector<2x96xf32> to vector<2x64xf32>
    %192 = vector.extract_strided_slice %189 {offsets = [0, 0], sizes = [2, 64], strides = [1, 1]} : vector<2x96xf32> to vector<2x64xf32>
    %193 = arith.addf %191, %192 : vector<2x64xf32>
    %194 = arith.negf %193 : vector<2x64xf32>
    %195 = math.exp %194 : vector<2x64xf32>
    %cst_45 = arith.constant 1.000000e+00 : f32
    %196 = vector.broadcast %cst_45 : f32 to vector<2x64xf32>
    %197 = arith.addf %196, %195 : vector<2x64xf32>
    %198 = arith.divf %196, %197 : vector<2x64xf32>
    %199 = vector.extract_strided_slice %198 {offsets = [0, 0], sizes = [2, 32], strides = [1, 1]} : vector<2x64xf32> to vector<2x32xf32>
    %200 = vector.extract_strided_slice %198 {offsets = [0, 32], sizes = [2, 32], strides = [1, 1]} : vector<2x64xf32> to vector<2x32xf32>
    %201 = vector.extract_strided_slice %190 {offsets = [0, 64], sizes = [2, 32], strides = [1, 1]} : vector<2x96xf32> to vector<2x32xf32>
    %202 = vector.extract_strided_slice %189 {offsets = [0, 64], sizes = [2, 32], strides = [1, 1]} : vector<2x96xf32> to vector<2x32xf32>
    %203 = vector.broadcast %4 : vector<1x32xf32> to vector<2x32xf32>
    %204 = arith.addf %202, %203 : vector<2x32xf32>
    %205 = arith.mulf %199, %204 : vector<2x32xf32>
    %206 = arith.addf %201, %205 : vector<2x32xf32>
    %207 = math.tanh %206 : vector<2x32xf32>
    %cst_46 = arith.constant 1.000000e+00 : f32
    %208 = vector.broadcast %cst_46 : f32 to vector<2x32xf32>
    %209 = arith.subf %208, %200 : vector<2x32xf32>
    %210 = arith.mulf %209, %207 : vector<2x32xf32>
    %211 = arith.mulf %200, %162 : vector<2x32xf32>
    %212 = arith.addf %210, %211 : vector<2x32xf32>
    %cst_47 = arith.constant dense<0.000000e+00> : vector<2x96xf32>
    %213 = tpu.matmul %162, %0, %cst_47 {dimension_numbers = #tpu.dot_dimension_numbers<[1], [0], [0], [1], [0, 0, 1, 1], [], []>} : vector<2x32xf32>, vector<32x96xf32>, vector<2x96xf32> -> vector<2x96xf32>
    %214 = vector.broadcast %1 : vector<1x96xf32> to vector<2x96xf32>
    %215 = arith.addf %213, %214 : vector<2x96xf32>
    %cst_48 = arith.constant dense<0.000000e+00> : vector<2x96xf32>
    %216 = tpu.matmul %188, %3, %cst_48 {dimension_numbers = #tpu.dot_dimension_numbers<[1], [0], [0], [1], [0, 0, 1, 1], [], []>} : vector<2x32xf32>, vector<32x96xf32>, vector<2x96xf32> -> vector<2x96xf32>
    %217 = vector.extract_strided_slice %215 {offsets = [0, 0], sizes = [2, 64], strides = [1, 1]} : vector<2x96xf32> to vector<2x64xf32>
    %218 = vector.extract_strided_slice %216 {offsets = [0, 0], sizes = [2, 64], strides = [1, 1]} : vector<2x96xf32> to vector<2x64xf32>
    %219 = arith.addf %217, %218 : vector<2x64xf32>
    %220 = arith.negf %219 : vector<2x64xf32>
    %221 = math.exp %220 : vector<2x64xf32>
    %cst_49 = arith.constant 1.000000e+00 : f32
    %222 = vector.broadcast %cst_49 : f32 to vector<2x64xf32>
    %223 = arith.addf %222, %221 : vector<2x64xf32>
    %224 = arith.divf %222, %223 : vector<2x64xf32>
    %225 = vector.extract_strided_slice %224 {offsets = [0, 0], sizes = [2, 32], strides = [1, 1]} : vector<2x64xf32> to vector<2x32xf32>
    %226 = vector.extract_strided_slice %224 {offsets = [0, 32], sizes = [2, 32], strides = [1, 1]} : vector<2x64xf32> to vector<2x32xf32>
    %227 = vector.extract_strided_slice %215 {offsets = [0, 64], sizes = [2, 32], strides = [1, 1]} : vector<2x96xf32> to vector<2x32xf32>
    %228 = vector.extract_strided_slice %216 {offsets = [0, 64], sizes = [2, 32], strides = [1, 1]} : vector<2x96xf32> to vector<2x32xf32>
    %229 = vector.broadcast %5 : vector<1x32xf32> to vector<2x32xf32>
    %230 = arith.addf %228, %229 : vector<2x32xf32>
    %231 = arith.mulf %225, %230 : vector<2x32xf32>
    %232 = arith.addf %227, %231 : vector<2x32xf32>
    %233 = math.tanh %232 : vector<2x32xf32>
    %cst_50 = arith.constant 1.000000e+00 : f32
    %234 = vector.broadcast %cst_50 : f32 to vector<2x32xf32>
    %235 = arith.subf %234, %226 : vector<2x32xf32>
    %236 = arith.mulf %235, %233 : vector<2x32xf32>
    %237 = arith.mulf %226, %188 : vector<2x32xf32>
    %238 = arith.addf %236, %237 : vector<2x32xf32>
    %cst_51 = arith.constant dense<0.000000e+00> : vector<2x96xf32>
    %239 = tpu.matmul %212, %2, %cst_51 {dimension_numbers = #tpu.dot_dimension_numbers<[1], [0], [0], [1], [0, 0, 1, 1], [], []>} : vector<2x32xf32>, vector<32x96xf32>, vector<2x96xf32> -> vector<2x96xf32>
    %240 = vector.extract_strided_slice %12 {offsets = [10, 0], sizes = [2, 96], strides = [1, 1]} : vector<16x96xf32> to vector<2x96xf32>
    %241 = vector.extract_strided_slice %240 {offsets = [0, 0], sizes = [2, 64], strides = [1, 1]} : vector<2x96xf32> to vector<2x64xf32>
    %242 = vector.extract_strided_slice %239 {offsets = [0, 0], sizes = [2, 64], strides = [1, 1]} : vector<2x96xf32> to vector<2x64xf32>
    %243 = arith.addf %241, %242 : vector<2x64xf32>
    %244 = arith.negf %243 : vector<2x64xf32>
    %245 = math.exp %244 : vector<2x64xf32>
    %cst_52 = arith.constant 1.000000e+00 : f32
    %246 = vector.broadcast %cst_52 : f32 to vector<2x64xf32>
    %247 = arith.addf %246, %245 : vector<2x64xf32>
    %248 = arith.divf %246, %247 : vector<2x64xf32>
    %249 = vector.extract_strided_slice %248 {offsets = [0, 0], sizes = [2, 32], strides = [1, 1]} : vector<2x64xf32> to vector<2x32xf32>
    %250 = vector.extract_strided_slice %248 {offsets = [0, 32], sizes = [2, 32], strides = [1, 1]} : vector<2x64xf32> to vector<2x32xf32>
    %251 = vector.extract_strided_slice %240 {offsets = [0, 64], sizes = [2, 32], strides = [1, 1]} : vector<2x96xf32> to vector<2x32xf32>
    %252 = vector.extract_strided_slice %239 {offsets = [0, 64], sizes = [2, 32], strides = [1, 1]} : vector<2x96xf32> to vector<2x32xf32>
    %253 = vector.broadcast %4 : vector<1x32xf32> to vector<2x32xf32>
    %254 = arith.addf %252, %253 : vector<2x32xf32>
    %255 = arith.mulf %249, %254 : vector<2x32xf32>
    %256 = arith.addf %251, %255 : vector<2x32xf32>
    %257 = math.tanh %256 : vector<2x32xf32>
    %cst_53 = arith.constant 1.000000e+00 : f32
    %258 = vector.broadcast %cst_53 : f32 to vector<2x32xf32>
    %259 = arith.subf %258, %250 : vector<2x32xf32>
    %260 = arith.mulf %259, %257 : vector<2x32xf32>
    %261 = arith.mulf %250, %212 : vector<2x32xf32>
    %262 = arith.addf %260, %261 : vector<2x32xf32>
    %cst_54 = arith.constant dense<0.000000e+00> : vector<2x96xf32>
    %263 = tpu.matmul %212, %0, %cst_54 {dimension_numbers = #tpu.dot_dimension_numbers<[1], [0], [0], [1], [0, 0, 1, 1], [], []>} : vector<2x32xf32>, vector<32x96xf32>, vector<2x96xf32> -> vector<2x96xf32>
    %264 = vector.broadcast %1 : vector<1x96xf32> to vector<2x96xf32>
    %265 = arith.addf %263, %264 : vector<2x96xf32>
    %cst_55 = arith.constant dense<0.000000e+00> : vector<2x96xf32>
    %266 = tpu.matmul %238, %3, %cst_55 {dimension_numbers = #tpu.dot_dimension_numbers<[1], [0], [0], [1], [0, 0, 1, 1], [], []>} : vector<2x32xf32>, vector<32x96xf32>, vector<2x96xf32> -> vector<2x96xf32>
    %267 = vector.extract_strided_slice %265 {offsets = [0, 0], sizes = [2, 64], strides = [1, 1]} : vector<2x96xf32> to vector<2x64xf32>
    %268 = vector.extract_strided_slice %266 {offsets = [0, 0], sizes = [2, 64], strides = [1, 1]} : vector<2x96xf32> to vector<2x64xf32>
    %269 = arith.addf %267, %268 : vector<2x64xf32>
    %270 = arith.negf %269 : vector<2x64xf32>
    %271 = math.exp %270 : vector<2x64xf32>
    %cst_56 = arith.constant 1.000000e+00 : f32
    %272 = vector.broadcast %cst_56 : f32 to vector<2x64xf32>
    %273 = arith.addf %272, %271 : vector<2x64xf32>
    %274 = arith.divf %272, %273 : vector<2x64xf32>
    %275 = vector.extract_strided_slice %274 {offsets = [0, 0], sizes = [2, 32], strides = [1, 1]} : vector<2x64xf32> to vector<2x32xf32>
    %276 = vector.extract_strided_slice %274 {offsets = [0, 32], sizes = [2, 32], strides = [1, 1]} : vector<2x64xf32> to vector<2x32xf32>
    %277 = vector.extract_strided_slice %265 {offsets = [0, 64], sizes = [2, 32], strides = [1, 1]} : vector<2x96xf32> to vector<2x32xf32>
    %278 = vector.extract_strided_slice %266 {offsets = [0, 64], sizes = [2, 32], strides = [1, 1]} : vector<2x96xf32> to vector<2x32xf32>
    %279 = vector.broadcast %5 : vector<1x32xf32> to vector<2x32xf32>
    %280 = arith.addf %278, %279 : vector<2x32xf32>
    %281 = arith.mulf %275, %280 : vector<2x32xf32>
    %282 = arith.addf %277, %281 : vector<2x32xf32>
    %283 = math.tanh %282 : vector<2x32xf32>
    %cst_57 = arith.constant 1.000000e+00 : f32
    %284 = vector.broadcast %cst_57 : f32 to vector<2x32xf32>
    %285 = arith.subf %284, %276 : vector<2x32xf32>
    %286 = arith.mulf %285, %283 : vector<2x32xf32>
    %287 = arith.mulf %276, %238 : vector<2x32xf32>
    %288 = arith.addf %286, %287 : vector<2x32xf32>
    %cst_58 = arith.constant dense<0.000000e+00> : vector<2x96xf32>
    %289 = tpu.matmul %262, %2, %cst_58 {dimension_numbers = #tpu.dot_dimension_numbers<[1], [0], [0], [1], [0, 0, 1, 1], [], []>} : vector<2x32xf32>, vector<32x96xf32>, vector<2x96xf32> -> vector<2x96xf32>
    %290 = vector.extract_strided_slice %12 {offsets = [12, 0], sizes = [2, 96], strides = [1, 1]} : vector<16x96xf32> to vector<2x96xf32>
    %291 = vector.extract_strided_slice %290 {offsets = [0, 0], sizes = [2, 64], strides = [1, 1]} : vector<2x96xf32> to vector<2x64xf32>
    %292 = vector.extract_strided_slice %289 {offsets = [0, 0], sizes = [2, 64], strides = [1, 1]} : vector<2x96xf32> to vector<2x64xf32>
    %293 = arith.addf %291, %292 : vector<2x64xf32>
    %294 = arith.negf %293 : vector<2x64xf32>
    %295 = math.exp %294 : vector<2x64xf32>
    %cst_59 = arith.constant 1.000000e+00 : f32
    %296 = vector.broadcast %cst_59 : f32 to vector<2x64xf32>
    %297 = arith.addf %296, %295 : vector<2x64xf32>
    %298 = arith.divf %296, %297 : vector<2x64xf32>
    %299 = vector.extract_strided_slice %298 {offsets = [0, 0], sizes = [2, 32], strides = [1, 1]} : vector<2x64xf32> to vector<2x32xf32>
    %300 = vector.extract_strided_slice %298 {offsets = [0, 32], sizes = [2, 32], strides = [1, 1]} : vector<2x64xf32> to vector<2x32xf32>
    %301 = vector.extract_strided_slice %290 {offsets = [0, 64], sizes = [2, 32], strides = [1, 1]} : vector<2x96xf32> to vector<2x32xf32>
    %302 = vector.extract_strided_slice %289 {offsets = [0, 64], sizes = [2, 32], strides = [1, 1]} : vector<2x96xf32> to vector<2x32xf32>
    %303 = vector.broadcast %4 : vector<1x32xf32> to vector<2x32xf32>
    %304 = arith.addf %302, %303 : vector<2x32xf32>
    %305 = arith.mulf %299, %304 : vector<2x32xf32>
    %306 = arith.addf %301, %305 : vector<2x32xf32>
    %307 = math.tanh %306 : vector<2x32xf32>
    %cst_60 = arith.constant 1.000000e+00 : f32
    %308 = vector.broadcast %cst_60 : f32 to vector<2x32xf32>
    %309 = arith.subf %308, %300 : vector<2x32xf32>
    %310 = arith.mulf %309, %307 : vector<2x32xf32>
    %311 = arith.mulf %300, %262 : vector<2x32xf32>
    %312 = arith.addf %310, %311 : vector<2x32xf32>
    %cst_61 = arith.constant dense<0.000000e+00> : vector<2x96xf32>
    %313 = tpu.matmul %262, %0, %cst_61 {dimension_numbers = #tpu.dot_dimension_numbers<[1], [0], [0], [1], [0, 0, 1, 1], [], []>} : vector<2x32xf32>, vector<32x96xf32>, vector<2x96xf32> -> vector<2x96xf32>
    %314 = vector.broadcast %1 : vector<1x96xf32> to vector<2x96xf32>
    %315 = arith.addf %313, %314 : vector<2x96xf32>
    %cst_62 = arith.constant dense<0.000000e+00> : vector<2x96xf32>
    %316 = tpu.matmul %288, %3, %cst_62 {dimension_numbers = #tpu.dot_dimension_numbers<[1], [0], [0], [1], [0, 0, 1, 1], [], []>} : vector<2x32xf32>, vector<32x96xf32>, vector<2x96xf32> -> vector<2x96xf32>
    %317 = vector.extract_strided_slice %315 {offsets = [0, 0], sizes = [2, 64], strides = [1, 1]} : vector<2x96xf32> to vector<2x64xf32>
    %318 = vector.extract_strided_slice %316 {offsets = [0, 0], sizes = [2, 64], strides = [1, 1]} : vector<2x96xf32> to vector<2x64xf32>
    %319 = arith.addf %317, %318 : vector<2x64xf32>
    %320 = arith.negf %319 : vector<2x64xf32>
    %321 = math.exp %320 : vector<2x64xf32>
    %cst_63 = arith.constant 1.000000e+00 : f32
    %322 = vector.broadcast %cst_63 : f32 to vector<2x64xf32>
    %323 = arith.addf %322, %321 : vector<2x64xf32>
    %324 = arith.divf %322, %323 : vector<2x64xf32>
    %325 = vector.extract_strided_slice %324 {offsets = [0, 0], sizes = [2, 32], strides = [1, 1]} : vector<2x64xf32> to vector<2x32xf32>
    %326 = vector.extract_strided_slice %324 {offsets = [0, 32], sizes = [2, 32], strides = [1, 1]} : vector<2x64xf32> to vector<2x32xf32>
    %327 = vector.extract_strided_slice %315 {offsets = [0, 64], sizes = [2, 32], strides = [1, 1]} : vector<2x96xf32> to vector<2x32xf32>
    %328 = vector.extract_strided_slice %316 {offsets = [0, 64], sizes = [2, 32], strides = [1, 1]} : vector<2x96xf32> to vector<2x32xf32>
    %329 = vector.broadcast %5 : vector<1x32xf32> to vector<2x32xf32>
    %330 = arith.addf %328, %329 : vector<2x32xf32>
    %331 = arith.mulf %325, %330 : vector<2x32xf32>
    %332 = arith.addf %327, %331 : vector<2x32xf32>
    %333 = math.tanh %332 : vector<2x32xf32>
    %cst_64 = arith.constant 1.000000e+00 : f32
    %334 = vector.broadcast %cst_64 : f32 to vector<2x32xf32>
    %335 = arith.subf %334, %326 : vector<2x32xf32>
    %336 = arith.mulf %335, %333 : vector<2x32xf32>
    %337 = arith.mulf %326, %288 : vector<2x32xf32>
    %338 = arith.addf %336, %337 : vector<2x32xf32>
    %cst_65 = arith.constant dense<0.000000e+00> : vector<2x96xf32>
    %339 = tpu.matmul %312, %2, %cst_65 {dimension_numbers = #tpu.dot_dimension_numbers<[1], [0], [0], [1], [0, 0, 1, 1], [], []>} : vector<2x32xf32>, vector<32x96xf32>, vector<2x96xf32> -> vector<2x96xf32>
    %340 = vector.extract_strided_slice %12 {offsets = [14, 0], sizes = [2, 96], strides = [1, 1]} : vector<16x96xf32> to vector<2x96xf32>
    %341 = vector.extract_strided_slice %340 {offsets = [0, 0], sizes = [2, 64], strides = [1, 1]} : vector<2x96xf32> to vector<2x64xf32>
    %342 = vector.extract_strided_slice %339 {offsets = [0, 0], sizes = [2, 64], strides = [1, 1]} : vector<2x96xf32> to vector<2x64xf32>
    %343 = arith.addf %341, %342 : vector<2x64xf32>
    %344 = arith.negf %343 : vector<2x64xf32>
    %345 = math.exp %344 : vector<2x64xf32>
    %cst_66 = arith.constant 1.000000e+00 : f32
    %346 = vector.broadcast %cst_66 : f32 to vector<2x64xf32>
    %347 = arith.addf %346, %345 : vector<2x64xf32>
    %348 = arith.divf %346, %347 : vector<2x64xf32>
    %349 = vector.extract_strided_slice %348 {offsets = [0, 0], sizes = [2, 32], strides = [1, 1]} : vector<2x64xf32> to vector<2x32xf32>
    %350 = vector.extract_strided_slice %348 {offsets = [0, 32], sizes = [2, 32], strides = [1, 1]} : vector<2x64xf32> to vector<2x32xf32>
    %351 = vector.extract_strided_slice %340 {offsets = [0, 64], sizes = [2, 32], strides = [1, 1]} : vector<2x96xf32> to vector<2x32xf32>
    %352 = vector.extract_strided_slice %339 {offsets = [0, 64], sizes = [2, 32], strides = [1, 1]} : vector<2x96xf32> to vector<2x32xf32>
    %353 = vector.broadcast %4 : vector<1x32xf32> to vector<2x32xf32>
    %354 = arith.addf %352, %353 : vector<2x32xf32>
    %355 = arith.mulf %349, %354 : vector<2x32xf32>
    %356 = arith.addf %351, %355 : vector<2x32xf32>
    %357 = math.tanh %356 : vector<2x32xf32>
    %cst_67 = arith.constant 1.000000e+00 : f32
    %358 = vector.broadcast %cst_67 : f32 to vector<2x32xf32>
    %359 = arith.subf %358, %350 : vector<2x32xf32>
    %360 = arith.mulf %359, %357 : vector<2x32xf32>
    %361 = arith.mulf %350, %312 : vector<2x32xf32>
    %362 = arith.addf %360, %361 : vector<2x32xf32>
    %cst_68 = arith.constant dense<0.000000e+00> : vector<2x96xf32>
    %363 = tpu.matmul %312, %0, %cst_68 {dimension_numbers = #tpu.dot_dimension_numbers<[1], [0], [0], [1], [0, 0, 1, 1], [], []>} : vector<2x32xf32>, vector<32x96xf32>, vector<2x96xf32> -> vector<2x96xf32>
    %364 = vector.broadcast %1 : vector<1x96xf32> to vector<2x96xf32>
    %365 = arith.addf %363, %364 : vector<2x96xf32>
    %cst_69 = arith.constant dense<0.000000e+00> : vector<2x96xf32>
    %366 = tpu.matmul %338, %3, %cst_69 {dimension_numbers = #tpu.dot_dimension_numbers<[1], [0], [0], [1], [0, 0, 1, 1], [], []>} : vector<2x32xf32>, vector<32x96xf32>, vector<2x96xf32> -> vector<2x96xf32>
    %367 = vector.extract_strided_slice %365 {offsets = [0, 0], sizes = [2, 64], strides = [1, 1]} : vector<2x96xf32> to vector<2x64xf32>
    %368 = vector.extract_strided_slice %366 {offsets = [0, 0], sizes = [2, 64], strides = [1, 1]} : vector<2x96xf32> to vector<2x64xf32>
    %369 = arith.addf %367, %368 : vector<2x64xf32>
    %370 = arith.negf %369 : vector<2x64xf32>
    %371 = math.exp %370 : vector<2x64xf32>
    %cst_70 = arith.constant 1.000000e+00 : f32
    %372 = vector.broadcast %cst_70 : f32 to vector<2x64xf32>
    %373 = arith.addf %372, %371 : vector<2x64xf32>
    %374 = arith.divf %372, %373 : vector<2x64xf32>
    %375 = vector.extract_strided_slice %374 {offsets = [0, 0], sizes = [2, 32], strides = [1, 1]} : vector<2x64xf32> to vector<2x32xf32>
    %376 = vector.extract_strided_slice %374 {offsets = [0, 32], sizes = [2, 32], strides = [1, 1]} : vector<2x64xf32> to vector<2x32xf32>
    %377 = vector.extract_strided_slice %365 {offsets = [0, 64], sizes = [2, 32], strides = [1, 1]} : vector<2x96xf32> to vector<2x32xf32>
    %378 = vector.extract_strided_slice %366 {offsets = [0, 64], sizes = [2, 32], strides = [1, 1]} : vector<2x96xf32> to vector<2x32xf32>
    %379 = vector.broadcast %5 : vector<1x32xf32> to vector<2x32xf32>
    %380 = arith.addf %378, %379 : vector<2x32xf32>
    %381 = arith.mulf %375, %380 : vector<2x32xf32>
    %382 = arith.addf %377, %381 : vector<2x32xf32>
    %383 = math.tanh %382 : vector<2x32xf32>
    %cst_71 = arith.constant 1.000000e+00 : f32
    %384 = vector.broadcast %cst_71 : f32 to vector<2x32xf32>
    %385 = arith.subf %384, %376 : vector<2x32xf32>
    %386 = arith.mulf %385, %383 : vector<2x32xf32>
    %387 = arith.mulf %376, %338 : vector<2x32xf32>
    %388 = arith.addf %386, %387 : vector<2x32xf32>
    %cst_72 = arith.constant dense<0.000000e+00> : vector<2x96xf32>
    %389 = tpu.matmul %362, %0, %cst_72 {dimension_numbers = #tpu.dot_dimension_numbers<[1], [0], [0], [1], [0, 0, 1, 1], [], []>} : vector<2x32xf32>, vector<32x96xf32>, vector<2x96xf32> -> vector<2x96xf32>
    %390 = vector.broadcast %1 : vector<1x96xf32> to vector<2x96xf32>
    %391 = arith.addf %389, %390 : vector<2x96xf32>
    %cst_73 = arith.constant dense<0.000000e+00> : vector<2x96xf32>
    %392 = tpu.matmul %388, %3, %cst_73 {dimension_numbers = #tpu.dot_dimension_numbers<[1], [0], [0], [1], [0, 0, 1, 1], [], []>} : vector<2x32xf32>, vector<32x96xf32>, vector<2x96xf32> -> vector<2x96xf32>
    %393 = vector.extract_strided_slice %391 {offsets = [0, 0], sizes = [2, 64], strides = [1, 1]} : vector<2x96xf32> to vector<2x64xf32>
    %394 = vector.extract_strided_slice %392 {offsets = [0, 0], sizes = [2, 64], strides = [1, 1]} : vector<2x96xf32> to vector<2x64xf32>
    %395 = arith.addf %393, %394 : vector<2x64xf32>
    %396 = arith.negf %395 : vector<2x64xf32>
    %397 = math.exp %396 : vector<2x64xf32>
    %cst_74 = arith.constant 1.000000e+00 : f32
    %398 = vector.broadcast %cst_74 : f32 to vector<2x64xf32>
    %399 = arith.addf %398, %397 : vector<2x64xf32>
    %400 = arith.divf %398, %399 : vector<2x64xf32>
    %401 = vector.extract_strided_slice %400 {offsets = [0, 0], sizes = [2, 32], strides = [1, 1]} : vector<2x64xf32> to vector<2x32xf32>
    %402 = vector.extract_strided_slice %400 {offsets = [0, 32], sizes = [2, 32], strides = [1, 1]} : vector<2x64xf32> to vector<2x32xf32>
    %403 = vector.extract_strided_slice %391 {offsets = [0, 64], sizes = [2, 32], strides = [1, 1]} : vector<2x96xf32> to vector<2x32xf32>
    %404 = vector.extract_strided_slice %392 {offsets = [0, 64], sizes = [2, 32], strides = [1, 1]} : vector<2x96xf32> to vector<2x32xf32>
    %405 = vector.broadcast %5 : vector<1x32xf32> to vector<2x32xf32>
    %406 = arith.addf %404, %405 : vector<2x32xf32>
    %407 = arith.mulf %401, %406 : vector<2x32xf32>
    %408 = arith.addf %403, %407 : vector<2x32xf32>
    %409 = math.tanh %408 : vector<2x32xf32>
    %cst_75 = arith.constant 1.000000e+00 : f32
    %410 = vector.broadcast %cst_75 : f32 to vector<2x32xf32>
    %411 = arith.subf %410, %402 : vector<2x32xf32>
    %412 = arith.mulf %411, %409 : vector<2x32xf32>
    %413 = arith.mulf %402, %388 : vector<2x32xf32>
    %414 = arith.addf %412, %413 : vector<2x32xf32>
    %c0_76 = arith.constant 0 : index
    %c0_77 = arith.constant 0 : index
    %415 = vector.load %arg10[%c0_76, %c0_77] : memref<32x1xf32, #tpu.memory_space<vmem>>, vector<32x1xf32>
    %cst_78 = arith.constant dense<0.000000e+00> : vector<2x1xf32>
    %416 = tpu.matmul %414, %415, %cst_78 {dimension_numbers = #tpu.dot_dimension_numbers<[1], [0], [0], [1], [0, 0, 1, 1], [], []>} : vector<2x32xf32>, vector<32x1xf32>, vector<2x1xf32> -> vector<2x1xf32>
    %c0_79 = arith.constant 0 : index
    %c0_80 = arith.constant 0 : index
    %417 = vector.load %arg11[%c0_79, %c0_80] : memref<1x1xf32, #tpu.memory_space<vmem>>, vector<1x1xf32>
    %418 = vector.broadcast %417 : vector<1x1xf32> to vector<2x1xf32>
    %419 = arith.addf %416, %418 : vector<2x1xf32>
    %c0_81 = arith.constant 0 : index
    %c0_82 = arith.constant 0 : index
    %420 = vector.load %arg12[%c0_81, %c0_82] : memref<2x1xf32, #tpu.memory_space<vmem>>, vector<2x1xf32>
    tpu.vector_store %arg12[%c0_81, %c0_82], %419 {strides = array<i32>} : memref<2x1xf32, #tpu.memory_space<vmem>>, vector<2x1xf32>,
    return
  }
  func.func @transform_0(%arg0: i32) -> (i32, i32, i32) {
    %c0_i32 = arith.constant 0 : i32
    %c0_i32_0 = arith.constant 0 : i32
    %c0_i32_1 = arith.constant 0 : i32
    return %arg0, %c0_i32, %c0_i32_0 : i32, i32, i32
  }
  func.func @transform_1(%arg0: i32) -> (i32, i32) {
    %c0_i32 = arith.constant 0 : i32
    %c0_i32_0 = arith.constant 0 : i32
    %c0_i32_1 = arith.constant 0 : i32
    return %c0_i32, %c0_i32_0 : i32, i32
  }
  func.func @transform_2(%arg0: i32) -> (i32, i32) {
    %c0_i32 = arith.constant 0 : i32
    %c0_i32_0 = arith.constant 0 : i32
    %c0_i32_1 = arith.constant 0 : i32
    return %c0_i32, %c0_i32_0 : i32, i32
  }
  func.func @transform_3(%arg0: i32) -> (i32, i32) {
    %c0_i32 = arith.constant 0 : i32
    %c0_i32_0 = arith.constant 0 : i32
    %c0_i32_1 = arith.constant 0 : i32
    return %c0_i32, %c0_i32_0 : i32, i32
  }
  func.func @transform_4(%arg0: i32) -> (i32, i32) {
    %c0_i32 = arith.constant 0 : i32
    %c0_i32_0 = arith.constant 0 : i32
    %c0_i32_1 = arith.constant 0 : i32
    return %c0_i32, %c0_i32_0 : i32, i32
  }
  func.func @transform_5(%arg0: i32) -> (i32, i32) {
    %c0_i32 = arith.constant 0 : i32
    %c0_i32_0 = arith.constant 0 : i32
    %c0_i32_1 = arith.constant 0 : i32
    return %c0_i32, %c0_i32_0 : i32, i32
  }
  func.func @transform_6(%arg0: i32) -> (i32, i32) {
    %c0_i32 = arith.constant 0 : i32
    %c0_i32_0 = arith.constant 0 : i32
    %c0_i32_1 = arith.constant 0 : i32
    return %c0_i32, %c0_i32_0 : i32, i32
  }
  func.func @transform_7(%arg0: i32) -> (i32, i32) {
    %c0_i32 = arith.constant 0 : i32
    %c0_i32_0 = arith.constant 0 : i32
    %c0_i32_1 = arith.constant 0 : i32
    return %c0_i32, %c0_i32_0 : i32, i32
  }
  func.func @transform_8(%arg0: i32) -> (i32, i32) {
    %c0_i32 = arith.constant 0 : i32
    %c0_i32_0 = arith.constant 0 : i32
    %c0_i32_1 = arith.constant 0 : i32
    return %c0_i32, %c0_i32_0 : i32, i32
  }
  func.func @transform_9(%arg0: i32) -> (i32, i32) {
    %c0_i32 = arith.constant 0 : i32
    %c0_i32_0 = arith.constant 0 : i32
    %c0_i32_1 = arith.constant 0 : i32
    return %c0_i32, %c0_i32_0 : i32, i32
  }
  func.func @transform_10(%arg0: i32) -> (i32, i32) {
    %c0_i32 = arith.constant 0 : i32
    %c0_i32_0 = arith.constant 0 : i32
    %c0_i32_1 = arith.constant 0 : i32
    return %c0_i32, %c0_i32_0 : i32, i32
  }
  func.func @transform_11(%arg0: i32) -> (i32, i32) {
    %c0_i32 = arith.constant 0 : i32
    %c0_i32_0 = arith.constant 0 : i32
    return %arg0, %c0_i32 : i32, i32
  }
}

</mosaic_0001>

<llo_original>
// kernel: tpu_custom_call.1
$region0: #{tpu_custom_call.1}
  #allocation0 [shape = 'u32[]', space=smem, size = 0x4, offset = 0x4, fixed_abs, tag = 'smem constant byte address 0x4 - core index']
  #allocation1 [shape = 'u32[144,128]{1,0:T(1,128)}', space=vmem, size = 0x12000, scoped, tag = 'internal scratch']
  #allocation2 [shape = 'f32[1,1]{1,0:T(1,128)S(1)}', space=vmem, size = 0x200, scoped, tag = 'scoped memory for tpu_custom_call.1']
  %s0 = inlined_call_operand.vmem [shape: f32[1,16,4], index: 0, kind: input, shape index: {}]
  %s1 = inlined_call_operand.hbm [shape: f32[4,96], index: 1, kind: input, shape index: {}]
  %s2 = inlined_call_operand.hbm [shape: f32[1,96], index: 2, kind: input, shape index: {}]
  %s3 = inlined_call_operand.vmem [shape: f32[32,96], index: 3, kind: input, shape index: {}]
  %s4 = inlined_call_operand.vmem [shape: f32[1,32], index: 4, kind: input, shape index: {}]
  %s5 = inlined_call_operand.vmem [shape: f32[32,96], index: 5, kind: input, shape index: {}]
  %s6 = inlined_call_operand.vmem [shape: f32[1,96], index: 6, kind: input, shape index: {}]
  %s7 = inlined_call_operand.hbm [shape: f32[32,96], index: 7, kind: input, shape index: {}]
  %s8 = inlined_call_operand.vmem [shape: f32[1,32], index: 8, kind: input, shape index: {}]
  %s9 = inlined_call_operand.vmem [shape: f32[32,1], index: 9, kind: input, shape index: {}]
  %s10 = inlined_call_operand.<no memory space> [shape: f32[1,1], index: 10, kind: input, shape index: {}]
  %s11 = inlined_call_operand.vmem [shape: f32[2,1], index: 11, kind: output, shape index: {}]
  %s12 = sld [smem:[#allocation0]]
  $region66: #{tpu_custom_call.1} parent=0
    _
  %s14 = ssub.s32 1, %s12
  %s15 = scalar_select 0, %s14, %s12
  %v16 = vstv %s10
  %17 = vst [vmem:[#allocation2] sm:$0x1] %v16
  $region1: #{tpu_custom_call.1} parent=0
    #allocation3 [shape = 'u8[2048]{0}', space=vmem, size = 0x800, scoped, tag = 'input window, operand 1, single buffered']
    #allocation4 [shape = 's32[1]{0}', space=sflag, size = 0x4, scoped, tag = 'scoped memory for tpu_custom_call.1']
    #allocation5 [shape = 'u8[512]{0}', space=vmem, size = 0x400, scoped, tag = 'input window, operand 2, single buffered']
    #allocation6 [shape = 's32[1]{0}', space=sflag, size = 0x4, scoped, tag = 'scoped memory for tpu_custom_call.1']
    #allocation7 [shape = 'u8[16384]{0}', space=vmem, size = 0x4000, scoped, tag = 'input window, operand 7, single buffered']
    %18 = vsyncpa [#allocation4], 0
    %19 = vsyncpa [#allocation6], 0
    // Predicated region
    $region2: #{tpu_custom_call.1} parent=1 // pred_check
      _
    $region3: #{tpu_custom_call.1} parent=1 // pred_check_branch
      %21 = sbr.rel (0) target = $region5
    $region4: #{tpu_custom_call.1} parent=1 // pred_region
      _
    $region5: #{tpu_custom_call.1} parent=1 // pred_fallthru
      _
    // Predicated region
    $region6: #{tpu_custom_call.1} parent=1 // pred_check
      _
    $region7: #{tpu_custom_call.1} parent=1 // pred_check_branch
      %23 = sbr.rel (0) target = $region9
    $region8: #{tpu_custom_call.1} parent=1 // pred_region
      %s25 = ssub.s32 64, 64
      %26 = vsyncadd [#allocation4], %s25
      %s28 = sshll.u32 [#allocation3], 4
      %s29 = int_to_ptr.vmem [resolvable:$true] %s28
      %31 = dma.hbm_to_vmem [thread:$0]  %s1, 64, %s29, [#allocation4]
    $region9: #{tpu_custom_call.1} parent=1 // pred_fallthru
      _
    // Predicated region
    $region10: #{tpu_custom_call.1} parent=1 // pred_check
      _
    $region11: #{tpu_custom_call.1} parent=1 // pred_check_branch
      %33 = sbr.rel (0) target = $region13
    $region12: #{tpu_custom_call.1} parent=1 // pred_region
      %s35 = ssub.s32 16, 16
      %36 = vsyncadd [#allocation6], %s35
      %s38 = sshll.u32 [#allocation5], 4
      %s39 = int_to_ptr.vmem [resolvable:$true] %s38
      %41 = dma.hbm_to_vmem [thread:$0]  %s2, 16, %s39, [#allocation6]
    $region13: #{tpu_custom_call.1} parent=1 // pred_fallthru
      _
    // Predicated region
    $region14: #{tpu_custom_call.1} parent=1 // pred_check
      _
    $region15: #{tpu_custom_call.1} parent=1 // pred_check_branch
      %43 = sbr.rel (0) target = $region17
    $region16: #{tpu_custom_call.1} parent=1 // pred_region
      _
    $region17: #{tpu_custom_call.1} parent=1 // pred_fallthru
      _
    // Predicated region
    $region18: #{tpu_custom_call.1} parent=1 // pred_check
      _
    $region19: #{tpu_custom_call.1} parent=1 // pred_check_branch
      %45 = sbr.rel (0) target = $region21
    $region20: #{tpu_custom_call.1} parent=1 // pred_region
      _
    $region21: #{tpu_custom_call.1} parent=1 // pred_fallthru
      _
    // Predicated region
    $region22: #{tpu_custom_call.1} parent=1 // pred_check
      _
    $region23: #{tpu_custom_call.1} parent=1 // pred_check_branch
      %47 = sbr.rel (0) target = $region25
    $region24: #{tpu_custom_call.1} parent=1 // pred_region
      _
    $region25: #{tpu_custom_call.1} parent=1 // pred_fallthru
      _
    // Predicated region
    $region26: #{tpu_custom_call.1} parent=1 // pred_check
      _
    $region27: #{tpu_custom_call.1} parent=1 // pred_check_branch
      %49 = sbr.rel (0) target = $region29
    $region28: #{tpu_custom_call.1} parent=1 // pred_region
      _
    $region29: #{tpu_custom_call.1} parent=1 // pred_fallthru
      _
    // Predicated region
    $region30: #{tpu_custom_call.1} parent=1 // pred_check
      _
    $region31: #{tpu_custom_call.1} parent=1 // pred_check_branch
      %51 = sbr.rel (0) target = $region33
    $region32: #{tpu_custom_call.1} parent=1 // pred_region
      %s53 = ssub.s32 512, 512
      %54 = vsyncadd [#allocation6], %s53
      %s55 = sshll.u32 [#allocation7], 4
      %s56 = int_to_ptr.vmem [resolvable:$true] %s55
      %61 = dma.hbm_to_vmem [thread:$0]  %s7, 512, %s56, [#allocation6], 128, 128, 8
    $region33: #{tpu_custom_call.1} parent=1 // pred_fallthru
      _
    // Predicated region
    $region34: #{tpu_custom_call.1} parent=1 // pred_check
      _
    $region35: #{tpu_custom_call.1} parent=1 // pred_check_branch
      %63 = sbr.rel (0) target = $region37
    $region36: #{tpu_custom_call.1} parent=1 // pred_region
      _
    $region37: #{tpu_custom_call.1} parent=1 // pred_fallthru
      _
    // Predicated region
    $region38: #{tpu_custom_call.1} parent=1 // pred_check
      _
    $region39: #{tpu_custom_call.1} parent=1 // pred_check_branch
      %65 = sbr.rel (0) target = $region41
    $region40: #{tpu_custom_call.1} parent=1 // pred_region
      _
    $region41: #{tpu_custom_call.1} parent=1 // pred_fallthru
      _
    // Predicated region
    $region42: #{tpu_custom_call.1} parent=1 // pred_check
      _
    $region43: #{tpu_custom_call.1} parent=1 // pred_check_branch
      %67 = sbr.rel (0) target = $region45
    $region44: #{tpu_custom_call.1} parent=1 // pred_region
      _
    $region45: #{tpu_custom_call.1} parent=1 // pred_fallthru
      _
    // Predicated region
    $region46: #{tpu_custom_call.1} parent=1 // pred_check
      _
    $region47: #{tpu_custom_call.1} parent=1 // pred_check_branch
      %69 = sbr.rel (0) target = $region49
    $region48: #{tpu_custom_call.1} parent=1 // pred_region
      %70 = dma.done [#allocation4], 64
    $region49: #{tpu_custom_call.1} parent=1 // pred_fallthru
      _
    // Predicated region
    $region50: #{tpu_custom_call.1} parent=1 // pred_check
      _
    $region51: #{tpu_custom_call.1} parent=1 // pred_check_branch
      %72 = sbr.rel (0) target = $region53
    $region52: #{tpu_custom_call.1} parent=1 // pred_region
      %73 = dma.done [#allocation6], 16
    $region53: #{tpu_custom_call.1} parent=1 // pred_fallthru
      _
    // Predicated region
    $region54: #{tpu_custom_call.1} parent=1 // pred_check
      _
    $region55: #{tpu_custom_call.1} parent=1 // pred_check_branch
      %75 = sbr.rel (0) target = $region57
    $region56: #{tpu_custom_call.1} parent=1 // pred_region
      %76 = dma.done [#allocation6], 512
    $region57: #{tpu_custom_call.1} parent=1 // pred_fallthru
      _
    %v77 = vld [vmem:[%s5] sm:$0xff]
    %v78 = vld [vmem:[%s5 + $0x8] sm:$0xff]
    %v79 = vld [vmem:[%s5 + $0x10] sm:$0xff]
    %v80 = vld [vmem:[%s5 + $0x18] sm:$0xff]
    %v81 = vld [vmem:[%s6] sm:$0x1]
    %v82 = vld [vmem:[%s3] sm:$0xff]
    %v83 = vld [vmem:[%s3 + $0x8] sm:$0xff]
    %v84 = vld [vmem:[%s3 + $0x10] sm:$0xff]
    %v85 = vld [vmem:[%s3 + $0x18] sm:$0xff]
    %v86 = vld [vmem:[#allocation7] sm:$0xff]
    %v87 = vld [vmem:[#allocation7 + $0x8] sm:$0xff]
    %v88 = vld [vmem:[#allocation7 + $0x10] sm:$0xff]
    %v89 = vld [vmem:[#allocation7 + $0x18] sm:$0xff]
    %v90 = vld [vmem:[%s4] sm:$0x1]
    %v91 = vld [vmem:[%s8] sm:$0x1]
    %v92 = vld [vmem:[%s0] sm:$0xff]
    %v93 = vld [vmem:[%s0 + $0x8] sm:$0xff]
    %v94 = vld [vmem:[#allocation3] sm:$0xf]
    %v95 = vld [vmem:[#allocation5] sm:$0x1]
    %v97 = vlaneseq
    %v98 = vshrl.u32 %v97, 7
    %v99 = vsub.s32 0, %v98
    %v100 = vrot.slane %v95, %v99
    %vm102 = vcmask 31744
    %v104 = vsel %vm102, %v92, 0
    %v107 = vsel %vm102, %v93, 0
    %vm109 = vcmask 1043456
    %v111 = vsel %vm109, %v94, 0
    %113 = vmatprep.subr.mxu0 0.0
    %114 = vmatpush1.msra.mxu0 %v111
    %115 = vmatprep.subr.mxu0 0.0
    %116 = vmatpush1.msra.mxu0 0.0
    %117 = vmatprep.subr.mxu0 0.0
    %118 = vmatpush1.msra.mxu0 0.0
    %119 = vmatprep.subr.mxu0 0.0
    %120 = vmatpush1.msra.mxu0 0.0
    %121 = vmatprep.subr.mxu0 0.0
    %122 = vmatpush1.msra.mxu0 0.0
    %123 = vmatprep.subr.mxu0 0.0
    %124 = vmatpush1.msra.mxu0 0.0
    %125 = vmatprep.subr.mxu0 0.0
    %126 = vmatpush1.msra.mxu0 0.0
    %127 = vmatprep.subr.mxu0 0.0
    %128 = vmatpush1.msra.mxu0 0.0
    %129 = vmatprep.subr.mxu0 0.0
    %130 = vmatpush1.msra.mxu0 0.0
    %131 = vmatprep.subr.mxu0 0.0
    %132 = vmatpush1.msra.mxu0 0.0
    %133 = vmatprep.subr.mxu0 0.0
    %134 = vmatpush1.msra.mxu0 0.0
    %135 = vmatprep.subr.mxu0 0.0
    %136 = vmatpush1.msra.mxu0 0.0
    %137 = vmatprep.subr.mxu0 0.0
    %138 = vmatpush1.msra.mxu0 0.0
    %139 = vmatprep.subr.mxu0 0.0
    %140 = vmatpush1.msra.mxu0 0.0
    %141 = vmatprep.subr.mxu0 0.0
    %142 = vmatpush1.msra.mxu0 0.0
    %143 = vmatprep.subr.mxu0 0.0
    %144 = vmatpush1.msra.mxu0 0.0
    %145 = vmatprep.subr.mxu0 0.0
    %146 = vmatpush1.msra.mxu0 0.0
    %147 = vmatprep.subr.mxu0 0.0
    %148 = vmatpush1.msra.mxu0 0.0
    %149 = vmatprep.subr.mxu0 0.0
    %150 = vmatpush1.msra.mxu0 0.0
    %151 = vmatprep.subr.mxu0 0.0
    %152 = vmatpush1.msra.mxu0 0.0
    %153 = vmatprep.subr.mxu0 0.0
    %154 = vmatpush1.msra.mxu0 0.0
    %155 = vmatprep.subr.mxu0 0.0
    %156 = vmatpush1.msra.mxu0 0.0
    %157 = vmatprep.subr.mxu0 0.0
    %158 = vmatpush1.msra.mxu0 0.0
    %159 = vmatprep.subr.mxu0 0.0
    %160 = vmatpush1.msra.mxu0 0.0
    %161 = vmatprep.subr.mxu0 0.0
    %162 = vmatpush1.msra.mxu0 0.0
    %163 = vmatprep.subr.mxu0 0.0
    %164 = vmatpush1.msra.mxu0 0.0
    %165 = vmatprep.subr.mxu0 0.0
    %166 = vmatpush1.msra.mxu0 0.0
    %167 = vmatprep.subr.mxu0 0.0
    %168 = vmatpush1.msra.mxu0 0.0
    %169 = vmatprep.subr.mxu0 0.0
    %170 = vmatpush1.msra.mxu0 0.0
    %171 = vmatprep.subr.mxu0 0.0
    %172 = vmatpush1.msra.mxu0 0.0
    %173 = vmatprep.subr.mxu0 0.0
    %174 = vmatpush1.msra.mxu0 0.0
    %175 = vmatprep.subr.mxu0 0.0
    %176 = vmatpush1.msra.mxu0 0.0
    %177 = vmatprep.mubr.f32.mxu0 0.0
    %178 = vmatmul.mubr.f32.gmra.mrb[0].mxu0 %v104
    %v179 = vpop.f32.mrb[0].mxu0
    %v180 = vadd.f32 %v100, %v179
    %v181 = vpop.f32.mrb[0].mxu0
    %182 = vmatprep.mubr.f32.mxu0 0.0
    %183 = vmatmul.mubr.f32.gmra.mrb[0].mxu0 %v107
    %v184 = vpop.f32.mrb[0].mxu0
    %v185 = vadd.f32 %v100, %v184
    %v186 = vpop.f32.mrb[0].mxu0
    %187 = vdwg.mxu0
    %vm188 = vcmask 261120
    %v190 = vsel %vm188, 0.0, 0
    %192 = vmatprep.subr.mxu0 0.0
    %193 = vmatpush1.msra.mxu0 %v82
    %194 = vmatprep.subr.mxu0 0.0
    %195 = vmatpush1.msra.mxu0 %v83
    %196 = vmatprep.subr.mxu0 0.0
    %197 = vmatpush1.msra.mxu0 %v84
    %198 = vmatprep.subr.mxu0 0.0
    %199 = vmatpush1.msra.mxu0 %v85
    %200 = vmatprep.subr.mxu0 0.0
    %201 = vmatpush1.msra.mxu0 0.0
    %202 = vmatprep.subr.mxu0 0.0
    %203 = vmatpush1.msra.mxu0 0.0
    %204 = vmatprep.subr.mxu0 0.0
    %205 = vmatpush1.msra.mxu0 0.0
    %206 = vmatprep.subr.mxu0 0.0
    %207 = vmatpush1.msra.mxu0 0.0
    %208 = vmatprep.subr.mxu0 0.0
    %209 = vmatpush1.msra.mxu0 0.0
    %210 = vmatprep.subr.mxu0 0.0
    %211 = vmatpush1.msra.mxu0 0.0
    %212 = vmatprep.subr.mxu0 0.0
    %213 = vmatpush1.msra.mxu0 0.0
    %214 = vmatprep.subr.mxu0 0.0
    %215 = vmatpush1.msra.mxu0 0.0
    %216 = vmatprep.subr.mxu0 0.0
    %217 = vmatpush1.msra.mxu0 0.0
    %218 = vmatprep.subr.mxu0 0.0
    %219 = vmatpush1.msra.mxu0 0.0
    %220 = vmatprep.subr.mxu0 0.0
    %221 = vmatpush1.msra.mxu0 0.0
    %222 = vmatprep.subr.mxu0 0.0
    %223 = vmatpush1.msra.mxu0 0.0
    %224 = vmatprep.subr.mxu0 0.0
    %225 = vmatpush1.msra.mxu0 0.0
    %226 = vmatprep.subr.mxu0 0.0
    %227 = vmatpush1.msra.mxu0 0.0
    %228 = vmatprep.subr.mxu0 0.0
    %229 = vmatpush1.msra.mxu0 0.0
    %230 = vmatprep.subr.mxu0 0.0
    %231 = vmatpush1.msra.mxu0 0.0
    %232 = vmatprep.subr.mxu0 0.0
    %233 = vmatpush1.msra.mxu0 0.0
    %234 = vmatprep.subr.mxu0 0.0
    %235 = vmatpush1.msra.mxu0 0.0
    %236 = vmatprep.subr.mxu0 0.0
    %237 = vmatpush1.msra.mxu0 0.0
    %238 = vmatprep.subr.mxu0 0.0
    %239 = vmatpush1.msra.mxu0 0.0
    %240 = vmatprep.subr.mxu0 0.0
    %241 = vmatpush1.msra.mxu0 0.0
    %242 = vmatprep.subr.mxu0 0.0
    %243 = vmatpush1.msra.mxu0 0.0
    %244 = vmatprep.subr.mxu0 0.0
    %245 = vmatpush1.msra.mxu0 0.0
    %246 = vmatprep.subr.mxu0 0.0
    %247 = vmatpush1.msra.mxu0 0.0
    %248 = vmatprep.subr.mxu0 0.0
    %249 = vmatpush1.msra.mxu0 0.0
    %250 = vmatprep.subr.mxu0 0.0
    %251 = vmatpush1.msra.mxu0 0.0
    %252 = vmatprep.subr.mxu0 0.0
    %253 = vmatpush1.msra.mxu0 0.0
    %254 = vmatprep.subr.mxu0 0.0
    %255 = vmatpush1.msra.mxu0 0.0
    %256 = vmatprep.mubr.f32.mxu0 0.0
    %257 = vmatmul.mubr.f32.gmra.mrb[0].mxu0 %v190
    %v258 = vpop.f32.mrb[0].mxu0
    %v259 = vadd.f32 0.0, %v258
    %v260 = vpop.f32.mrb[0].mxu0
    %261 = vdwg.mxu0
    %v262 = vadd.f32 %v180, %v259
    %v263 = vxor.u32 %v262, 2147483648
    %v264 = vmul.f32 %v263, 1.442695
    %v265 = vpow.pop %v264
    %v266 = vadd.f32 %v265, 1.0
    %v267 = vrcp.pop %v266
    %v268 = vmul.f32 1.0, %v267
    %v270 = vlaneseq
    %v271 = vshrl.u32 %v270, 7
    %v272 = vsub.s32 0, %v271
    %v273 = vrot.slane %v90, %v272
    %274 = vrot.lane.b32.xlu0 %v273, 64
    %v275 = vpop.permute.xlu0 %274
    %v277 = vadd.f32 %v259, %v275
    %279 = vrot.lane.b32.xlu0 %v277, 64
    %v280 = vpop.permute.xlu0 %279
    %v282 = vmul.f32 %v268, %v280
    %284 = vrot.lane.b32.xlu0 %v282, 64
    %v285 = vpop.permute.xlu0 %284
    %v287 = vadd.f32 %v180, %v285
    %v288 = vtanh.pop %v287
    %v289 = vsub.f32 1.0, %v268
    %291 = vrot.lane.b32.xlu0 %v288, 96
    %v292 = vpop.permute.xlu0 %291
    %v294 = vmul.f32 %v289, %v292
    %v295 = vmul.f32 %v268, 0.0
    %v296 = vadd.f32 %v294, %v295
    %298 = vrot.lane.b32.xlu0 %v296, 96
    %v299 = vpop.permute.xlu0 %298
    %v300 = vsel %vm188, %v299, 0
    %302 = vmatprep.subr.mxu0 0.0
    %303 = vmatpush1.msra.mxu0 %v82
    %304 = vmatprep.subr.mxu0 0.0
    %305 = vmatpush1.msra.mxu0 %v83
    %306 = vmatprep.subr.mxu0 0.0
    %307 = vmatpush1.msra.mxu0 %v84
    %308 = vmatprep.subr.mxu0 0.0
    %309 = vmatpush1.msra.mxu0 %v85
    %310 = vmatprep.subr.mxu0 0.0
    %311 = vmatpush1.msra.mxu0 0.0
    %312 = vmatprep.subr.mxu0 0.0
    %313 = vmatpush1.msra.mxu0 0.0
    %314 = vmatprep.subr.mxu0 0.0
    %315 = vmatpush1.msra.mxu0 0.0
    %316 = vmatprep.subr.mxu0 0.0
    %317 = vmatpush1.msra.mxu0 0.0
    %318 = vmatprep.subr.mxu0 0.0
    %319 = vmatpush1.msra.mxu0 0.0
    %320 = vmatprep.subr.mxu0 0.0
    %321 = vmatpush1.msra.mxu0 0.0
    %322 = vmatprep.subr.mxu0 0.0
    %323 = vmatpush1.msra.mxu0 0.0
    %324 = vmatprep.subr.mxu0 0.0
    %325 = vmatpush1.msra.mxu0 0.0
    %326 = vmatprep.subr.mxu0 0.0
    %327 = vmatpush1.msra.mxu0 0.0
    %328 = vmatprep.subr.mxu0 0.0
    %329 = vmatpush1.msra.mxu0 0.0
    %330 = vmatprep.subr.mxu0 0.0
    %331 = vmatpush1.msra.mxu0 0.0
    %332 = vmatprep.subr.mxu0 0.0
    %333 = vmatpush1.msra.mxu0 0.0
    %334 = vmatprep.subr.mxu0 0.0
    %335 = vmatpush1.msra.mxu0 0.0
    %336 = vmatprep.subr.mxu0 0.0
    %337 = vmatpush1.msra.mxu0 0.0
    %338 = vmatprep.subr.mxu0 0.0
    %339 = vmatpush1.msra.mxu0 0.0
    %340 = vmatprep.subr.mxu0 0.0
    %341 = vmatpush1.msra.mxu0 0.0
    %342 = vmatprep.subr.mxu0 0.0
    %343 = vmatpush1.msra.mxu0 0.0
    %344 = vmatprep.subr.mxu0 0.0
    %345 = vmatpush1.msra.mxu0 0.0
    %346 = vmatprep.subr.mxu0 0.0
    %347 = vmatpush1.msra.mxu0 0.0
    %348 = vmatprep.subr.mxu0 0.0
    %349 = vmatpush1.msra.mxu0 0.0
    %350 = vmatprep.subr.mxu0 0.0
    %351 = vmatpush1.msra.mxu0 0.0
    %352 = vmatprep.subr.mxu0 0.0
    %353 = vmatpush1.msra.mxu0 0.0
    %354 = vmatprep.subr.mxu0 0.0
    %355 = vmatpush1.msra.mxu0 0.0
    %356 = vmatprep.subr.mxu0 0.0
    %357 = vmatpush1.msra.mxu0 0.0
    %358 = vmatprep.subr.mxu0 0.0
    %359 = vmatpush1.msra.mxu0 0.0
    %360 = vmatprep.subr.mxu0 0.0
    %361 = vmatpush1.msra.mxu0 0.0
    %362 = vmatprep.subr.mxu0 0.0
    %363 = vmatpush1.msra.mxu0 0.0
    %364 = vmatprep.subr.mxu0 0.0
    %365 = vmatpush1.msra.mxu0 0.0
    %366 = vmatprep.mubr.f32.mxu0 0.0
    %367 = vmatmul.mubr.f32.gmra.mrb[0].mxu0 %v300
    %v368 = vpop.f32.mrb[0].mxu0
    %v369 = vadd.f32 0.0, %v368
    %v370 = vpop.f32.mrb[0].mxu0
    %371 = vdwg.mxu0
    %v373 = vrot.slane %v369, 6
    %v375 = vadd.f32 %v180, %v373
    %v376 = vxor.u32 %v375, 2147483648
    %v377 = vmul.f32 %v376, 1.442695
    %v378 = vpow.pop %v377
    %v379 = vadd.f32 %v378, 1.0
    %v380 = vrcp.pop %v379
    %v381 = vmul.f32 1.0, %v380
    %v382 = vadd.f32 %v369, %v275
    %v384 = vrot.slane %v382, 6
    %385 = vrot.lane.b32.xlu0 %v384, 64
    %v386 = vpop.permute.xlu0 %385
    %v388 = vmul.f32 %v381, %v386
    %390 = vrot.lane.b32.xlu0 %v388, 64
    %v391 = vpop.permute.xlu0 %390
    %v393 = vadd.f32 %v180, %v391
    %v394 = vtanh.pop %v393
    %v395 = vsub.f32 1.0, %v381
    %397 = vrot.lane.b32.xlu0 %v394, 96
    %v398 = vpop.permute.xlu0 %397
    %v400 = vmul.f32 %v395, %v398
    %v401 = vrot.slane %v296, 6
    %v403 = vmul.f32 %v381, %v401
    %v404 = vadd.f32 %v400, %v403
    %v406 = vlaneseq
    %v407 = vshrl.u32 %v406, 7
    %v408 = vsub.s32 0, %v407
    %v409 = vrot.slane %v81, %v408
    %411 = vmatprep.subr.mxu0 0.0
    %412 = vmatpush1.msra.mxu0 %v77
    %413 = vmatprep.subr.mxu0 0.0
    %414 = vmatpush1.msra.mxu0 %v78
    %415 = vmatprep.subr.mxu0 0.0
    %416 = vmatpush1.msra.mxu0 %v79
    %417 = vmatprep.subr.mxu0 0.0
    %418 = vmatpush1.msra.mxu0 %v80
    %419 = vmatprep.subr.mxu0 0.0
    %420 = vmatpush1.msra.mxu0 0.0
    %421 = vmatprep.subr.mxu0 0.0
    %422 = vmatpush1.msra.mxu0 0.0
    %423 = vmatprep.subr.mxu0 0.0
    %424 = vmatpush1.msra.mxu0 0.0
    %425 = vmatprep.subr.mxu0 0.0
    %426 = vmatpush1.msra.mxu0 0.0
    %427 = vmatprep.subr.mxu0 0.0
    %428 = vmatpush1.msra.mxu0 0.0
    %429 = vmatprep.subr.mxu0 0.0
    %430 = vmatpush1.msra.mxu0 0.0
    %431 = vmatprep.subr.mxu0 0.0
    %432 = vmatpush1.msra.mxu0 0.0
    %433 = vmatprep.subr.mxu0 0.0
    %434 = vmatpush1.msra.mxu0 0.0
    %435 = vmatprep.subr.mxu0 0.0
    %436 = vmatpush1.msra.mxu0 0.0
    %437 = vmatprep.subr.mxu0 0.0
    %438 = vmatpush1.msra.mxu0 0.0
    %439 = vmatprep.subr.mxu0 0.0
    %440 = vmatpush1.msra.mxu0 0.0
    %441 = vmatprep.subr.mxu0 0.0
    %442 = vmatpush1.msra.mxu0 0.0
    %443 = vmatprep.subr.mxu0 0.0
    %444 = vmatpush1.msra.mxu0 0.0
    %445 = vmatprep.subr.mxu0 0.0
    %446 = vmatpush1.msra.mxu0 0.0
    %447 = vmatprep.subr.mxu0 0.0
    %448 = vmatpush1.msra.mxu0 0.0
    %449 = vmatprep.subr.mxu0 0.0
    %450 = vmatpush1.msra.mxu0 0.0
    %451 = vmatprep.subr.mxu0 0.0
    %452 = vmatpush1.msra.mxu0 0.0
    %453 = vmatprep.subr.mxu0 0.0
    %454 = vmatpush1.msra.mxu0 0.0
    %455 = vmatprep.subr.mxu0 0.0
    %456 = vmatpush1.msra.mxu0 0.0
    %457 = vmatprep.subr.mxu0 0.0
    %458 = vmatpush1.msra.mxu0 0.0
    %459 = vmatprep.subr.mxu0 0.0
    %460 = vmatpush1.msra.mxu0 0.0
    %461 = vmatprep.subr.mxu0 0.0
    %462 = vmatpush1.msra.mxu0 0.0
    %463 = vmatprep.subr.mxu0 0.0
    %464 = vmatpush1.msra.mxu0 0.0
    %465 = vmatprep.subr.mxu0 0.0
    %466 = vmatpush1.msra.mxu0 0.0
    %467 = vmatprep.subr.mxu0 0.0
    %468 = vmatpush1.msra.mxu0 0.0
    %469 = vmatprep.subr.mxu0 0.0
    %470 = vmatpush1.msra.mxu0 0.0
    %471 = vmatprep.subr.mxu0 0.0
    %472 = vmatpush1.msra.mxu0 0.0
    %473 = vmatprep.subr.mxu0 0.0
    %474 = vmatpush1.msra.mxu0 0.0
    %475 = vmatprep.mubr.f32.mxu0 0.0
    %476 = vmatmul.mubr.f32.gmra.mrb[0].mxu0 %v300
    %v477 = vpop.f32.mrb[0].mxu0
    %v478 = vadd.f32 %v409, %v477
    %v479 = vpop.f32.mrb[0].mxu0
    %480 = vdwg.mxu0
    %481 = vmatprep.subr.mxu0 0.0
    %482 = vmatpush1.msra.mxu0 %v86
    %483 = vmatprep.subr.mxu0 0.0
    %484 = vmatpush1.msra.mxu0 %v87
    %485 = vmatprep.subr.mxu0 0.0
    %486 = vmatpush1.msra.mxu0 %v88
    %487 = vmatprep.subr.mxu0 0.0
    %488 = vmatpush1.msra.mxu0 %v89
    %489 = vmatprep.subr.mxu0 0.0
    %490 = vmatpush1.msra.mxu0 0.0
    %491 = vmatprep.subr.mxu0 0.0
    %492 = vmatpush1.msra.mxu0 0.0
    %493 = vmatprep.subr.mxu0 0.0
    %494 = vmatpush1.msra.mxu0 0.0
    %495 = vmatprep.subr.mxu0 0.0
    %496 = vmatpush1.msra.mxu0 0.0
    %497 = vmatprep.subr.mxu0 0.0
    %498 = vmatpush1.msra.mxu0 0.0
    %499 = vmatprep.subr.mxu0 0.0
    %500 = vmatpush1.msra.mxu0 0.0
    %501 = vmatprep.subr.mxu0 0.0
    %502 = vmatpush1.msra.mxu0 0.0
    %503 = vmatprep.subr.mxu0 0.0
    %504 = vmatpush1.msra.mxu0 0.0
    %505 = vmatprep.subr.mxu0 0.0
    %506 = vmatpush1.msra.mxu0 0.0
    %507 = vmatprep.subr.mxu0 0.0
    %508 = vmatpush1.msra.mxu0 0.0
    %509 = vmatprep.subr.mxu0 0.0
    %510 = vmatpush1.msra.mxu0 0.0
    %511 = vmatprep.subr.mxu0 0.0
    %512 = vmatpush1.msra.mxu0 0.0
    %513 = vmatprep.subr.mxu0 0.0
    %514 = vmatpush1.msra.mxu0 0.0
    %515 = vmatprep.subr.mxu0 0.0
    %516 = vmatpush1.msra.mxu0 0.0
    %517 = vmatprep.subr.mxu0 0.0
    %518 = vmatpush1.msra.mxu0 0.0
    %519 = vmatprep.subr.mxu0 0.0
    %520 = vmatpush1.msra.mxu0 0.0
    %521 = vmatprep.subr.mxu0 0.0
    %522 = vmatpush1.msra.mxu0 0.0
    %523 = vmatprep.subr.mxu0 0.0
    %524 = vmatpush1.msra.mxu0 0.0
    %525 = vmatprep.subr.mxu0 0.0
    %526 = vmatpush1.msra.mxu0 0.0
    %527 = vmatprep.subr.mxu0 0.0
    %528 = vmatpush1.msra.mxu0 0.0
    %529 = vmatprep.subr.mxu0 0.0
    %530 = vmatpush1.msra.mxu0 0.0
    %531 = vmatprep.subr.mxu0 0.0
    %532 = vmatpush1.msra.mxu0 0.0
    %533 = vmatprep.subr.mxu0 0.0
    %534 = vmatpush1.msra.mxu0 0.0
    %535 = vmatprep.subr.mxu0 0.0
    %536 = vmatpush1.msra.mxu0 0.0
    %537 = vmatprep.subr.mxu0 0.0
    %538 = vmatpush1.msra.mxu0 0.0
    %539 = vmatprep.subr.mxu0 0.0
    %540 = vmatpush1.msra.mxu0 0.0
    %541 = vmatprep.subr.mxu0 0.0
    %542 = vmatpush1.msra.mxu0 0.0
    %543 = vmatprep.subr.mxu0 0.0
    %544 = vmatpush1.msra.mxu0 0.0
    %545 = vmatprep.mubr.f32.mxu0 0.0
    %546 = vmatmul.mubr.f32.gmra.mrb[0].mxu0 %v190
    %v547 = vpop.f32.mrb[0].mxu0
    %v548 = vadd.f32 0.0, %v547
    %v549 = vpop.f32.mrb[0].mxu0
    %550 = vdwg.mxu0
    %v551 = vadd.f32 %v478, %v548
    %v552 = vxor.u32 %v551, 2147483648
    %v553 = vmul.f32 %v552, 1.442695
    %v554 = vpow.pop %v553
    %v555 = vadd.f32 %v554, 1.0
    %v556 = vrcp.pop %v555
    %v557 = vmul.f32 1.0, %v556
    %v559 = vlaneseq
    %v560 = vshrl.u32 %v559, 7
    %v561 = vsub.s32 0, %v560
    %v562 = vrot.slane %v91, %v561
    %563 = vrot.lane.b32.xlu0 %v562, 64
    %v564 = vpop.permute.xlu0 %563
    %v566 = vadd.f32 %v548, %v564
    %568 = vrot.lane.b32.xlu0 %v566, 64
    %v569 = vpop.permute.xlu0 %568
    %v571 = vmul.f32 %v557, %v569
    %573 = vrot.lane.b32.xlu0 %v571, 64
    %v574 = vpop.permute.xlu0 %573
    %v576 = vadd.f32 %v478, %v574
    %v577 = vtanh.pop %v576
    %v578 = vsub.f32 1.0, %v557
    %580 = vrot.lane.b32.xlu0 %v577, 96
    %v581 = vpop.permute.xlu0 %580
    %v583 = vmul.f32 %v578, %v581
    %v584 = vmul.f32 %v557, 0.0
    %v585 = vadd.f32 %v583, %v584
    %v587 = vrot.slane %v404, 2
    %588 = vrot.lane.b32.xlu0 %v587, 96
    %v589 = vpop.permute.xlu0 %588
    %v590 = vsel %vm188, %v589, 0
    %592 = vmatprep.subr.mxu0 0.0
    %593 = vmatpush1.msra.mxu0 %v82
    %594 = vmatprep.subr.mxu0 0.0
    %595 = vmatpush1.msra.mxu0 %v83
    %596 = vmatprep.subr.mxu0 0.0
    %597 = vmatpush1.msra.mxu0 %v84
    %598 = vmatprep.subr.mxu0 0.0
    %599 = vmatpush1.msra.mxu0 %v85
    %600 = vmatprep.subr.mxu0 0.0
    %601 = vmatpush1.msra.mxu0 0.0
    %602 = vmatprep.subr.mxu0 0.0
    %603 = vmatpush1.msra.mxu0 0.0
    %604 = vmatprep.subr.mxu0 0.0
    %605 = vmatpush1.msra.mxu0 0.0
    %606 = vmatprep.subr.mxu0 0.0
    %607 = vmatpush1.msra.mxu0 0.0
    %608 = vmatprep.subr.mxu0 0.0
    %609 = vmatpush1.msra.mxu0 0.0
    %610 = vmatprep.subr.mxu0 0.0
    %611 = vmatpush1.msra.mxu0 0.0
    %612 = vmatprep.subr.mxu0 0.0
    %613 = vmatpush1.msra.mxu0 0.0
    %614 = vmatprep.subr.mxu0 0.0
    %615 = vmatpush1.msra.mxu0 0.0
    %616 = vmatprep.subr.mxu0 0.0
    %617 = vmatpush1.msra.mxu0 0.0
    %618 = vmatprep.subr.mxu0 0.0
    %619 = vmatpush1.msra.mxu0 0.0
    %620 = vmatprep.subr.mxu0 0.0
    %621 = vmatpush1.msra.mxu0 0.0
    %622 = vmatprep.subr.mxu0 0.0
    %623 = vmatpush1.msra.mxu0 0.0
    %624 = vmatprep.subr.mxu0 0.0
    %625 = vmatpush1.msra.mxu0 0.0
    %626 = vmatprep.subr.mxu0 0.0
    %627 = vmatpush1.msra.mxu0 0.0
    %628 = vmatprep.subr.mxu0 0.0
    %629 = vmatpush1.msra.mxu0 0.0
    %630 = vmatprep.subr.mxu0 0.0
    %631 = vmatpush1.msra.mxu0 0.0
    %632 = vmatprep.subr.mxu0 0.0
    %633 = vmatpush1.msra.mxu0 0.0
    %634 = vmatprep.subr.mxu0 0.0
    %635 = vmatpush1.msra.mxu0 0.0
    %636 = vmatprep.subr.mxu0 0.0
    %637 = vmatpush1.msra.mxu0 0.0
    %638 = vmatprep.subr.mxu0 0.0
    %639 = vmatpush1.msra.mxu0 0.0
    %640 = vmatprep.subr.mxu0 0.0
    %641 = vmatpush1.msra.mxu0 0.0
    %642 = vmatprep.subr.mxu0 0.0
    %643 = vmatpush1.msra.mxu0 0.0
    %644 = vmatprep.subr.mxu0 0.0
    %645 = vmatpush1.msra.mxu0 0.0
    %646 = vmatprep.subr.mxu0 0.0
    %647 = vmatpush1.msra.mxu0 0.0
    %648 = vmatprep.subr.mxu0 0.0
    %649 = vmatpush1.msra.mxu0 0.0
    %650 = vmatprep.subr.mxu0 0.0
    %651 = vmatpush1.msra.mxu0 0.0
    %652 = vmatprep.subr.mxu0 0.0
    %653 = vmatpush1.msra.mxu0 0.0
    %654 = vmatprep.subr.mxu0 0.0
    %655 = vmatpush1.msra.mxu0 0.0
    %656 = vmatprep.mubr.f32.mxu0 0.0
    %657 = vmatmul.mubr.f32.gmra.mrb[0].mxu0 %v590
    %v658 = vpop.f32.mrb[0].mxu0
    %v659 = vadd.f32 0.0, %v658
    %v660 = vpop.f32.mrb[0].mxu0
    %661 = vdwg.mxu0
    %v663 = vrot.slane %v659, 4
    %v665 = vadd.f32 %v180, %v663
    %v666 = vxor.u32 %v665, 2147483648
    %v667 = vmul.f32 %v666, 1.442695
    %v668 = vpow.pop %v667
    %v669 = vadd.f32 %v668, 1.0
    %v670 = vrcp.pop %v669
    %v671 = vmul.f32 1.0, %v670
    %v672 = vadd.f32 %v659, %v275
    %v674 = vrot.slane %v672, 4
    %675 = vrot.lane.b32.xlu0 %v674, 64
    %v676 = vpop.permute.xlu0 %675
    %v678 = vmul.f32 %v671, %v676
    %680 = vrot.lane.b32.xlu0 %v678, 64
    %v681 = vpop.permute.xlu0 %680
    %v683 = vadd.f32 %v180, %v681
    %v684 = vtanh.pop %v683
    %v685 = vsub.f32 1.0, %v671
    %687 = vrot.lane.b32.xlu0 %v684, 96
    %v688 = vpop.permute.xlu0 %687
    %v690 = vmul.f32 %v685, %v688
    %v691 = vrot.slane %v404, 6
    %v693 = vmul.f32 %v671, %v691
    %v694 = vadd.f32 %v690, %v693
    %695 = vmatprep.subr.mxu0 0.0
    %696 = vmatpush1.msra.mxu0 %v77
    %697 = vmatprep.subr.mxu0 0.0
    %698 = vmatpush1.msra.mxu0 %v78
    %699 = vmatprep.subr.mxu0 0.0
    %700 = vmatpush1.msra.mxu0 %v79
    %701 = vmatprep.subr.mxu0 0.0
    %702 = vmatpush1.msra.mxu0 %v80
    %703 = vmatprep.subr.mxu0 0.0
    %704 = vmatpush1.msra.mxu0 0.0
    %705 = vmatprep.subr.mxu0 0.0
    %706 = vmatpush1.msra.mxu0 0.0
    %707 = vmatprep.subr.mxu0 0.0
    %708 = vmatpush1.msra.mxu0 0.0
    %709 = vmatprep.subr.mxu0 0.0
    %710 = vmatpush1.msra.mxu0 0.0
    %711 = vmatprep.subr.mxu0 0.0
    %712 = vmatpush1.msra.mxu0 0.0
    %713 = vmatprep.subr.mxu0 0.0
    %714 = vmatpush1.msra.mxu0 0.0
    %715 = vmatprep.subr.mxu0 0.0
    %716 = vmatpush1.msra.mxu0 0.0
    %717 = vmatprep.subr.mxu0 0.0
    %718 = vmatpush1.msra.mxu0 0.0
    %719 = vmatprep.subr.mxu0 0.0
    %720 = vmatpush1.msra.mxu0 0.0
    %721 = vmatprep.subr.mxu0 0.0
    %722 = vmatpush1.msra.mxu0 0.0
    %723 = vmatprep.subr.mxu0 0.0
    %724 = vmatpush1.msra.mxu0 0.0
    %725 = vmatprep.subr.mxu0 0.0
    %726 = vmatpush1.msra.mxu0 0.0
    %727 = vmatprep.subr.mxu0 0.0
    %728 = vmatpush1.msra.mxu0 0.0
    %729 = vmatprep.subr.mxu0 0.0
    %730 = vmatpush1.msra.mxu0 0.0
    %731 = vmatprep.subr.mxu0 0.0
    %732 = vmatpush1.msra.mxu0 0.0
    %733 = vmatprep.subr.mxu0 0.0
    %734 = vmatpush1.msra.mxu0 0.0
    %735 = vmatprep.subr.mxu0 0.0
    %736 = vmatpush1.msra.mxu0 0.0
    %737 = vmatprep.subr.mxu0 0.0
    %738 = vmatpush1.msra.mxu0 0.0
    %739 = vmatprep.subr.mxu0 0.0
    %740 = vmatpush1.msra.mxu0 0.0
    %741 = vmatprep.subr.mxu0 0.0
    %742 = vmatpush1.msra.mxu0 0.0
    %743 = vmatprep.subr.mxu0 0.0
    %744 = vmatpush1.msra.mxu0 0.0
    %745 = vmatprep.subr.mxu0 0.0
    %746 = vmatpush1.msra.mxu0 0.0
    %747 = vmatprep.subr.mxu0 0.0
    %748 = vmatpush1.msra.mxu0 0.0
    %749 = vmatprep.subr.mxu0 0.0
    %750 = vmatpush1.msra.mxu0 0.0
    %751 = vmatprep.subr.mxu0 0.0
    %752 = vmatpush1.msra.mxu0 0.0
    %753 = vmatprep.subr.mxu0 0.0
    %754 = vmatpush1.msra.mxu0 0.0
    %755 = vmatprep.subr.mxu0 0.0
    %756 = vmatpush1.msra.mxu0 0.0
    %757 = vmatprep.subr.mxu0 0.0
    %758 = vmatpush1.msra.mxu0 0.0
    %759 = vmatprep.mubr.f32.mxu0 0.0
    %760 = vmatmul.mubr.f32.gmra.mrb[0].mxu0 %v590
    %v761 = vpop.f32.mrb[0].mxu0
    %v762 = vadd.f32 %v409, %v761
    %v763 = vpop.f32.mrb[0].mxu0
    %764 = vdwg.mxu0
    %766 = vrot.lane.b32.xlu0 %v585, 96
    %v767 = vpop.permute.xlu0 %766
    %v768 = vsel %vm188, %v767, 0
    %770 = vmatprep.subr.mxu0 0.0
    %771 = vmatpush1.msra.mxu0 %v86
    %772 = vmatprep.subr.mxu0 0.0
    %773 = vmatpush1.msra.mxu0 %v87
    %774 = vmatprep.subr.mxu0 0.0
    %775 = vmatpush1.msra.mxu0 %v88
    %776 = vmatprep.subr.mxu0 0.0
    %777 = vmatpush1.msra.mxu0 %v89
    %778 = vmatprep.subr.mxu0 0.0
    %779 = vmatpush1.msra.mxu0 0.0
    %780 = vmatprep.subr.mxu0 0.0
    %781 = vmatpush1.msra.mxu0 0.0
    %782 = vmatprep.subr.mxu0 0.0
    %783 = vmatpush1.msra.mxu0 0.0
    %784 = vmatprep.subr.mxu0 0.0
    %785 = vmatpush1.msra.mxu0 0.0
    %786 = vmatprep.subr.mxu0 0.0
    %787 = vmatpush1.msra.mxu0 0.0
    %788 = vmatprep.subr.mxu0 0.0
    %789 = vmatpush1.msra.mxu0 0.0
    %790 = vmatprep.subr.mxu0 0.0
    %791 = vmatpush1.msra.mxu0 0.0
    %792 = vmatprep.subr.mxu0 0.0
    %793 = vmatpush1.msra.mxu0 0.0
    %794 = vmatprep.subr.mxu0 0.0
    %795 = vmatpush1.msra.mxu0 0.0
    %796 = vmatprep.subr.mxu0 0.0
    %797 = vmatpush1.msra.mxu0 0.0
    %798 = vmatprep.subr.mxu0 0.0
    %799 = vmatpush1.msra.mxu0 0.0
    %800 = vmatprep.subr.mxu0 0.0
    %801 = vmatpush1.msra.mxu0 0.0
    %802 = vmatprep.subr.mxu0 0.0
    %803 = vmatpush1.msra.mxu0 0.0
    %804 = vmatprep.subr.mxu0 0.0
    %805 = vmatpush1.msra.mxu0 0.0
    %806 = vmatprep.subr.mxu0 0.0
    %807 = vmatpush1.msra.mxu0 0.0
    %808 = vmatprep.subr.mxu0 0.0
    %809 = vmatpush1.msra.mxu0 0.0
    %810 = vmatprep.subr.mxu0 0.0
    %811 = vmatpush1.msra.mxu0 0.0
    %812 = vmatprep.subr.mxu0 0.0
    %813 = vmatpush1.msra.mxu0 0.0
    %814 = vmatprep.subr.mxu0 0.0
    %815 = vmatpush1.msra.mxu0 0.0
    %816 = vmatprep.subr.mxu0 0.0
    %817 = vmatpush1.msra.mxu0 0.0
    %818 = vmatprep.subr.mxu0 0.0
    %819 = vmatpush1.msra.mxu0 0.0
    %820 = vmatprep.subr.mxu0 0.0
    %821 = vmatpush1.msra.mxu0 0.0
    %822 = vmatprep.subr.mxu0 0.0
    %823 = vmatpush1.msra.mxu0 0.0
    %824 = vmatprep.subr.mxu0 0.0
    %825 = vmatpush1.msra.mxu0 0.0
    %826 = vmatprep.subr.mxu0 0.0
    %827 = vmatpush1.msra.mxu0 0.0
    %828 = vmatprep.subr.mxu0 0.0
    %829 = vmatpush1.msra.mxu0 0.0
    %830 = vmatprep.subr.mxu0 0.0
    %831 = vmatpush1.msra.mxu0 0.0
    %832 = vmatprep.subr.mxu0 0.0
    %833 = vmatpush1.msra.mxu0 0.0
    %834 = vmatprep.mubr.f32.mxu0 0.0
    %835 = vmatmul.mubr.f32.gmra.mrb[0].mxu0 %v768
    %v836 = vpop.f32.mrb[0].mxu0
    %v837 = vadd.f32 0.0, %v836
    %v838 = vpop.f32.mrb[0].mxu0
    %839 = vdwg.mxu0
    %v840 = vadd.f32 %v762, %v837
    %v841 = vxor.u32 %v840, 2147483648
    %v842 = vmul.f32 %v841, 1.442695
    %v843 = vpow.pop %v842
    %v844 = vadd.f32 %v843, 1.0
    %v845 = vrcp.pop %v844
    %v846 = vmul.f32 1.0, %v845
    %v847 = vadd.f32 %v837, %v564
    %849 = vrot.lane.b32.xlu0 %v847, 64
    %v850 = vpop.permute.xlu0 %849
    %v852 = vmul.f32 %v846, %v850
    %854 = vrot.lane.b32.xlu0 %v852, 64
    %v855 = vpop.permute.xlu0 %854
    %v857 = vadd.f32 %v762, %v855
    %v858 = vtanh.pop %v857
    %v859 = vsub.f32 1.0, %v846
    %861 = vrot.lane.b32.xlu0 %v858, 96
    %v862 = vpop.permute.xlu0 %861
    %v864 = vmul.f32 %v859, %v862
    %v865 = vmul.f32 %v846, %v585
    %v866 = vadd.f32 %v864, %v865
    %v868 = vrot.slane %v694, 4
    %869 = vrot.lane.b32.xlu0 %v868, 96
    %v870 = vpop.permute.xlu0 %869
    %v871 = vsel %vm188, %v870, 0
    %873 = vmatprep.subr.mxu0 0.0
    %874 = vmatpush1.msra.mxu0 %v82
    %875 = vmatprep.subr.mxu0 0.0
    %876 = vmatpush1.msra.mxu0 %v83
    %877 = vmatprep.subr.mxu0 0.0
    %878 = vmatpush1.msra.mxu0 %v84
    %879 = vmatprep.subr.mxu0 0.0
    %880 = vmatpush1.msra.mxu0 %v85
    %881 = vmatprep.subr.mxu0 0.0
    %882 = vmatpush1.msra.mxu0 0.0
    %883 = vmatprep.subr.mxu0 0.0
    %884 = vmatpush1.msra.mxu0 0.0
    %885 = vmatprep.subr.mxu0 0.0
    %886 = vmatpush1.msra.mxu0 0.0
    %887 = vmatprep.subr.mxu0 0.0
    %888 = vmatpush1.msra.mxu0 0.0
    %889 = vmatprep.subr.mxu0 0.0
    %890 = vmatpush1.msra.mxu0 0.0
    %891 = vmatprep.subr.mxu0 0.0
    %892 = vmatpush1.msra.mxu0 0.0
    %893 = vmatprep.subr.mxu0 0.0
    %894 = vmatpush1.msra.mxu0 0.0
    %895 = vmatprep.subr.mxu0 0.0
    %896 = vmatpush1.msra.mxu0 0.0
    %897 = vmatprep.subr.mxu0 0.0
    %898 = vmatpush1.msra.mxu0 0.0
    %899 = vmatprep.subr.mxu0 0.0
    %900 = vmatpush1.msra.mxu0 0.0
    %901 = vmatprep.subr.mxu0 0.0
    %902 = vmatpush1.msra.mxu0 0.0
    %903 = vmatprep.subr.mxu0 0.0
    %904 = vmatpush1.msra.mxu0 0.0
    %905 = vmatprep.subr.mxu0 0.0
    %906 = vmatpush1.msra.mxu0 0.0
    %907 = vmatprep.subr.mxu0 0.0
    %908 = vmatpush1.msra.mxu0 0.0
    %909 = vmatprep.subr.mxu0 0.0
    %910 = vmatpush1.msra.mxu0 0.0
    %911 = vmatprep.subr.mxu0 0.0
    %912 = vmatpush1.msra.mxu0 0.0
    %913 = vmatprep.subr.mxu0 0.0
    %914 = vmatpush1.msra.mxu0 0.0
    %915 = vmatprep.subr.mxu0 0.0
    %916 = vmatpush1.msra.mxu0 0.0
    %917 = vmatprep.subr.mxu0 0.0
    %918 = vmatpush1.msra.mxu0 0.0
    %919 = vmatprep.subr.mxu0 0.0
    %920 = vmatpush1.msra.mxu0 0.0
    %921 = vmatprep.subr.mxu0 0.0
    %922 = vmatpush1.msra.mxu0 0.0
    %923 = vmatprep.subr.mxu0 0.0
    %924 = vmatpush1.msra.mxu0 0.0
    %925 = vmatprep.subr.mxu0 0.0
    %926 = vmatpush1.msra.mxu0 0.0
    %927 = vmatprep.subr.mxu0 0.0
    %928 = vmatpush1.msra.mxu0 0.0
    %929 = vmatprep.subr.mxu0 0.0
    %930 = vmatpush1.msra.mxu0 0.0
    %931 = vmatprep.subr.mxu0 0.0
    %932 = vmatpush1.msra.mxu0 0.0
    %933 = vmatprep.subr.mxu0 0.0
    %934 = vmatpush1.msra.mxu0 0.0
    %935 = vmatprep.subr.mxu0 0.0
    %936 = vmatpush1.msra.mxu0 0.0
    %937 = vmatprep.mubr.f32.mxu0 0.0
    %938 = vmatmul.mubr.f32.gmra.mrb[0].mxu0 %v871
    %v939 = vpop.f32.mrb[0].mxu0
    %v940 = vadd.f32 0.0, %v939
    %v941 = vpop.f32.mrb[0].mxu0
    %942 = vdwg.mxu0
    %v944 = vrot.slane %v940, 2
    %v946 = vadd.f32 %v180, %v944
    %v947 = vxor.u32 %v946, 2147483648
    %v948 = vmul.f32 %v947, 1.442695
    %v949 = vpow.pop %v948
    %v950 = vadd.f32 %v949, 1.0
    %v951 = vrcp.pop %v950
    %v952 = vmul.f32 1.0, %v951
    %v953 = vadd.f32 %v940, %v275
    %v955 = vrot.slane %v953, 2
    %956 = vrot.lane.b32.xlu0 %v955, 64
    %v957 = vpop.permute.xlu0 %956
    %v959 = vmul.f32 %v952, %v957
    %961 = vrot.lane.b32.xlu0 %v959, 64
    %v962 = vpop.permute.xlu0 %961
    %v964 = vadd.f32 %v180, %v962
    %v965 = vtanh.pop %v964
    %v966 = vsub.f32 1.0, %v952
    %968 = vrot.lane.b32.xlu0 %v965, 96
    %v969 = vpop.permute.xlu0 %968
    %v971 = vmul.f32 %v966, %v969
    %v972 = vrot.slane %v694, 6
    %v974 = vmul.f32 %v952, %v972
    %v975 = vadd.f32 %v971, %v974
    %976 = vmatprep.subr.mxu0 0.0
    %977 = vmatpush1.msra.mxu0 %v77
    %978 = vmatprep.subr.mxu0 0.0
    %979 = vmatpush1.msra.mxu0 %v78
    %980 = vmatprep.subr.mxu0 0.0
    %981 = vmatpush1.msra.mxu0 %v79
    %982 = vmatprep.subr.mxu0 0.0
    %983 = vmatpush1.msra.mxu0 %v80
    %984 = vmatprep.subr.mxu0 0.0
    %985 = vmatpush1.msra.mxu0 0.0
    %986 = vmatprep.subr.mxu0 0.0
    %987 = vmatpush1.msra.mxu0 0.0
    %988 = vmatprep.subr.mxu0 0.0
    %989 = vmatpush1.msra.mxu0 0.0
    %990 = vmatprep.subr.mxu0 0.0
    %991 = vmatpush1.msra.mxu0 0.0
    %992 = vmatprep.subr.mxu0 0.0
    %993 = vmatpush1.msra.mxu0 0.0
    %994 = vmatprep.subr.mxu0 0.0
    %995 = vmatpush1.msra.mxu0 0.0
    %996 = vmatprep.subr.mxu0 0.0
    %997 = vmatpush1.msra.mxu0 0.0
    %998 = vmatprep.subr.mxu0 0.0
    %999 = vmatpush1.msra.mxu0 0.0
    %1000 = vmatprep.subr.mxu0 0.0
    %1001 = vmatpush1.msra.mxu0 0.0
    %1002 = vmatprep.subr.mxu0 0.0
    %1003 = vmatpush1.msra.mxu0 0.0
    %1004 = vmatprep.subr.mxu0 0.0
    %1005 = vmatpush1.msra.mxu0 0.0
    %1006 = vmatprep.subr.mxu0 0.0
    %1007 = vmatpush1.msra.mxu0 0.0
    %1008 = vmatprep.subr.mxu0 0.0
    %1009 = vmatpush1.msra.mxu0 0.0
    %1010 = vmatprep.subr.mxu0 0.0
    %1011 = vmatpush1.msra.mxu0 0.0
    %1012 = vmatprep.subr.mxu0 0.0
    %1013 = vmatpush1.msra.mxu0 0.0
    %1014 = vmatprep.subr.mxu0 0.0
    %1015 = vmatpush1.msra.mxu0 0.0
    %1016 = vmatprep.subr.mxu0 0.0
    %1017 = vmatpush1.msra.mxu0 0.0
    %1018 = vmatprep.subr.mxu0 0.0
    %1019 = vmatpush1.msra.mxu0 0.0
    %1020 = vmatprep.subr.mxu0 0.0
    %1021 = vmatpush1.msra.mxu0 0.0
    %1022 = vmatprep.subr.mxu0 0.0
    %1023 = vmatpush1.msra.mxu0 0.0
    %1024 = vmatprep.subr.mxu0 0.0
    %1025 = vmatpush1.msra.mxu0 0.0
    %1026 = vmatprep.subr.mxu0 0.0
    %1027 = vmatpush1.msra.mxu0 0.0
    %1028 = vmatprep.subr.mxu0 0.0
    %1029 = vmatpush1.msra.mxu0 0.0
    %1030 = vmatprep.subr.mxu0 0.0
    %1031 = vmatpush1.msra.mxu0 0.0
    %1032 = vmatprep.subr.mxu0 0.0
    %1033 = vmatpush1.msra.mxu0 0.0
    %1034 = vmatprep.subr.mxu0 0.0
    %1035 = vmatpush1.msra.mxu0 0.0
    %1036 = vmatprep.subr.mxu0 0.0
    %1037 = vmatpush1.msra.mxu0 0.0
    %1038 = vmatprep.subr.mxu0 0.0
    %1039 = vmatpush1.msra.mxu0 0.0
    %1040 = vmatprep.mubr.f32.mxu0 0.0
    %1041 = vmatmul.mubr.f32.gmra.mrb[0].mxu0 %v871
    %v1042 = vpop.f32.mrb[0].mxu0
    %v1043 = vadd.f32 %v409, %v1042
    %v1044 = vpop.f32.mrb[0].mxu0
    %1045 = vdwg.mxu0
    %1047 = vrot.lane.b32.xlu0 %v866, 96
    %v1048 = vpop.permute.xlu0 %1047
    %v1049 = vsel %vm188, %v1048, 0
    %1051 = vmatprep.subr.mxu0 0.0
    %1052 = vmatpush1.msra.mxu0 %v86
    %1053 = vmatprep.subr.mxu0 0.0
    %1054 = vmatpush1.msra.mxu0 %v87
    %1055 = vmatprep.subr.mxu0 0.0
    %1056 = vmatpush1.msra.mxu0 %v88
    %1057 = vmatprep.subr.mxu0 0.0
    %1058 = vmatpush1.msra.mxu0 %v89
    %1059 = vmatprep.subr.mxu0 0.0
    %1060 = vmatpush1.msra.mxu0 0.0
    %1061 = vmatprep.subr.mxu0 0.0
    %1062 = vmatpush1.msra.mxu0 0.0
    %1063 = vmatprep.subr.mxu0 0.0
    %1064 = vmatpush1.msra.mxu0 0.0
    %1065 = vmatprep.subr.mxu0 0.0
    %1066 = vmatpush1.msra.mxu0 0.0
    %1067 = vmatprep.subr.mxu0 0.0
    %1068 = vmatpush1.msra.mxu0 0.0
    %1069 = vmatprep.subr.mxu0 0.0
    %1070 = vmatpush1.msra.mxu0 0.0
    %1071 = vmatprep.subr.mxu0 0.0
    %1072 = vmatpush1.msra.mxu0 0.0
    %1073 = vmatprep.subr.mxu0 0.0
    %1074 = vmatpush1.msra.mxu0 0.0
    %1075 = vmatprep.subr.mxu0 0.0
    %1076 = vmatpush1.msra.mxu0 0.0
    %1077 = vmatprep.subr.mxu0 0.0
    %1078 = vmatpush1.msra.mxu0 0.0
    %1079 = vmatprep.subr.mxu0 0.0
    %1080 = vmatpush1.msra.mxu0 0.0
    %1081 = vmatprep.subr.mxu0 0.0
    %1082 = vmatpush1.msra.mxu0 0.0
    %1083 = vmatprep.subr.mxu0 0.0
    %1084 = vmatpush1.msra.mxu0 0.0
    %1085 = vmatprep.subr.mxu0 0.0
    %1086 = vmatpush1.msra.mxu0 0.0
    %1087 = vmatprep.subr.mxu0 0.0
    %1088 = vmatpush1.msra.mxu0 0.0
    %1089 = vmatprep.subr.mxu0 0.0
    %1090 = vmatpush1.msra.mxu0 0.0
    %1091 = vmatprep.subr.mxu0 0.0
    %1092 = vmatpush1.msra.mxu0 0.0
    %1093 = vmatprep.subr.mxu0 0.0
    %1094 = vmatpush1.msra.mxu0 0.0
    %1095 = vmatprep.subr.mxu0 0.0
    %1096 = vmatpush1.msra.mxu0 0.0
    %1097 = vmatprep.subr.mxu0 0.0
    %1098 = vmatpush1.msra.mxu0 0.0
    %1099 = vmatprep.subr.mxu0 0.0
    %1100 = vmatpush1.msra.mxu0 0.0
    %1101 = vmatprep.subr.mxu0 0.0
    %1102 = vmatpush1.msra.mxu0 0.0
    %1103 = vmatprep.subr.mxu0 0.0
    %1104 = vmatpush1.msra.mxu0 0.0
    %1105 = vmatprep.subr.mxu0 0.0
    %1106 = vmatpush1.msra.mxu0 0.0
    %1107 = vmatprep.subr.mxu0 0.0
    %1108 = vmatpush1.msra.mxu0 0.0
    %1109 = vmatprep.subr.mxu0 0.0
    %1110 = vmatpush1.msra.mxu0 0.0
    %1111 = vmatprep.subr.mxu0 0.0
    %1112 = vmatpush1.msra.mxu0 0.0
    %1113 = vmatprep.subr.mxu0 0.0
    %1114 = vmatpush1.msra.mxu0 0.0
    %1115 = vmatprep.mubr.f32.mxu0 0.0
    %1116 = vmatmul.mubr.f32.gmra.mrb[0].mxu0 %v1049
    %v1117 = vpop.f32.mrb[0].mxu0
    %v1118 = vadd.f32 0.0, %v1117
    %v1119 = vpop.f32.mrb[0].mxu0
    %1120 = vdwg.mxu0
    %v1121 = vadd.f32 %v1043, %v1118
    %v1122 = vxor.u32 %v1121, 2147483648
    %v1123 = vmul.f32 %v1122, 1.442695
    %v1124 = vpow.pop %v1123
    %v1125 = vadd.f32 %v1124, 1.0
    %v1126 = vrcp.pop %v1125
    %v1127 = vmul.f32 1.0, %v1126
    %v1128 = vadd.f32 %v1118, %v564
    %1130 = vrot.lane.b32.xlu0 %v1128, 64
    %v1131 = vpop.permute.xlu0 %1130
    %v1133 = vmul.f32 %v1127, %v1131
    %1135 = vrot.lane.b32.xlu0 %v1133, 64
    %v1136 = vpop.permute.xlu0 %1135
    %v1138 = vadd.f32 %v1043, %v1136
    %v1139 = vtanh.pop %v1138
    %v1140 = vsub.f32 1.0, %v1127
    %1142 = vrot.lane.b32.xlu0 %v1139, 96
    %v1143 = vpop.permute.xlu0 %1142
    %v1145 = vmul.f32 %v1140, %v1143
    %v1146 = vmul.f32 %v1127, %v866
    %v1147 = vadd.f32 %v1145, %v1146
    %v1149 = vrot.slane %v975, 6
    %1150 = vrot.lane.b32.xlu0 %v1149, 96
    %v1151 = vpop.permute.xlu0 %1150
    %v1152 = vsel %vm188, %v1151, 0
    %1154 = vmatprep.subr.mxu0 0.0
    %1155 = vmatpush1.msra.mxu0 %v82
    %1156 = vmatprep.subr.mxu0 0.0
    %1157 = vmatpush1.msra.mxu0 %v83
    %1158 = vmatprep.subr.mxu0 0.0
    %1159 = vmatpush1.msra.mxu0 %v84
    %1160 = vmatprep.subr.mxu0 0.0
    %1161 = vmatpush1.msra.mxu0 %v85
    %1162 = vmatprep.subr.mxu0 0.0
    %1163 = vmatpush1.msra.mxu0 0.0
    %1164 = vmatprep.subr.mxu0 0.0
    %1165 = vmatpush1.msra.mxu0 0.0
    %1166 = vmatprep.subr.mxu0 0.0
    %1167 = vmatpush1.msra.mxu0 0.0
    %1168 = vmatprep.subr.mxu0 0.0
    %1169 = vmatpush1.msra.mxu0 0.0
    %1170 = vmatprep.subr.mxu0 0.0
    %1171 = vmatpush1.msra.mxu0 0.0
    %1172 = vmatprep.subr.mxu0 0.0
    %1173 = vmatpush1.msra.mxu0 0.0
    %1174 = vmatprep.subr.mxu0 0.0
    %1175 = vmatpush1.msra.mxu0 0.0
    %1176 = vmatprep.subr.mxu0 0.0
    %1177 = vmatpush1.msra.mxu0 0.0
    %1178 = vmatprep.subr.mxu0 0.0
    %1179 = vmatpush1.msra.mxu0 0.0
    %1180 = vmatprep.subr.mxu0 0.0
    %1181 = vmatpush1.msra.mxu0 0.0
    %1182 = vmatprep.subr.mxu0 0.0
    %1183 = vmatpush1.msra.mxu0 0.0
    %1184 = vmatprep.subr.mxu0 0.0
    %1185 = vmatpush1.msra.mxu0 0.0
    %1186 = vmatprep.subr.mxu0 0.0
    %1187 = vmatpush1.msra.mxu0 0.0
    %1188 = vmatprep.subr.mxu0 0.0
    %1189 = vmatpush1.msra.mxu0 0.0
    %1190 = vmatprep.subr.mxu0 0.0
    %1191 = vmatpush1.msra.mxu0 0.0
    %1192 = vmatprep.subr.mxu0 0.0
    %1193 = vmatpush1.msra.mxu0 0.0
    %1194 = vmatprep.subr.mxu0 0.0
    %1195 = vmatpush1.msra.mxu0 0.0
    %1196 = vmatprep.subr.mxu0 0.0
    %1197 = vmatpush1.msra.mxu0 0.0
    %1198 = vmatprep.subr.mxu0 0.0
    %1199 = vmatpush1.msra.mxu0 0.0
    %1200 = vmatprep.subr.mxu0 0.0
    %1201 = vmatpush1.msra.mxu0 0.0
    %1202 = vmatprep.subr.mxu0 0.0
    %1203 = vmatpush1.msra.mxu0 0.0
    %1204 = vmatprep.subr.mxu0 0.0
    %1205 = vmatpush1.msra.mxu0 0.0
    %1206 = vmatprep.subr.mxu0 0.0
    %1207 = vmatpush1.msra.mxu0 0.0
    %1208 = vmatprep.subr.mxu0 0.0
    %1209 = vmatpush1.msra.mxu0 0.0
    %1210 = vmatprep.subr.mxu0 0.0
    %1211 = vmatpush1.msra.mxu0 0.0
    %1212 = vmatprep.subr.mxu0 0.0
    %1213 = vmatpush1.msra.mxu0 0.0
    %1214 = vmatprep.subr.mxu0 0.0
    %1215 = vmatpush1.msra.mxu0 0.0
    %1216 = vmatprep.subr.mxu0 0.0
    %1217 = vmatpush1.msra.mxu0 0.0
    %1218 = vmatprep.mubr.f32.mxu0 0.0
    %1219 = vmatmul.mubr.f32.gmra.mrb[0].mxu0 %v1152
    %v1220 = vpop.f32.mrb[0].mxu0
    %v1221 = vadd.f32 0.0, %v1220
    %v1222 = vpop.f32.mrb[0].mxu0
    %1223 = vdwg.mxu0
    %v1224 = vadd.f32 %v185, %v1221
    %v1225 = vxor.u32 %v1224, 2147483648
    %v1226 = vmul.f32 %v1225, 1.442695
    %v1227 = vpow.pop %v1226
    %v1228 = vadd.f32 %v1227, 1.0
    %v1229 = vrcp.pop %v1228
    %v1230 = vmul.f32 1.0, %v1229
    %v1231 = vadd.f32 %v1221, %v275
    %1233 = vrot.lane.b32.xlu0 %v1231, 64
    %v1234 = vpop.permute.xlu0 %1233
    %v1236 = vmul.f32 %v1230, %v1234
    %1238 = vrot.lane.b32.xlu0 %v1236, 64
    %v1239 = vpop.permute.xlu0 %1238
    %v1241 = vadd.f32 %v185, %v1239
    %v1242 = vtanh.pop %v1241
    %v1243 = vsub.f32 1.0, %v1230
    %1245 = vrot.lane.b32.xlu0 %v1242, 96
    %v1246 = vpop.permute.xlu0 %1245
    %v1248 = vmul.f32 %v1243, %v1246
    %v1250 = vmul.f32 %v1230, %v1149
    %v1251 = vadd.f32 %v1248, %v1250
    %1252 = vmatprep.subr.mxu0 0.0
    %1253 = vmatpush1.msra.mxu0 %v77
    %1254 = vmatprep.subr.mxu0 0.0
    %1255 = vmatpush1.msra.mxu0 %v78
    %1256 = vmatprep.subr.mxu0 0.0
    %1257 = vmatpush1.msra.mxu0 %v79
    %1258 = vmatprep.subr.mxu0 0.0
    %1259 = vmatpush1.msra.mxu0 %v80
    %1260 = vmatprep.subr.mxu0 0.0
    %1261 = vmatpush1.msra.mxu0 0.0
    %1262 = vmatprep.subr.mxu0 0.0
    %1263 = vmatpush1.msra.mxu0 0.0
    %1264 = vmatprep.subr.mxu0 0.0
    %1265 = vmatpush1.msra.mxu0 0.0
    %1266 = vmatprep.subr.mxu0 0.0
    %1267 = vmatpush1.msra.mxu0 0.0
    %1268 = vmatprep.subr.mxu0 0.0
    %1269 = vmatpush1.msra.mxu0 0.0
    %1270 = vmatprep.subr.mxu0 0.0
    %1271 = vmatpush1.msra.mxu0 0.0
    %1272 = vmatprep.subr.mxu0 0.0
    %1273 = vmatpush1.msra.mxu0 0.0
    %1274 = vmatprep.subr.mxu0 0.0
    %1275 = vmatpush1.msra.mxu0 0.0
    %1276 = vmatprep.subr.mxu0 0.0
    %1277 = vmatpush1.msra.mxu0 0.0
    %1278 = vmatprep.subr.mxu0 0.0
    %1279 = vmatpush1.msra.mxu0 0.0
    %1280 = vmatprep.subr.mxu0 0.0
    %1281 = vmatpush1.msra.mxu0 0.0
    %1282 = vmatprep.subr.mxu0 0.0
    %1283 = vmatpush1.msra.mxu0 0.0
    %1284 = vmatprep.subr.mxu0 0.0
    %1285 = vmatpush1.msra.mxu0 0.0
    %1286 = vmatprep.subr.mxu0 0.0
    %1287 = vmatpush1.msra.mxu0 0.0
    %1288 = vmatprep.subr.mxu0 0.0
    %1289 = vmatpush1.msra.mxu0 0.0
    %1290 = vmatprep.subr.mxu0 0.0
    %1291 = vmatpush1.msra.mxu0 0.0
    %1292 = vmatprep.subr.mxu0 0.0
    %1293 = vmatpush1.msra.mxu0 0.0
    %1294 = vmatprep.subr.mxu0 0.0
    %1295 = vmatpush1.msra.mxu0 0.0
    %1296 = vmatprep.subr.mxu0 0.0
    %1297 = vmatpush1.msra.mxu0 0.0
    %1298 = vmatprep.subr.mxu0 0.0
    %1299 = vmatpush1.msra.mxu0 0.0
    %1300 = vmatprep.subr.mxu0 0.0
    %1301 = vmatpush1.msra.mxu0 0.0
    %1302 = vmatprep.subr.mxu0 0.0
    %1303 = vmatpush1.msra.mxu0 0.0
    %1304 = vmatprep.subr.mxu0 0.0
    %1305 = vmatpush1.msra.mxu0 0.0
    %1306 = vmatprep.subr.mxu0 0.0
    %1307 = vmatpush1.msra.mxu0 0.0
    %1308 = vmatprep.subr.mxu0 0.0
    %1309 = vmatpush1.msra.mxu0 0.0
    %1310 = vmatprep.subr.mxu0 0.0
    %1311 = vmatpush1.msra.mxu0 0.0
    %1312 = vmatprep.subr.mxu0 0.0
    %1313 = vmatpush1.msra.mxu0 0.0
    %1314 = vmatprep.subr.mxu0 0.0
    %1315 = vmatpush1.msra.mxu0 0.0
    %1316 = vmatprep.mubr.f32.mxu0 0.0
    %1317 = vmatmul.mubr.f32.gmra.mrb[0].mxu0 %v1152
    %v1318 = vpop.f32.mrb[0].mxu0
    %v1319 = vadd.f32 %v409, %v1318
    %v1320 = vpop.f32.mrb[0].mxu0
    %1321 = vdwg.mxu0
    %1323 = vrot.lane.b32.xlu0 %v1147, 96
    %v1324 = vpop.permute.xlu0 %1323
    %v1325 = vsel %vm188, %v1324, 0
    %1327 = vmatprep.subr.mxu0 0.0
    %1328 = vmatpush1.msra.mxu0 %v86
    %1329 = vmatprep.subr.mxu0 0.0
    %1330 = vmatpush1.msra.mxu0 %v87
    %1331 = vmatprep.subr.mxu0 0.0
    %1332 = vmatpush1.msra.mxu0 %v88
    %1333 = vmatprep.subr.mxu0 0.0
    %1334 = vmatpush1.msra.mxu0 %v89
    %1335 = vmatprep.subr.mxu0 0.0
    %1336 = vmatpush1.msra.mxu0 0.0
    %1337 = vmatprep.subr.mxu0 0.0
    %1338 = vmatpush1.msra.mxu0 0.0
    %1339 = vmatprep.subr.mxu0 0.0
    %1340 = vmatpush1.msra.mxu0 0.0
    %1341 = vmatprep.subr.mxu0 0.0
    %1342 = vmatpush1.msra.mxu0 0.0
    %1343 = vmatprep.subr.mxu0 0.0
    %1344 = vmatpush1.msra.mxu0 0.0
    %1345 = vmatprep.subr.mxu0 0.0
    %1346 = vmatpush1.msra.mxu0 0.0
    %1347 = vmatprep.subr.mxu0 0.0
    %1348 = vmatpush1.msra.mxu0 0.0
    %1349 = vmatprep.subr.mxu0 0.0
    %1350 = vmatpush1.msra.mxu0 0.0
    %1351 = vmatprep.subr.mxu0 0.0
    %1352 = vmatpush1.msra.mxu0 0.0
    %1353 = vmatprep.subr.mxu0 0.0
    %1354 = vmatpush1.msra.mxu0 0.0
    %1355 = vmatprep.subr.mxu0 0.0
    %1356 = vmatpush1.msra.mxu0 0.0
    %1357 = vmatprep.subr.mxu0 0.0
    %1358 = vmatpush1.msra.mxu0 0.0
    %1359 = vmatprep.subr.mxu0 0.0
    %1360 = vmatpush1.msra.mxu0 0.0
    %1361 = vmatprep.subr.mxu0 0.0
    %1362 = vmatpush1.msra.mxu0 0.0
    %1363 = vmatprep.subr.mxu0 0.0
    %1364 = vmatpush1.msra.mxu0 0.0
    %1365 = vmatprep.subr.mxu0 0.0
    %1366 = vmatpush1.msra.mxu0 0.0
    %1367 = vmatprep.subr.mxu0 0.0
    %1368 = vmatpush1.msra.mxu0 0.0
    %1369 = vmatprep.subr.mxu0 0.0
    %1370 = vmatpush1.msra.mxu0 0.0
    %1371 = vmatprep.subr.mxu0 0.0
    %1372 = vmatpush1.msra.mxu0 0.0
    %1373 = vmatprep.subr.mxu0 0.0
    %1374 = vmatpush1.msra.mxu0 0.0
    %1375 = vmatprep.subr.mxu0 0.0
    %1376 = vmatpush1.msra.mxu0 0.0
    %1377 = vmatprep.subr.mxu0 0.0
    %1378 = vmatpush1.msra.mxu0 0.0
    %1379 = vmatprep.subr.mxu0 0.0
    %1380 = vmatpush1.msra.mxu0 0.0
    %1381 = vmatprep.subr.mxu0 0.0
    %1382 = vmatpush1.msra.mxu0 0.0
    %1383 = vmatprep.subr.mxu0 0.0
    %1384 = vmatpush1.msra.mxu0 0.0
    %1385 = vmatprep.subr.mxu0 0.0
    %1386 = vmatpush1.msra.mxu0 0.0
    %1387 = vmatprep.subr.mxu0 0.0
    %1388 = vmatpush1.msra.mxu0 0.0
    %1389 = vmatprep.subr.mxu0 0.0
    %1390 = vmatpush1.msra.mxu0 0.0
    %1391 = vmatprep.mubr.f32.mxu0 0.0
    %1392 = vmatmul.mubr.f32.gmra.mrb[0].mxu0 %v1325
    %v1393 = vpop.f32.mrb[0].mxu0
    %v1394 = vadd.f32 0.0, %v1393
    %v1395 = vpop.f32.mrb[0].mxu0
    %1396 = vdwg.mxu0
    %v1397 = vadd.f32 %v1319, %v1394
    %v1398 = vxor.u32 %v1397, 2147483648
    %v1399 = vmul.f32 %v1398, 1.442695
    %v1400 = vpow.pop %v1399
    %v1401 = vadd.f32 %v1400, 1.0
    %v1402 = vrcp.pop %v1401
    %v1403 = vmul.f32 1.0, %v1402
    %v1404 = vadd.f32 %v1394, %v564
    %1406 = vrot.lane.b32.xlu0 %v1404, 64
    %v1407 = vpop.permute.xlu0 %1406
    %v1409 = vmul.f32 %v1403, %v1407
    %1411 = vrot.lane.b32.xlu0 %v1409, 64
    %v1412 = vpop.permute.xlu0 %1411
    %v1414 = vadd.f32 %v1319, %v1412
    %v1415 = vtanh.pop %v1414
    %v1416 = vsub.f32 1.0, %v1403
    %1418 = vrot.lane.b32.xlu0 %v1415, 96
    %v1419 = vpop.permute.xlu0 %1418
    %v1421 = vmul.f32 %v1416, %v1419
    %v1422 = vmul.f32 %v1403, %v1147
    %v1423 = vadd.f32 %v1421, %v1422
    %1425 = vrot.lane.b32.xlu0 %v1251, 96
    %v1426 = vpop.permute.xlu0 %1425
    %v1427 = vsel %vm188, %v1426, 0
    %1429 = vmatprep.subr.mxu0 0.0
    %1430 = vmatpush1.msra.mxu0 %v82
    %1431 = vmatprep.subr.mxu0 0.0
    %1432 = vmatpush1.msra.mxu0 %v83
    %1433 = vmatprep.subr.mxu0 0.0
    %1434 = vmatpush1.msra.mxu0 %v84
    %1435 = vmatprep.subr.mxu0 0.0
    %1436 = vmatpush1.msra.mxu0 %v85
    %1437 = vmatprep.subr.mxu0 0.0
    %1438 = vmatpush1.msra.mxu0 0.0
    %1439 = vmatprep.subr.mxu0 0.0
    %1440 = vmatpush1.msra.mxu0 0.0
    %1441 = vmatprep.subr.mxu0 0.0
    %1442 = vmatpush1.msra.mxu0 0.0
    %1443 = vmatprep.subr.mxu0 0.0
    %1444 = vmatpush1.msra.mxu0 0.0
    %1445 = vmatprep.subr.mxu0 0.0
    %1446 = vmatpush1.msra.mxu0 0.0
    %1447 = vmatprep.subr.mxu0 0.0
    %1448 = vmatpush1.msra.mxu0 0.0
    %1449 = vmatprep.subr.mxu0 0.0
    %1450 = vmatpush1.msra.mxu0 0.0
    %1451 = vmatprep.subr.mxu0 0.0
    %1452 = vmatpush1.msra.mxu0 0.0
    %1453 = vmatprep.subr.mxu0 0.0
    %1454 = vmatpush1.msra.mxu0 0.0
    %1455 = vmatprep.subr.mxu0 0.0
    %1456 = vmatpush1.msra.mxu0 0.0
    %1457 = vmatprep.subr.mxu0 0.0
    %1458 = vmatpush1.msra.mxu0 0.0
    %1459 = vmatprep.subr.mxu0 0.0
    %1460 = vmatpush1.msra.mxu0 0.0
    %1461 = vmatprep.subr.mxu0 0.0
    %1462 = vmatpush1.msra.mxu0 0.0
    %1463 = vmatprep.subr.mxu0 0.0
    %1464 = vmatpush1.msra.mxu0 0.0
    %1465 = vmatprep.subr.mxu0 0.0
    %1466 = vmatpush1.msra.mxu0 0.0
    %1467 = vmatprep.subr.mxu0 0.0
    %1468 = vmatpush1.msra.mxu0 0.0
    %1469 = vmatprep.subr.mxu0 0.0
    %1470 = vmatpush1.msra.mxu0 0.0
    %1471 = vmatprep.subr.mxu0 0.0
    %1472 = vmatpush1.msra.mxu0 0.0
    %1473 = vmatprep.subr.mxu0 0.0
    %1474 = vmatpush1.msra.mxu0 0.0
    %1475 = vmatprep.subr.mxu0 0.0
    %1476 = vmatpush1.msra.mxu0 0.0
    %1477 = vmatprep.subr.mxu0 0.0
    %1478 = vmatpush1.msra.mxu0 0.0
    %1479 = vmatprep.subr.mxu0 0.0
    %1480 = vmatpush1.msra.mxu0 0.0
    %1481 = vmatprep.subr.mxu0 0.0
    %1482 = vmatpush1.msra.mxu0 0.0
    %1483 = vmatprep.subr.mxu0 0.0
    %1484 = vmatpush1.msra.mxu0 0.0
    %1485 = vmatprep.subr.mxu0 0.0
    %1486 = vmatpush1.msra.mxu0 0.0
    %1487 = vmatprep.subr.mxu0 0.0
    %1488 = vmatpush1.msra.mxu0 0.0
    %1489 = vmatprep.subr.mxu0 0.0
    %1490 = vmatpush1.msra.mxu0 0.0
    %1491 = vmatprep.subr.mxu0 0.0
    %1492 = vmatpush1.msra.mxu0 0.0
    %1493 = vmatprep.mubr.f32.mxu0 0.0
    %1494 = vmatmul.mubr.f32.gmra.mrb[0].mxu0 %v1427
    %v1495 = vpop.f32.mrb[0].mxu0
    %v1496 = vadd.f32 0.0, %v1495
    %v1497 = vpop.f32.mrb[0].mxu0
    %1498 = vdwg.mxu0
    %v1500 = vrot.slane %v1496, 6
    %v1502 = vadd.f32 %v185, %v1500
    %v1503 = vxor.u32 %v1502, 2147483648
    %v1504 = vmul.f32 %v1503, 1.442695
    %v1505 = vpow.pop %v1504
    %v1506 = vadd.f32 %v1505, 1.0
    %v1507 = vrcp.pop %v1506
    %v1508 = vmul.f32 1.0, %v1507
    %v1509 = vadd.f32 %v1496, %v275
    %v1511 = vrot.slane %v1509, 6
    %1512 = vrot.lane.b32.xlu0 %v1511, 64
    %v1513 = vpop.permute.xlu0 %1512
    %v1515 = vmul.f32 %v1508, %v1513
    %1517 = vrot.lane.b32.xlu0 %v1515, 64
    %v1518 = vpop.permute.xlu0 %1517
    %v1520 = vadd.f32 %v185, %v1518
    %v1521 = vtanh.pop %v1520
    %v1522 = vsub.f32 1.0, %v1508
    %1524 = vrot.lane.b32.xlu0 %v1521, 96
    %v1525 = vpop.permute.xlu0 %1524
    %v1527 = vmul.f32 %v1522, %v1525
    %v1528 = vrot.slane %v1251, 6
    %v1530 = vmul.f32 %v1508, %v1528
    %v1531 = vadd.f32 %v1527, %v1530
    %1532 = vmatprep.subr.mxu0 0.0
    %1533 = vmatpush1.msra.mxu0 %v77
    %1534 = vmatprep.subr.mxu0 0.0
    %1535 = vmatpush1.msra.mxu0 %v78
    %1536 = vmatprep.subr.mxu0 0.0
    %1537 = vmatpush1.msra.mxu0 %v79
    %1538 = vmatprep.subr.mxu0 0.0
    %1539 = vmatpush1.msra.mxu0 %v80
    %1540 = vmatprep.subr.mxu0 0.0
    %1541 = vmatpush1.msra.mxu0 0.0
    %1542 = vmatprep.subr.mxu0 0.0
    %1543 = vmatpush1.msra.mxu0 0.0
    %1544 = vmatprep.subr.mxu0 0.0
    %1545 = vmatpush1.msra.mxu0 0.0
    %1546 = vmatprep.subr.mxu0 0.0
    %1547 = vmatpush1.msra.mxu0 0.0
    %1548 = vmatprep.subr.mxu0 0.0
    %1549 = vmatpush1.msra.mxu0 0.0
    %1550 = vmatprep.subr.mxu0 0.0
    %1551 = vmatpush1.msra.mxu0 0.0
    %1552 = vmatprep.subr.mxu0 0.0
    %1553 = vmatpush1.msra.mxu0 0.0
    %1554 = vmatprep.subr.mxu0 0.0
    %1555 = vmatpush1.msra.mxu0 0.0
    %1556 = vmatprep.subr.mxu0 0.0
    %1557 = vmatpush1.msra.mxu0 0.0
    %1558 = vmatprep.subr.mxu0 0.0
    %1559 = vmatpush1.msra.mxu0 0.0
    %1560 = vmatprep.subr.mxu0 0.0
    %1561 = vmatpush1.msra.mxu0 0.0
    %1562 = vmatprep.subr.mxu0 0.0
    %1563 = vmatpush1.msra.mxu0 0.0
    %1564 = vmatprep.subr.mxu0 0.0
    %1565 = vmatpush1.msra.mxu0 0.0
    %1566 = vmatprep.subr.mxu0 0.0
    %1567 = vmatpush1.msra.mxu0 0.0
    %1568 = vmatprep.subr.mxu0 0.0
    %1569 = vmatpush1.msra.mxu0 0.0
    %1570 = vmatprep.subr.mxu0 0.0
    %1571 = vmatpush1.msra.mxu0 0.0
    %1572 = vmatprep.subr.mxu0 0.0
    %1573 = vmatpush1.msra.mxu0 0.0
    %1574 = vmatprep.subr.mxu0 0.0
    %1575 = vmatpush1.msra.mxu0 0.0
    %1576 = vmatprep.subr.mxu0 0.0
    %1577 = vmatpush1.msra.mxu0 0.0
    %1578 = vmatprep.subr.mxu0 0.0
    %1579 = vmatpush1.msra.mxu0 0.0
    %1580 = vmatprep.subr.mxu0 0.0
    %1581 = vmatpush1.msra.mxu0 0.0
    %1582 = vmatprep.subr.mxu0 0.0
    %1583 = vmatpush1.msra.mxu0 0.0
    %1584 = vmatprep.subr.mxu0 0.0
    %1585 = vmatpush1.msra.mxu0 0.0
    %1586 = vmatprep.subr.mxu0 0.0
    %1587 = vmatpush1.msra.mxu0 0.0
    %1588 = vmatprep.subr.mxu0 0.0
    %1589 = vmatpush1.msra.mxu0 0.0
    %1590 = vmatprep.subr.mxu0 0.0
    %1591 = vmatpush1.msra.mxu0 0.0
    %1592 = vmatprep.subr.mxu0 0.0
    %1593 = vmatpush1.msra.mxu0 0.0
    %1594 = vmatprep.subr.mxu0 0.0
    %1595 = vmatpush1.msra.mxu0 0.0
    %1596 = vmatprep.mubr.f32.mxu0 0.0
    %1597 = vmatmul.mubr.f32.gmra.mrb[0].mxu0 %v1427
    %v1598 = vpop.f32.mrb[0].mxu0
    %v1599 = vadd.f32 %v409, %v1598
    %v1600 = vpop.f32.mrb[0].mxu0
    %1601 = vdwg.mxu0
    %1603 = vrot.lane.b32.xlu0 %v1423, 96
    %v1604 = vpop.permute.xlu0 %1603
    %v1605 = vsel %vm188, %v1604, 0
    %1607 = vmatprep.subr.mxu0 0.0
    %1608 = vmatpush1.msra.mxu0 %v86
    %1609 = vmatprep.subr.mxu0 0.0
    %1610 = vmatpush1.msra.mxu0 %v87
    %1611 = vmatprep.subr.mxu0 0.0
    %1612 = vmatpush1.msra.mxu0 %v88
    %1613 = vmatprep.subr.mxu0 0.0
    %1614 = vmatpush1.msra.mxu0 %v89
    %1615 = vmatprep.subr.mxu0 0.0
    %1616 = vmatpush1.msra.mxu0 0.0
    %1617 = vmatprep.subr.mxu0 0.0
    %1618 = vmatpush1.msra.mxu0 0.0
    %1619 = vmatprep.subr.mxu0 0.0
    %1620 = vmatpush1.msra.mxu0 0.0
    %1621 = vmatprep.subr.mxu0 0.0
    %1622 = vmatpush1.msra.mxu0 0.0
    %1623 = vmatprep.subr.mxu0 0.0
    %1624 = vmatpush1.msra.mxu0 0.0
    %1625 = vmatprep.subr.mxu0 0.0
    %1626 = vmatpush1.msra.mxu0 0.0
    %1627 = vmatprep.subr.mxu0 0.0
    %1628 = vmatpush1.msra.mxu0 0.0
    %1629 = vmatprep.subr.mxu0 0.0
    %1630 = vmatpush1.msra.mxu0 0.0
    %1631 = vmatprep.subr.mxu0 0.0
    %1632 = vmatpush1.msra.mxu0 0.0
    %1633 = vmatprep.subr.mxu0 0.0
    %1634 = vmatpush1.msra.mxu0 0.0
    %1635 = vmatprep.subr.mxu0 0.0
    %1636 = vmatpush1.msra.mxu0 0.0
    %1637 = vmatprep.subr.mxu0 0.0
    %1638 = vmatpush1.msra.mxu0 0.0
    %1639 = vmatprep.subr.mxu0 0.0
    %1640 = vmatpush1.msra.mxu0 0.0
    %1641 = vmatprep.subr.mxu0 0.0
    %1642 = vmatpush1.msra.mxu0 0.0
    %1643 = vmatprep.subr.mxu0 0.0
    %1644 = vmatpush1.msra.mxu0 0.0
    %1645 = vmatprep.subr.mxu0 0.0
    %1646 = vmatpush1.msra.mxu0 0.0
    %1647 = vmatprep.subr.mxu0 0.0
    %1648 = vmatpush1.msra.mxu0 0.0
    %1649 = vmatprep.subr.mxu0 0.0
    %1650 = vmatpush1.msra.mxu0 0.0
    %1651 = vmatprep.subr.mxu0 0.0
    %1652 = vmatpush1.msra.mxu0 0.0
    %1653 = vmatprep.subr.mxu0 0.0
    %1654 = vmatpush1.msra.mxu0 0.0
    %1655 = vmatprep.subr.mxu0 0.0
    %1656 = vmatpush1.msra.mxu0 0.0
    %1657 = vmatprep.subr.mxu0 0.0
    %1658 = vmatpush1.msra.mxu0 0.0
    %1659 = vmatprep.subr.mxu0 0.0
    %1660 = vmatpush1.msra.mxu0 0.0
    %1661 = vmatprep.subr.mxu0 0.0
    %1662 = vmatpush1.msra.mxu0 0.0
    %1663 = vmatprep.subr.mxu0 0.0
    %1664 = vmatpush1.msra.mxu0 0.0
    %1665 = vmatprep.subr.mxu0 0.0
    %1666 = vmatpush1.msra.mxu0 0.0
    %1667 = vmatprep.subr.mxu0 0.0
    %1668 = vmatpush1.msra.mxu0 0.0
    %1669 = vmatprep.subr.mxu0 0.0
    %1670 = vmatpush1.msra.mxu0 0.0
    %1671 = vmatprep.mubr.f32.mxu0 0.0
    %1672 = vmatmul.mubr.f32.gmra.mrb[0].mxu0 %v1605
    %v1673 = vpop.f32.mrb[0].mxu0
    %v1674 = vadd.f32 0.0, %v1673
    %v1675 = vpop.f32.mrb[0].mxu0
    %1676 = vdwg.mxu0
    %v1677 = vadd.f32 %v1599, %v1674
    %v1678 = vxor.u32 %v1677, 2147483648
    %v1679 = vmul.f32 %v1678, 1.442695
    %v1680 = vpow.pop %v1679
    %v1681 = vadd.f32 %v1680, 1.0
    %v1682 = vrcp.pop %v1681
    %v1683 = vmul.f32 1.0, %v1682
    %v1684 = vadd.f32 %v1674, %v564
    %1686 = vrot.lane.b32.xlu0 %v1684, 64
    %v1687 = vpop.permute.xlu0 %1686
    %v1689 = vmul.f32 %v1683, %v1687
    %1691 = vrot.lane.b32.xlu0 %v1689, 64
    %v1692 = vpop.permute.xlu0 %1691
    %v1694 = vadd.f32 %v1599, %v1692
    %v1695 = vtanh.pop %v1694
    %v1696 = vsub.f32 1.0, %v1683
    %1698 = vrot.lane.b32.xlu0 %v1695, 96
    %v1699 = vpop.permute.xlu0 %1698
    %v1701 = vmul.f32 %v1696, %v1699
    %v1702 = vmul.f32 %v1683, %v1423
    %v1703 = vadd.f32 %v1701, %v1702
    %v1705 = vrot.slane %v1531, 2
    %1706 = vrot.lane.b32.xlu0 %v1705, 96
    %v1707 = vpop.permute.xlu0 %1706
    %v1708 = vsel %vm188, %v1707, 0
    %1710 = vmatprep.subr.mxu0 0.0
    %1711 = vmatpush1.msra.mxu0 %v82
    %1712 = vmatprep.subr.mxu0 0.0
    %1713 = vmatpush1.msra.mxu0 %v83
    %1714 = vmatprep.subr.mxu0 0.0
    %1715 = vmatpush1.msra.mxu0 %v84
    %1716 = vmatprep.subr.mxu0 0.0
    %1717 = vmatpush1.msra.mxu0 %v85
    %1718 = vmatprep.subr.mxu0 0.0
    %1719 = vmatpush1.msra.mxu0 0.0
    %1720 = vmatprep.subr.mxu0 0.0
    %1721 = vmatpush1.msra.mxu0 0.0
    %1722 = vmatprep.subr.mxu0 0.0
    %1723 = vmatpush1.msra.mxu0 0.0
    %1724 = vmatprep.subr.mxu0 0.0
    %1725 = vmatpush1.msra.mxu0 0.0
    %1726 = vmatprep.subr.mxu0 0.0
    %1727 = vmatpush1.msra.mxu0 0.0
    %1728 = vmatprep.subr.mxu0 0.0
    %1729 = vmatpush1.msra.mxu0 0.0
    %1730 = vmatprep.subr.mxu0 0.0
    %1731 = vmatpush1.msra.mxu0 0.0
    %1732 = vmatprep.subr.mxu0 0.0
    %1733 = vmatpush1.msra.mxu0 0.0
    %1734 = vmatprep.subr.mxu0 0.0
    %1735 = vmatpush1.msra.mxu0 0.0
    %1736 = vmatprep.subr.mxu0 0.0
    %1737 = vmatpush1.msra.mxu0 0.0
    %1738 = vmatprep.subr.mxu0 0.0
    %1739 = vmatpush1.msra.mxu0 0.0
    %1740 = vmatprep.subr.mxu0 0.0
    %1741 = vmatpush1.msra.mxu0 0.0
    %1742 = vmatprep.subr.mxu0 0.0
    %1743 = vmatpush1.msra.mxu0 0.0
    %1744 = vmatprep.subr.mxu0 0.0
    %1745 = vmatpush1.msra.mxu0 0.0
    %1746 = vmatprep.subr.mxu0 0.0
    %1747 = vmatpush1.msra.mxu0 0.0
    %1748 = vmatprep.subr.mxu0 0.0
    %1749 = vmatpush1.msra.mxu0 0.0
    %1750 = vmatprep.subr.mxu0 0.0
    %1751 = vmatpush1.msra.mxu0 0.0
    %1752 = vmatprep.subr.mxu0 0.0
    %1753 = vmatpush1.msra.mxu0 0.0
    %1754 = vmatprep.subr.mxu0 0.0
    %1755 = vmatpush1.msra.mxu0 0.0
    %1756 = vmatprep.subr.mxu0 0.0
    %1757 = vmatpush1.msra.mxu0 0.0
    %1758 = vmatprep.subr.mxu0 0.0
    %1759 = vmatpush1.msra.mxu0 0.0
    %1760 = vmatprep.subr.mxu0 0.0
    %1761 = vmatpush1.msra.mxu0 0.0
    %1762 = vmatprep.subr.mxu0 0.0
    %1763 = vmatpush1.msra.mxu0 0.0
    %1764 = vmatprep.subr.mxu0 0.0
    %1765 = vmatpush1.msra.mxu0 0.0
    %1766 = vmatprep.subr.mxu0 0.0
    %1767 = vmatpush1.msra.mxu0 0.0
    %1768 = vmatprep.subr.mxu0 0.0
    %1769 = vmatpush1.msra.mxu0 0.0
    %1770 = vmatprep.subr.mxu0 0.0
    %1771 = vmatpush1.msra.mxu0 0.0
    %1772 = vmatprep.subr.mxu0 0.0
    %1773 = vmatpush1.msra.mxu0 0.0
    %1774 = vmatprep.mubr.f32.mxu0 0.0
    %1775 = vmatmul.mubr.f32.gmra.mrb[0].mxu0 %v1708
    %v1776 = vpop.f32.mrb[0].mxu0
    %v1777 = vadd.f32 0.0, %v1776
    %v1778 = vpop.f32.mrb[0].mxu0
    %1779 = vdwg.mxu0
    %v1781 = vrot.slane %v1777, 4
    %v1783 = vadd.f32 %v185, %v1781
    %v1784 = vxor.u32 %v1783, 2147483648
    %v1785 = vmul.f32 %v1784, 1.442695
    %v1786 = vpow.pop %v1785
    %v1787 = vadd.f32 %v1786, 1.0
    %v1788 = vrcp.pop %v1787
    %v1789 = vmul.f32 1.0, %v1788
    %v1790 = vadd.f32 %v1777, %v275
    %v1792 = vrot.slane %v1790, 4
    %1793 = vrot.lane.b32.xlu0 %v1792, 64
    %v1794 = vpop.permute.xlu0 %1793
    %v1796 = vmul.f32 %v1789, %v1794
    %1798 = vrot.lane.b32.xlu0 %v1796, 64
    %v1799 = vpop.permute.xlu0 %1798
    %v1801 = vadd.f32 %v185, %v1799
    %v1802 = vtanh.pop %v1801
    %v1803 = vsub.f32 1.0, %v1789
    %1805 = vrot.lane.b32.xlu0 %v1802, 96
    %v1806 = vpop.permute.xlu0 %1805
    %v1808 = vmul.f32 %v1803, %v1806
    %v1809 = vrot.slane %v1531, 6
    %v1811 = vmul.f32 %v1789, %v1809
    %v1812 = vadd.f32 %v1808, %v1811
    %1813 = vmatprep.subr.mxu0 0.0
    %1814 = vmatpush1.msra.mxu0 %v77
    %1815 = vmatprep.subr.mxu0 0.0
    %1816 = vmatpush1.msra.mxu0 %v78
    %1817 = vmatprep.subr.mxu0 0.0
    %1818 = vmatpush1.msra.mxu0 %v79
    %1819 = vmatprep.subr.mxu0 0.0
    %1820 = vmatpush1.msra.mxu0 %v80
    %1821 = vmatprep.subr.mxu0 0.0
    %1822 = vmatpush1.msra.mxu0 0.0
    %1823 = vmatprep.subr.mxu0 0.0
    %1824 = vmatpush1.msra.mxu0 0.0
    %1825 = vmatprep.subr.mxu0 0.0
    %1826 = vmatpush1.msra.mxu0 0.0
    %1827 = vmatprep.subr.mxu0 0.0
    %1828 = vmatpush1.msra.mxu0 0.0
    %1829 = vmatprep.subr.mxu0 0.0
    %1830 = vmatpush1.msra.mxu0 0.0
    %1831 = vmatprep.subr.mxu0 0.0
    %1832 = vmatpush1.msra.mxu0 0.0
    %1833 = vmatprep.subr.mxu0 0.0
    %1834 = vmatpush1.msra.mxu0 0.0
    %1835 = vmatprep.subr.mxu0 0.0
    %1836 = vmatpush1.msra.mxu0 0.0
    %1837 = vmatprep.subr.mxu0 0.0
    %1838 = vmatpush1.msra.mxu0 0.0
    %1839 = vmatprep.subr.mxu0 0.0
    %1840 = vmatpush1.msra.mxu0 0.0
    %1841 = vmatprep.subr.mxu0 0.0
    %1842 = vmatpush1.msra.mxu0 0.0
    %1843 = vmatprep.subr.mxu0 0.0
    %1844 = vmatpush1.msra.mxu0 0.0
    %1845 = vmatprep.subr.mxu0 0.0
    %1846 = vmatpush1.msra.mxu0 0.0
    %1847 = vmatprep.subr.mxu0 0.0
    %1848 = vmatpush1.msra.mxu0 0.0
    %1849 = vmatprep.subr.mxu0 0.0
    %1850 = vmatpush1.msra.mxu0 0.0
    %1851 = vmatprep.subr.mxu0 0.0
    %1852 = vmatpush1.msra.mxu0 0.0
    %1853 = vmatprep.subr.mxu0 0.0
    %1854 = vmatpush1.msra.mxu0 0.0
    %1855 = vmatprep.subr.mxu0 0.0
    %1856 = vmatpush1.msra.mxu0 0.0
    %1857 = vmatprep.subr.mxu0 0.0
    %1858 = vmatpush1.msra.mxu0 0.0
    %1859 = vmatprep.subr.mxu0 0.0
    %1860 = vmatpush1.msra.mxu0 0.0
    %1861 = vmatprep.subr.mxu0 0.0
    %1862 = vmatpush1.msra.mxu0 0.0
    %1863 = vmatprep.subr.mxu0 0.0
    %1864 = vmatpush1.msra.mxu0 0.0
    %1865 = vmatprep.subr.mxu0 0.0
    %1866 = vmatpush1.msra.mxu0 0.0
    %1867 = vmatprep.subr.mxu0 0.0
    %1868 = vmatpush1.msra.mxu0 0.0
    %1869 = vmatprep.subr.mxu0 0.0
    %1870 = vmatpush1.msra.mxu0 0.0
    %1871 = vmatprep.subr.mxu0 0.0
    %1872 = vmatpush1.msra.mxu0 0.0
    %1873 = vmatprep.subr.mxu0 0.0
    %1874 = vmatpush1.msra.mxu0 0.0
    %1875 = vmatprep.subr.mxu0 0.0
    %1876 = vmatpush1.msra.mxu0 0.0
    %1877 = vmatprep.mubr.f32.mxu0 0.0
    %1878 = vmatmul.mubr.f32.gmra.mrb[0].mxu0 %v1708
    %v1879 = vpop.f32.mrb[0].mxu0
    %v1880 = vadd.f32 %v409, %v1879
    %v1881 = vpop.f32.mrb[0].mxu0
    %1882 = vdwg.mxu0
    %1884 = vrot.lane.b32.xlu0 %v1703, 96
    %v1885 = vpop.permute.xlu0 %1884
    %v1886 = vsel %vm188, %v1885, 0
    %1888 = vmatprep.subr.mxu0 0.0
    %1889 = vmatpush1.msra.mxu0 %v86
    %1890 = vmatprep.subr.mxu0 0.0
    %1891 = vmatpush1.msra.mxu0 %v87
    %1892 = vmatprep.subr.mxu0 0.0
    %1893 = vmatpush1.msra.mxu0 %v88
    %1894 = vmatprep.subr.mxu0 0.0
    %1895 = vmatpush1.msra.mxu0 %v89
    %1896 = vmatprep.subr.mxu0 0.0
    %1897 = vmatpush1.msra.mxu0 0.0
    %1898 = vmatprep.subr.mxu0 0.0
    %1899 = vmatpush1.msra.mxu0 0.0
    %1900 = vmatprep.subr.mxu0 0.0
    %1901 = vmatpush1.msra.mxu0 0.0
    %1902 = vmatprep.subr.mxu0 0.0
    %1903 = vmatpush1.msra.mxu0 0.0
    %1904 = vmatprep.subr.mxu0 0.0
    %1905 = vmatpush1.msra.mxu0 0.0
    %1906 = vmatprep.subr.mxu0 0.0
    %1907 = vmatpush1.msra.mxu0 0.0
    %1908 = vmatprep.subr.mxu0 0.0
    %1909 = vmatpush1.msra.mxu0 0.0
    %1910 = vmatprep.subr.mxu0 0.0
    %1911 = vmatpush1.msra.mxu0 0.0
    %1912 = vmatprep.subr.mxu0 0.0
    %1913 = vmatpush1.msra.mxu0 0.0
    %1914 = vmatprep.subr.mxu0 0.0
    %1915 = vmatpush1.msra.mxu0 0.0
    %1916 = vmatprep.subr.mxu0 0.0
    %1917 = vmatpush1.msra.mxu0 0.0
    %1918 = vmatprep.subr.mxu0 0.0
    %1919 = vmatpush1.msra.mxu0 0.0
    %1920 = vmatprep.subr.mxu0 0.0
    %1921 = vmatpush1.msra.mxu0 0.0
    %1922 = vmatprep.subr.mxu0 0.0
    %1923 = vmatpush1.msra.mxu0 0.0
    %1924 = vmatprep.subr.mxu0 0.0
    %1925 = vmatpush1.msra.mxu0 0.0
    %1926 = vmatprep.subr.mxu0 0.0
    %1927 = vmatpush1.msra.mxu0 0.0
    %1928 = vmatprep.subr.mxu0 0.0
    %1929 = vmatpush1.msra.mxu0 0.0
    %1930 = vmatprep.subr.mxu0 0.0
    %1931 = vmatpush1.msra.mxu0 0.0
    %1932 = vmatprep.subr.mxu0 0.0
    %1933 = vmatpush1.msra.mxu0 0.0
    %1934 = vmatprep.subr.mxu0 0.0
    %1935 = vmatpush1.msra.mxu0 0.0
    %1936 = vmatprep.subr.mxu0 0.0
    %1937 = vmatpush1.msra.mxu0 0.0
    %1938 = vmatprep.subr.mxu0 0.0
    %1939 = vmatpush1.msra.mxu0 0.0
    %1940 = vmatprep.subr.mxu0 0.0
    %1941 = vmatpush1.msra.mxu0 0.0
    %1942 = vmatprep.subr.mxu0 0.0
    %1943 = vmatpush1.msra.mxu0 0.0
    %1944 = vmatprep.subr.mxu0 0.0
    %1945 = vmatpush1.msra.mxu0 0.0
    %1946 = vmatprep.subr.mxu0 0.0
    %1947 = vmatpush1.msra.mxu0 0.0
    %1948 = vmatprep.subr.mxu0 0.0
    %1949 = vmatpush1.msra.mxu0 0.0
    %1950 = vmatprep.subr.mxu0 0.0
    %1951 = vmatpush1.msra.mxu0 0.0
    %1952 = vmatprep.mubr.f32.mxu0 0.0
    %1953 = vmatmul.mubr.f32.gmra.mrb[0].mxu0 %v1886
    %v1954 = vpop.f32.mrb[0].mxu0
    %v1955 = vadd.f32 0.0, %v1954
    %v1956 = vpop.f32.mrb[0].mxu0
    %1957 = vdwg.mxu0
    %v1958 = vadd.f32 %v1880, %v1955
    %v1959 = vxor.u32 %v1958, 2147483648
    %v1960 = vmul.f32 %v1959, 1.442695
    %v1961 = vpow.pop %v1960
    %v1962 = vadd.f32 %v1961, 1.0
    %v1963 = vrcp.pop %v1962
    %v1964 = vmul.f32 1.0, %v1963
    %v1965 = vadd.f32 %v1955, %v564
    %1967 = vrot.lane.b32.xlu0 %v1965, 64
    %v1968 = vpop.permute.xlu0 %1967
    %v1970 = vmul.f32 %v1964, %v1968
    %1972 = vrot.lane.b32.xlu0 %v1970, 64
    %v1973 = vpop.permute.xlu0 %1972
    %v1975 = vadd.f32 %v1880, %v1973
    %v1976 = vtanh.pop %v1975
    %v1977 = vsub.f32 1.0, %v1964
    %1979 = vrot.lane.b32.xlu0 %v1976, 96
    %v1980 = vpop.permute.xlu0 %1979
    %v1982 = vmul.f32 %v1977, %v1980
    %v1983 = vmul.f32 %v1964, %v1703
    %v1984 = vadd.f32 %v1982, %v1983
    %v1986 = vrot.slane %v1812, 4
    %1987 = vrot.lane.b32.xlu0 %v1986, 96
    %v1988 = vpop.permute.xlu0 %1987
    %v1989 = vsel %vm188, %v1988, 0
    %1991 = vmatprep.subr.mxu0 0.0
    %1992 = vmatpush1.msra.mxu0 %v82
    %1993 = vmatprep.subr.mxu0 0.0
    %1994 = vmatpush1.msra.mxu0 %v83
    %1995 = vmatprep.subr.mxu0 0.0
    %1996 = vmatpush1.msra.mxu0 %v84
    %1997 = vmatprep.subr.mxu0 0.0
    %1998 = vmatpush1.msra.mxu0 %v85
    %1999 = vmatprep.subr.mxu0 0.0
    %2000 = vmatpush1.msra.mxu0 0.0
    %2001 = vmatprep.subr.mxu0 0.0
    %2002 = vmatpush1.msra.mxu0 0.0
    %2003 = vmatprep.subr.mxu0 0.0
    %2004 = vmatpush1.msra.mxu0 0.0
    %2005 = vmatprep.subr.mxu0 0.0
    %2006 = vmatpush1.msra.mxu0 0.0
    %2007 = vmatprep.subr.mxu0 0.0
    %2008 = vmatpush1.msra.mxu0 0.0
    %2009 = vmatprep.subr.mxu0 0.0
    %2010 = vmatpush1.msra.mxu0 0.0
    %2011 = vmatprep.subr.mxu0 0.0
    %2012 = vmatpush1.msra.mxu0 0.0
    %2013 = vmatprep.subr.mxu0 0.0
    %2014 = vmatpush1.msra.mxu0 0.0
    %2015 = vmatprep.subr.mxu0 0.0
    %2016 = vmatpush1.msra.mxu0 0.0
    %2017 = vmatprep.subr.mxu0 0.0
    %2018 = vmatpush1.msra.mxu0 0.0
    %2019 = vmatprep.subr.mxu0 0.0
    %2020 = vmatpush1.msra.mxu0 0.0
    %2021 = vmatprep.subr.mxu0 0.0
    %2022 = vmatpush1.msra.mxu0 0.0
    %2023 = vmatprep.subr.mxu0 0.0
    %2024 = vmatpush1.msra.mxu0 0.0
    %2025 = vmatprep.subr.mxu0 0.0
    %2026 = vmatpush1.msra.mxu0 0.0
    %2027 = vmatprep.subr.mxu0 0.0
    %2028 = vmatpush1.msra.mxu0 0.0
    %2029 = vmatprep.subr.mxu0 0.0
    %2030 = vmatpush1.msra.mxu0 0.0
    %2031 = vmatprep.subr.mxu0 0.0
    %2032 = vmatpush1.msra.mxu0 0.0
    %2033 = vmatprep.subr.mxu0 0.0
    %2034 = vmatpush1.msra.mxu0 0.0
    %2035 = vmatprep.subr.mxu0 0.0
    %2036 = vmatpush1.msra.mxu0 0.0
    %2037 = vmatprep.subr.mxu0 0.0
    %2038 = vmatpush1.msra.mxu0 0.0
    %2039 = vmatprep.subr.mxu0 0.0
    %2040 = vmatpush1.msra.mxu0 0.0
    %2041 = vmatprep.subr.mxu0 0.0
    %2042 = vmatpush1.msra.mxu0 0.0
    %2043 = vmatprep.subr.mxu0 0.0
    %2044 = vmatpush1.msra.mxu0 0.0
    %2045 = vmatprep.subr.mxu0 0.0
    %2046 = vmatpush1.msra.mxu0 0.0
    %2047 = vmatprep.subr.mxu0 0.0
    %2048 = vmatpush1.msra.mxu0 0.0
    %2049 = vmatprep.subr.mxu0 0.0
    %2050 = vmatpush1.msra.mxu0 0.0
    %2051 = vmatprep.subr.mxu0 0.0
    %2052 = vmatpush1.msra.mxu0 0.0
    %2053 = vmatprep.subr.mxu0 0.0
    %2054 = vmatpush1.msra.mxu0 0.0
    %2055 = vmatprep.mubr.f32.mxu0 0.0
    %2056 = vmatmul.mubr.f32.gmra.mrb[0].mxu0 %v1989
    %v2057 = vpop.f32.mrb[0].mxu0
    %v2058 = vadd.f32 0.0, %v2057
    %v2059 = vpop.f32.mrb[0].mxu0
    %2060 = vdwg.mxu0
    %v2062 = vrot.slane %v2058, 2
    %v2064 = vadd.f32 %v185, %v2062
    %v2065 = vxor.u32 %v2064, 2147483648
    %v2066 = vmul.f32 %v2065, 1.442695
    %v2067 = vpow.pop %v2066
    %v2068 = vadd.f32 %v2067, 1.0
    %v2069 = vrcp.pop %v2068
    %v2070 = vmul.f32 1.0, %v2069
    %v2071 = vadd.f32 %v2058, %v275
    %v2073 = vrot.slane %v2071, 2
    %2074 = vrot.lane.b32.xlu0 %v2073, 64
    %v2075 = vpop.permute.xlu0 %2074
    %v2077 = vmul.f32 %v2070, %v2075
    %2079 = vrot.lane.b32.xlu0 %v2077, 64
    %v2080 = vpop.permute.xlu0 %2079
    %v2082 = vadd.f32 %v185, %v2080
    %v2083 = vtanh.pop %v2082
    %v2084 = vsub.f32 1.0, %v2070
    %2086 = vrot.lane.b32.xlu0 %v2083, 96
    %v2087 = vpop.permute.xlu0 %2086
    %v2089 = vmul.f32 %v2084, %v2087
    %v2090 = vrot.slane %v1812, 6
    %v2092 = vmul.f32 %v2070, %v2090
    %v2093 = vadd.f32 %v2089, %v2092
    %2094 = vmatprep.subr.mxu0 0.0
    %2095 = vmatpush1.msra.mxu0 %v77
    %2096 = vmatprep.subr.mxu0 0.0
    %2097 = vmatpush1.msra.mxu0 %v78
    %2098 = vmatprep.subr.mxu0 0.0
    %2099 = vmatpush1.msra.mxu0 %v79
    %2100 = vmatprep.subr.mxu0 0.0
    %2101 = vmatpush1.msra.mxu0 %v80
    %2102 = vmatprep.subr.mxu0 0.0
    %2103 = vmatpush1.msra.mxu0 0.0
    %2104 = vmatprep.subr.mxu0 0.0
    %2105 = vmatpush1.msra.mxu0 0.0
    %2106 = vmatprep.subr.mxu0 0.0
    %2107 = vmatpush1.msra.mxu0 0.0
    %2108 = vmatprep.subr.mxu0 0.0
    %2109 = vmatpush1.msra.mxu0 0.0
    %2110 = vmatprep.subr.mxu0 0.0
    %2111 = vmatpush1.msra.mxu0 0.0
    %2112 = vmatprep.subr.mxu0 0.0
    %2113 = vmatpush1.msra.mxu0 0.0
    %2114 = vmatprep.subr.mxu0 0.0
    %2115 = vmatpush1.msra.mxu0 0.0
    %2116 = vmatprep.subr.mxu0 0.0
    %2117 = vmatpush1.msra.mxu0 0.0
    %2118 = vmatprep.subr.mxu0 0.0
    %2119 = vmatpush1.msra.mxu0 0.0
    %2120 = vmatprep.subr.mxu0 0.0
    %2121 = vmatpush1.msra.mxu0 0.0
    %2122 = vmatprep.subr.mxu0 0.0
    %2123 = vmatpush1.msra.mxu0 0.0
    %2124 = vmatprep.subr.mxu0 0.0
    %2125 = vmatpush1.msra.mxu0 0.0
    %2126 = vmatprep.subr.mxu0 0.0
    %2127 = vmatpush1.msra.mxu0 0.0
    %2128 = vmatprep.subr.mxu0 0.0
    %2129 = vmatpush1.msra.mxu0 0.0
    %2130 = vmatprep.subr.mxu0 0.0
    %2131 = vmatpush1.msra.mxu0 0.0
    %2132 = vmatprep.subr.mxu0 0.0
    %2133 = vmatpush1.msra.mxu0 0.0
    %2134 = vmatprep.subr.mxu0 0.0
    %2135 = vmatpush1.msra.mxu0 0.0
    %2136 = vmatprep.subr.mxu0 0.0
    %2137 = vmatpush1.msra.mxu0 0.0
    %2138 = vmatprep.subr.mxu0 0.0
    %2139 = vmatpush1.msra.mxu0 0.0
    %2140 = vmatprep.subr.mxu0 0.0
    %2141 = vmatpush1.msra.mxu0 0.0
    %2142 = vmatprep.subr.mxu0 0.0
    %2143 = vmatpush1.msra.mxu0 0.0
    %2144 = vmatprep.subr.mxu0 0.0
    %2145 = vmatpush1.msra.mxu0 0.0
    %2146 = vmatprep.subr.mxu0 0.0
    %2147 = vmatpush1.msra.mxu0 0.0
    %2148 = vmatprep.subr.mxu0 0.0
    %2149 = vmatpush1.msra.mxu0 0.0
    %2150 = vmatprep.subr.mxu0 0.0
    %2151 = vmatpush1.msra.mxu0 0.0
    %2152 = vmatprep.subr.mxu0 0.0
    %2153 = vmatpush1.msra.mxu0 0.0
    %2154 = vmatprep.subr.mxu0 0.0
    %2155 = vmatpush1.msra.mxu0 0.0
    %2156 = vmatprep.subr.mxu0 0.0
    %2157 = vmatpush1.msra.mxu0 0.0
    %2158 = vmatprep.mubr.f32.mxu0 0.0
    %2159 = vmatmul.mubr.f32.gmra.mrb[0].mxu0 %v1989
    %v2160 = vpop.f32.mrb[0].mxu0
    %v2161 = vadd.f32 %v409, %v2160
    %v2162 = vpop.f32.mrb[0].mxu0
    %2163 = vdwg.mxu0
    %2165 = vrot.lane.b32.xlu0 %v1984, 96
    %v2166 = vpop.permute.xlu0 %2165
    %v2167 = vsel %vm188, %v2166, 0
    %2169 = vmatprep.subr.mxu0 0.0
    %2170 = vmatpush1.msra.mxu0 %v86
    %2171 = vmatprep.subr.mxu0 0.0
    %2172 = vmatpush1.msra.mxu0 %v87
    %2173 = vmatprep.subr.mxu0 0.0
    %2174 = vmatpush1.msra.mxu0 %v88
    %2175 = vmatprep.subr.mxu0 0.0
    %2176 = vmatpush1.msra.mxu0 %v89
    %2177 = vmatprep.subr.mxu0 0.0
    %2178 = vmatpush1.msra.mxu0 0.0
    %2179 = vmatprep.subr.mxu0 0.0
    %2180 = vmatpush1.msra.mxu0 0.0
    %2181 = vmatprep.subr.mxu0 0.0
    %2182 = vmatpush1.msra.mxu0 0.0
    %2183 = vmatprep.subr.mxu0 0.0
    %2184 = vmatpush1.msra.mxu0 0.0
    %2185 = vmatprep.subr.mxu0 0.0
    %2186 = vmatpush1.msra.mxu0 0.0
    %2187 = vmatprep.subr.mxu0 0.0
    %2188 = vmatpush1.msra.mxu0 0.0
    %2189 = vmatprep.subr.mxu0 0.0
    %2190 = vmatpush1.msra.mxu0 0.0
    %2191 = vmatprep.subr.mxu0 0.0
    %2192 = vmatpush1.msra.mxu0 0.0
    %2193 = vmatprep.subr.mxu0 0.0
    %2194 = vmatpush1.msra.mxu0 0.0
    %2195 = vmatprep.subr.mxu0 0.0
    %2196 = vmatpush1.msra.mxu0 0.0
    %2197 = vmatprep.subr.mxu0 0.0
    %2198 = vmatpush1.msra.mxu0 0.0
    %2199 = vmatprep.subr.mxu0 0.0
    %2200 = vmatpush1.msra.mxu0 0.0
    %2201 = vmatprep.subr.mxu0 0.0
    %2202 = vmatpush1.msra.mxu0 0.0
    %2203 = vmatprep.subr.mxu0 0.0
    %2204 = vmatpush1.msra.mxu0 0.0
    %2205 = vmatprep.subr.mxu0 0.0
    %2206 = vmatpush1.msra.mxu0 0.0
    %2207 = vmatprep.subr.mxu0 0.0
    %2208 = vmatpush1.msra.mxu0 0.0
    %2209 = vmatprep.subr.mxu0 0.0
    %2210 = vmatpush1.msra.mxu0 0.0
    %2211 = vmatprep.subr.mxu0 0.0
    %2212 = vmatpush1.msra.mxu0 0.0
    %2213 = vmatprep.subr.mxu0 0.0
    %2214 = vmatpush1.msra.mxu0 0.0
    %2215 = vmatprep.subr.mxu0 0.0
    %2216 = vmatpush1.msra.mxu0 0.0
    %2217 = vmatprep.subr.mxu0 0.0
    %2218 = vmatpush1.msra.mxu0 0.0
    %2219 = vmatprep.subr.mxu0 0.0
    %2220 = vmatpush1.msra.mxu0 0.0
    %2221 = vmatprep.subr.mxu0 0.0
    %2222 = vmatpush1.msra.mxu0 0.0
    %2223 = vmatprep.subr.mxu0 0.0
    %2224 = vmatpush1.msra.mxu0 0.0
    %2225 = vmatprep.subr.mxu0 0.0
    %2226 = vmatpush1.msra.mxu0 0.0
    %2227 = vmatprep.subr.mxu0 0.0
    %2228 = vmatpush1.msra.mxu0 0.0
    %2229 = vmatprep.subr.mxu0 0.0
    %2230 = vmatpush1.msra.mxu0 0.0
    %2231 = vmatprep.subr.mxu0 0.0
    %2232 = vmatpush1.msra.mxu0 0.0
    %2233 = vmatprep.mubr.f32.mxu0 0.0
    %2234 = vmatmul.mubr.f32.gmra.mrb[0].mxu0 %v2167
    %v2235 = vpop.f32.mrb[0].mxu0
    %v2236 = vadd.f32 0.0, %v2235
    %v2237 = vpop.f32.mrb[0].mxu0
    %2238 = vdwg.mxu0
    %v2239 = vadd.f32 %v2161, %v2236
    %v2240 = vxor.u32 %v2239, 2147483648
    %v2241 = vmul.f32 %v2240, 1.442695
    %v2242 = vpow.pop %v2241
    %v2243 = vadd.f32 %v2242, 1.0
    %v2244 = vrcp.pop %v2243
    %v2245 = vmul.f32 1.0, %v2244
    %v2246 = vadd.f32 %v2236, %v564
    %2248 = vrot.lane.b32.xlu0 %v2246, 64
    %v2249 = vpop.permute.xlu0 %2248
    %v2251 = vmul.f32 %v2245, %v2249
    %2253 = vrot.lane.b32.xlu0 %v2251, 64
    %v2254 = vpop.permute.xlu0 %2253
    %v2256 = vadd.f32 %v2161, %v2254
    %v2257 = vtanh.pop %v2256
    %v2258 = vsub.f32 1.0, %v2245
    %2260 = vrot.lane.b32.xlu0 %v2257, 96
    %v2261 = vpop.permute.xlu0 %2260
    %v2263 = vmul.f32 %v2258, %v2261
    %v2264 = vmul.f32 %v2245, %v1984
    %v2265 = vadd.f32 %v2263, %v2264
    %v2267 = vrot.slane %v2093, 6
    %2268 = vrot.lane.b32.xlu0 %v2267, 96
    %v2269 = vpop.permute.xlu0 %2268
    %v2270 = vsel %vm188, %v2269, 0
    %2272 = vmatprep.subr.mxu0 0.0
    %2273 = vmatpush1.msra.mxu0 %v77
    %2274 = vmatprep.subr.mxu0 0.0
    %2275 = vmatpush1.msra.mxu0 %v78
    %2276 = vmatprep.subr.mxu0 0.0
    %2277 = vmatpush1.msra.mxu0 %v79
    %2278 = vmatprep.subr.mxu0 0.0
    %2279 = vmatpush1.msra.mxu0 %v80
    %2280 = vmatprep.subr.mxu0 0.0
    %2281 = vmatpush1.msra.mxu0 0.0
    %2282 = vmatprep.subr.mxu0 0.0
    %2283 = vmatpush1.msra.mxu0 0.0
    %2284 = vmatprep.subr.mxu0 0.0
    %2285 = vmatpush1.msra.mxu0 0.0
    %2286 = vmatprep.subr.mxu0 0.0
    %2287 = vmatpush1.msra.mxu0 0.0
    %2288 = vmatprep.subr.mxu0 0.0
    %2289 = vmatpush1.msra.mxu0 0.0
    %2290 = vmatprep.subr.mxu0 0.0
    %2291 = vmatpush1.msra.mxu0 0.0
    %2292 = vmatprep.subr.mxu0 0.0
    %2293 = vmatpush1.msra.mxu0 0.0
    %2294 = vmatprep.subr.mxu0 0.0
    %2295 = vmatpush1.msra.mxu0 0.0
    %2296 = vmatprep.subr.mxu0 0.0
    %2297 = vmatpush1.msra.mxu0 0.0
    %2298 = vmatprep.subr.mxu0 0.0
    %2299 = vmatpush1.msra.mxu0 0.0
    %2300 = vmatprep.subr.mxu0 0.0
    %2301 = vmatpush1.msra.mxu0 0.0
    %2302 = vmatprep.subr.mxu0 0.0
    %2303 = vmatpush1.msra.mxu0 0.0
    %2304 = vmatprep.subr.mxu0 0.0
    %2305 = vmatpush1.msra.mxu0 0.0
    %2306 = vmatprep.subr.mxu0 0.0
    %2307 = vmatpush1.msra.mxu0 0.0
    %2308 = vmatprep.subr.mxu0 0.0
    %2309 = vmatpush1.msra.mxu0 0.0
    %2310 = vmatprep.subr.mxu0 0.0
    %2311 = vmatpush1.msra.mxu0 0.0
    %2312 = vmatprep.subr.mxu0 0.0
    %2313 = vmatpush1.msra.mxu0 0.0
    %2314 = vmatprep.subr.mxu0 0.0
    %2315 = vmatpush1.msra.mxu0 0.0
    %2316 = vmatprep.subr.mxu0 0.0
    %2317 = vmatpush1.msra.mxu0 0.0
    %2318 = vmatprep.subr.mxu0 0.0
    %2319 = vmatpush1.msra.mxu0 0.0
    %2320 = vmatprep.subr.mxu0 0.0
    %2321 = vmatpush1.msra.mxu0 0.0
    %2322 = vmatprep.subr.mxu0 0.0
    %2323 = vmatpush1.msra.mxu0 0.0
    %2324 = vmatprep.subr.mxu0 0.0
    %2325 = vmatpush1.msra.mxu0 0.0
    %2326 = vmatprep.subr.mxu0 0.0
    %2327 = vmatpush1.msra.mxu0 0.0
    %2328 = vmatprep.subr.mxu0 0.0
    %2329 = vmatpush1.msra.mxu0 0.0
    %2330 = vmatprep.subr.mxu0 0.0
    %2331 = vmatpush1.msra.mxu0 0.0
    %2332 = vmatprep.subr.mxu0 0.0
    %2333 = vmatpush1.msra.mxu0 0.0
    %2334 = vmatprep.subr.mxu0 0.0
    %2335 = vmatpush1.msra.mxu0 0.0
    %2336 = vmatprep.mubr.f32.mxu0 0.0
    %2337 = vmatmul.mubr.f32.gmra.mrb[0].mxu0 %v2270
    %v2338 = vpop.f32.mrb[0].mxu0
    %v2339 = vadd.f32 %v409, %v2338
    %v2340 = vpop.f32.mrb[0].mxu0
    %2341 = vdwg.mxu0
    %2343 = vrot.lane.b32.xlu0 %v2265, 96
    %v2344 = vpop.permute.xlu0 %2343
    %v2345 = vsel %vm188, %v2344, 0
    %2347 = vmatprep.subr.mxu0 0.0
    %2348 = vmatpush1.msra.mxu0 %v86
    %2349 = vmatprep.subr.mxu0 0.0
    %2350 = vmatpush1.msra.mxu0 %v87
    %2351 = vmatprep.subr.mxu0 0.0
    %2352 = vmatpush1.msra.mxu0 %v88
    %2353 = vmatprep.subr.mxu0 0.0
    %2354 = vmatpush1.msra.mxu0 %v89
    %2355 = vmatprep.subr.mxu0 0.0
    %2356 = vmatpush1.msra.mxu0 0.0
    %2357 = vmatprep.subr.mxu0 0.0
    %2358 = vmatpush1.msra.mxu0 0.0
    %2359 = vmatprep.subr.mxu0 0.0
    %2360 = vmatpush1.msra.mxu0 0.0
    %2361 = vmatprep.subr.mxu0 0.0
    %2362 = vmatpush1.msra.mxu0 0.0
    %2363 = vmatprep.subr.mxu0 0.0
    %2364 = vmatpush1.msra.mxu0 0.0
    %2365 = vmatprep.subr.mxu0 0.0
    %2366 = vmatpush1.msra.mxu0 0.0
    %2367 = vmatprep.subr.mxu0 0.0
    %2368 = vmatpush1.msra.mxu0 0.0
    %2369 = vmatprep.subr.mxu0 0.0
    %2370 = vmatpush1.msra.mxu0 0.0
    %2371 = vmatprep.subr.mxu0 0.0
    %2372 = vmatpush1.msra.mxu0 0.0
    %2373 = vmatprep.subr.mxu0 0.0
    %2374 = vmatpush1.msra.mxu0 0.0
    %2375 = vmatprep.subr.mxu0 0.0
    %2376 = vmatpush1.msra.mxu0 0.0
    %2377 = vmatprep.subr.mxu0 0.0
    %2378 = vmatpush1.msra.mxu0 0.0
    %2379 = vmatprep.subr.mxu0 0.0
    %2380 = vmatpush1.msra.mxu0 0.0
    %2381 = vmatprep.subr.mxu0 0.0
    %2382 = vmatpush1.msra.mxu0 0.0
    %2383 = vmatprep.subr.mxu0 0.0
    %2384 = vmatpush1.msra.mxu0 0.0
    %2385 = vmatprep.subr.mxu0 0.0
    %2386 = vmatpush1.msra.mxu0 0.0
    %2387 = vmatprep.subr.mxu0 0.0
    %2388 = vmatpush1.msra.mxu0 0.0
    %2389 = vmatprep.subr.mxu0 0.0
    %2390 = vmatpush1.msra.mxu0 0.0
    %2391 = vmatprep.subr.mxu0 0.0
    %2392 = vmatpush1.msra.mxu0 0.0
    %2393 = vmatprep.subr.mxu0 0.0
    %2394 = vmatpush1.msra.mxu0 0.0
    %2395 = vmatprep.subr.mxu0 0.0
    %2396 = vmatpush1.msra.mxu0 0.0
    %2397 = vmatprep.subr.mxu0 0.0
    %2398 = vmatpush1.msra.mxu0 0.0
    %2399 = vmatprep.subr.mxu0 0.0
    %2400 = vmatpush1.msra.mxu0 0.0
    %2401 = vmatprep.subr.mxu0 0.0
    %2402 = vmatpush1.msra.mxu0 0.0
    %2403 = vmatprep.subr.mxu0 0.0
    %2404 = vmatpush1.msra.mxu0 0.0
    %2405 = vmatprep.subr.mxu0 0.0
    %2406 = vmatpush1.msra.mxu0 0.0
    %2407 = vmatprep.subr.mxu0 0.0
    %2408 = vmatpush1.msra.mxu0 0.0
    %2409 = vmatprep.subr.mxu0 0.0
    %2410 = vmatpush1.msra.mxu0 0.0
    %2411 = vmatprep.mubr.f32.mxu0 0.0
    %2412 = vmatmul.mubr.f32.gmra.mrb[0].mxu0 %v2345
    %v2413 = vpop.f32.mrb[0].mxu0
    %v2414 = vadd.f32 0.0, %v2413
    %v2415 = vpop.f32.mrb[0].mxu0
    %2416 = vdwg.mxu0
    %v2417 = vadd.f32 %v2339, %v2414
    %v2418 = vxor.u32 %v2417, 2147483648
    %v2419 = vmul.f32 %v2418, 1.442695
    %v2420 = vpow.pop %v2419
    %v2421 = vadd.f32 %v2420, 1.0
    %v2422 = vrcp.pop %v2421
    %v2423 = vmul.f32 1.0, %v2422
    %v2424 = vadd.f32 %v2414, %v564
    %2426 = vrot.lane.b32.xlu0 %v2424, 64
    %v2427 = vpop.permute.xlu0 %2426
    %v2429 = vmul.f32 %v2423, %v2427
    %2431 = vrot.lane.b32.xlu0 %v2429, 64
    %v2432 = vpop.permute.xlu0 %2431
    %v2434 = vadd.f32 %v2339, %v2432
    %v2435 = vtanh.pop %v2434
    %v2436 = vsub.f32 1.0, %v2423
    %2438 = vrot.lane.b32.xlu0 %v2435, 96
    %v2439 = vpop.permute.xlu0 %2438
    %v2441 = vmul.f32 %v2436, %v2439
    %v2442 = vmul.f32 %v2423, %v2265
    %v2443 = vadd.f32 %v2441, %v2442
    %v2444 = vld [vmem:[%s9] sm:$0xff]
    %v2445 = vld [vmem:[%s9 + $0x8] sm:$0xff]
    %v2446 = vld [vmem:[%s9 + $0x10] sm:$0xff]
    %v2447 = vld [vmem:[%s9 + $0x18] sm:$0xff]
    %v2448 = vld [vmem:[#allocation2] sm:$0x1]
    %v2450 = vlaneseq
    %v2451 = vshrl.u32 %v2450, 7
    %v2452 = vsub.s32 0, %v2451
    %v2453 = vrot.slane %v2448, %v2452
    %2456 = vrot.lane.b32.xlu0 %v2443, 96
    %v2457 = vpop.permute.xlu0 %2456
    %v2458 = vsel %vm188, %v2457, 0
    %2460 = vmatprep.subr.mxu0 0.0
    %2461 = vmatpush1.msra.mxu0 %v2444
    %2462 = vmatprep.subr.mxu0 0.0
    %2463 = vmatpush1.msra.mxu0 %v2445
    %2464 = vmatprep.subr.mxu0 0.0
    %2465 = vmatpush1.msra.mxu0 %v2446
    %2466 = vmatprep.subr.mxu0 0.0
    %2467 = vmatpush1.msra.mxu0 %v2447
    %2468 = vmatprep.subr.mxu0 0.0
    %2469 = vmatpush1.msra.mxu0 0.0
    %2470 = vmatprep.subr.mxu0 0.0
    %2471 = vmatpush1.msra.mxu0 0.0
    %2472 = vmatprep.subr.mxu0 0.0
    %2473 = vmatpush1.msra.mxu0 0.0
    %2474 = vmatprep.subr.mxu0 0.0
    %2475 = vmatpush1.msra.mxu0 0.0
    %2476 = vmatprep.subr.mxu0 0.0
    %2477 = vmatpush1.msra.mxu0 0.0
    %2478 = vmatprep.subr.mxu0 0.0
    %2479 = vmatpush1.msra.mxu0 0.0
    %2480 = vmatprep.subr.mxu0 0.0
    %2481 = vmatpush1.msra.mxu0 0.0
    %2482 = vmatprep.subr.mxu0 0.0
    %2483 = vmatpush1.msra.mxu0 0.0
    %2484 = vmatprep.subr.mxu0 0.0
    %2485 = vmatpush1.msra.mxu0 0.0
    %2486 = vmatprep.subr.mxu0 0.0
    %2487 = vmatpush1.msra.mxu0 0.0
    %2488 = vmatprep.subr.mxu0 0.0
    %2489 = vmatpush1.msra.mxu0 0.0
    %2490 = vmatprep.subr.mxu0 0.0
    %2491 = vmatpush1.msra.mxu0 0.0
    %2492 = vmatprep.subr.mxu0 0.0
    %2493 = vmatpush1.msra.mxu0 0.0
    %2494 = vmatprep.subr.mxu0 0.0
    %2495 = vmatpush1.msra.mxu0 0.0
    %2496 = vmatprep.subr.mxu0 0.0
    %2497 = vmatpush1.msra.mxu0 0.0
    %2498 = vmatprep.subr.mxu0 0.0
    %2499 = vmatpush1.msra.mxu0 0.0
    %2500 = vmatprep.subr.mxu0 0.0
    %2501 = vmatpush1.msra.mxu0 0.0
    %2502 = vmatprep.subr.mxu0 0.0
    %2503 = vmatpush1.msra.mxu0 0.0
    %2504 = vmatprep.subr.mxu0 0.0
    %2505 = vmatpush1.msra.mxu0 0.0
    %2506 = vmatprep.subr.mxu0 0.0
    %2507 = vmatpush1.msra.mxu0 0.0
    %2508 = vmatprep.subr.mxu0 0.0
    %2509 = vmatpush1.msra.mxu0 0.0
    %2510 = vmatprep.subr.mxu0 0.0
    %2511 = vmatpush1.msra.mxu0 0.0
    %2512 = vmatprep.subr.mxu0 0.0
    %2513 = vmatpush1.msra.mxu0 0.0
    %2514 = vmatprep.subr.mxu0 0.0
    %2515 = vmatpush1.msra.mxu0 0.0
    %2516 = vmatprep.subr.mxu0 0.0
    %2517 = vmatpush1.msra.mxu0 0.0
    %2518 = vmatprep.subr.mxu0 0.0
    %2519 = vmatpush1.msra.mxu0 0.0
    %2520 = vmatprep.subr.mxu0 0.0
    %2521 = vmatpush1.msra.mxu0 0.0
    %2522 = vmatprep.subr.mxu0 0.0
    %2523 = vmatpush1.msra.mxu0 0.0
    %2524 = vmatprep.mubr.f32.mxu0 0.0
    %2525 = vmatmul.mubr.f32.gmra.mrb[0].mxu0 %v2458
    %v2526 = vpop.f32.mrb[0].mxu0
    %v2527 = vadd.f32 %v2453, %v2526
    %v2528 = vpop.f32.mrb[0].mxu0
    %2529 = vdwg.mxu0
    %vm2530 = vcmask 1024
    %2531 = vst.msk [vmem:[%s11] sm:$0x3] %vm2530, %v2527
    // Predicated region
    $region58: #{tpu_custom_call.1} parent=1 // pred_check
      _
    $region59: #{tpu_custom_call.1} parent=1 // pred_check_branch
      %2533 = sbr.rel (0) target = $region61
    $region60: #{tpu_custom_call.1} parent=1 // pred_region
      _
    $region61: #{tpu_custom_call.1} parent=1 // pred_fallthru
      _
    // Predicated region
    $region62: #{tpu_custom_call.1} parent=1 // pred_check
      _
    $region63: #{tpu_custom_call.1} parent=1 // pred_check_branch
      %2535 = sbr.rel (0) target = $region65
    $region64: #{tpu_custom_call.1} parent=1 // pred_region
      _
    $region65: #{tpu_custom_call.1} parent=1 // pred_fallthru
      _
    %2536 = vsyncpa [#allocation4], 1
    %2537 = vsyncpa [#allocation6], 1

</llo_original>
